<compile_context>
chip_gen: v7x
topology: tpu7x:2x2x1
jax: 0.10.0
libtpu: 0.0.40
codegen_flags: <defaults>
</compile_context>

<pallas_src>
import math
import functools

import jax
import jax.numpy as jnp
from jax import lax
from jax.experimental import pallas as pl
from jax.experimental.pallas import tpu as pltpu

NEG_SLOPE = 0.01      # F.leaky_relu default
LN_EPS = 1e-5         # nn.LayerNorm default
MASK_VAL = -1e10      # masked_fill value used in MSA2
UNFOLD_SIZE = 5       # MSA1 unfold_size
N_SLOTS = UNFOLD_SIZE + 2   # 5 ring neighbours + embs slot + relay slot


def _leaky_relu(x):
    return jnp.where(x >= 0, x, NEG_SLOPE * x)


# ---------------------------------------------------------------------------
# fused per-layer kernel: LayerNorm -> MSA1 (ring) -> residual -> MSA2 (star)
# ---------------------------------------------------------------------------
def _fused_layer_kernel(nhead, head_dim, L, TB,
                        nodes_ref, embs_ref, relay_ref, pad_ref,
                        gamma_ref, beta_ref,
                        wq_ref, bq_ref, wk_ref, bk_ref, wv_ref, bv_ref,
                        wo_ref, bo_ref,
                        wq2_ref, bq2_ref, wk2_ref, bk2_ref, wo2_ref, bo2_ref,
                        nodes_out_ref, relay_out_ref):
    hd = head_dim
    D = nhead * hd
    N = TB * L
    inv_sqrt = 1.0 / math.sqrt(hd)
    bf = jnp.bfloat16

    nodes = nodes_ref[...]                          # [N, H] f32 (masked nodes from prev layer)
    embs = embs_ref[...]                            # [N, H] bf16 (original embeddings)
    H = nodes.shape[-1]
    relay = relay_ref[...].reshape(TB, H)           # [TB, H] f32
    pad3 = pad_ref[...]                             # [TB, L, 1] f32, 1.0 = padding
    pad_rows = pad3.reshape(N, 1)

    # --- per-head helpers: lane slices + reductions/broadcasts (no degenerate MXU) ---
    def head_sum(p):                                # [..., D] -> [..., nhead]
        return jnp.concatenate(
            [jnp.sum(p[..., h * hd:(h + 1) * hd], axis=-1, keepdims=True)
             for h in range(nhead)], axis=-1)

    def head_expand(a):                             # [..., nhead] -> [..., D]
        return jnp.concatenate(
            [jnp.broadcast_to(a[..., h:h + 1], a.shape[:-1] + (hd,))
             for h in range(nhead)], axis=-1)

    # position-within-sequence of each flattened row (for the unfold zero-pad mask)
    l_idx = lax.broadcasted_iota(jnp.int32, (TB, L, 1), 1).reshape(N, 1)

    def window_shift(x, s):
        # y[b*L + l] = x[b*L + l + s] if 0 <= l + s < L else 0  (== F.unfold zero padding)
        if s == 0:
            return x
        rolled = pltpu.roll(x, (-s) % N, axis=0)    # XLU rotate instead of [L,L] matmul
        valid = (l_idx < (L - s)) if s > 0 else (l_idx >= (-s))
        return jnp.where(valid, rolled, 0.0)

    # --- LayerNorm over H (norm_func in the reference), f32 ---
    mu = jnp.mean(nodes, axis=-1, keepdims=True)
    xc = nodes - mu
    var = jnp.mean(xc * xc, axis=-1, keepdims=True)
    xn = xc * lax.rsqrt(var + LN_EPS) * gamma_ref[...] + beta_ref[...]

    # --- MSA1 projections: bf16 operands on the MXU, f32 accumulation ---
    wq, wk, wv, wo = wq_ref[...], wk_ref[...], wv_ref[...], wo_ref[...]
    bq, bk, bv, bo = bq_ref[...], bk_ref[...], bv_ref[...], bo_ref[...]
    xnb = xn.astype(bf)
    relayb = relay.astype(bf)

    q = jnp.dot(xnb, wq, preferred_element_type=jnp.float32) + bq       # [N, D]
    k = jnp.dot(xnb, wk, preferred_element_type=jnp.float32) + bk
    v = jnp.dot(xnb, wv, preferred_element_type=jnp.float32) + bv
    ak0 = jnp.dot(embs, wk, preferred_element_type=jnp.float32) + bk    # r_embs slot
    av0 = jnp.dot(embs, wv, preferred_element_type=jnp.float32) + bv
    rk = jnp.dot(relayb, wk, preferred_element_type=jnp.float32) + bk   # [TB, D] relay slot
    rv = jnp.dot(relayb, wv, preferred_element_type=jnp.float32) + bv

    def relay_rows(x):                              # [TB, D] -> [N, D] (repeat per position)
        return jnp.broadcast_to(x[:, None, :], (TB, L, D)).reshape(N, D)

    half = UNFOLD_SIZE // 2
    shifts = list(range(-half, half + 1))

    def k_slot(i):
        if i < UNFOLD_SIZE:
            return window_shift(k, shifts[i])
        return ak0 if i == UNFOLD_SIZE else relay_rows(rk)

    def v_slot(i):
        if i < UNFOLD_SIZE:
            return window_shift(v, shifts[i])
        return av0 if i == UNFOLD_SIZE else relay_rows(rv)

    # pass 1: the 7 slot scores, packed into one [N, 7*nhead] tensor -> single exp
    score_list = [head_sum(q * k_slot(i)) * inv_sqrt for i in range(N_SLOTS)]
    m = score_list[0]
    for sc in score_list[1:]:
        m = jnp.maximum(m, sc)
    packed = jnp.concatenate(score_list, axis=-1)                       # [N, 7*nhead]
    p = jnp.exp(packed - jnp.concatenate([m] * N_SLOTS, axis=-1))
    denom = p[:, 0:nhead]
    for i in range(1, N_SLOTS):
        denom = denom + p[:, i * nhead:(i + 1) * nhead]
    inv_den = pl.reciprocal(denom, approx=True)                         # [N, nhead]

    # pass 2: stream the value slots (cheap XLU rolls recomputed; nothing kept live)
    att = jnp.zeros((N, D), jnp.float32)
    for i in range(N_SLOTS):
        alpha = p[:, i * nhead:(i + 1) * nhead] * inv_den
        att = att + head_expand(alpha) * v_slot(i)

    ret = jnp.dot(att.astype(bf), wo, preferred_element_type=jnp.float32) + bo   # [N, H]
    new_nodes = nodes + _leaky_relu(ret)                                # residual, f32
    nodes_out_ref[...] = jnp.where(pad_rows > 0, 0.0, new_nodes)        # masked_fill_(ex_mask, 0)

    # --- MSA2 (star attention) fused in the same kernel: relay update ---
    wq2, wk2, wo2 = wq2_ref[...], wk2_ref[...], wo2_ref[...]
    bq2, bk2, bo2 = bq2_ref[...], bk2_ref[...], bo2_ref[...]
    q2 = jnp.dot(relayb, wq2, preferred_element_type=jnp.float32) + bq2   # [TB, D]
    kr = jnp.dot(relayb, wk2, preferred_element_type=jnp.float32) + bk2   # [TB, D]
    kn = jnp.dot(new_nodes.astype(bf), wk2, preferred_element_type=jnp.float32) + bk2  # [N, D]
    # NOTE: the reference MSA2 re-uses k as v (v = WK(y)); WV2 never participates.
    kn3 = kn.reshape(TB, L, D)

    s_n = head_sum(kn3 * q2[:, None, :]) * inv_sqrt          # [TB, L, nhead]
    s_r = head_sum(kr * q2) * inv_sqrt                       # [TB, nhead]
    s_n = jnp.where(pad3 > 0, MASK_VAL, s_n)                 # smask: relay slot never masked

    m2 = jnp.maximum(s_r, jnp.max(s_n, axis=1))              # [TB, nhead]
    e_r = jnp.exp(s_r - m2)
    e_n = jnp.exp(s_n - m2[:, None, :])
    inv_d2 = pl.reciprocal(e_r + jnp.sum(e_n, axis=1), approx=True)
    a_r = e_r * inv_d2
    a_n = e_n * inv_d2[:, None, :]

    att2 = head_expand(a_r) * kr + jnp.sum(head_expand(a_n) * kn3, axis=1)   # [TB, D]
    rout = jnp.dot(att2.astype(bf), wo2, preferred_element_type=jnp.float32) + bo2
    relay_out_ref[...] = _leaky_relu(rout)[:, None, :]       # [TB, 1, H]


# ---------------------------------------------------------------------------
# pallas_call wrapper (one fused call per layer)
# ---------------------------------------------------------------------------
def _layer_call(nodes_flat, embs_bf16, relay, pad, lp, nhead, head_dim, TB, L):
    NBL, H = nodes_flat.shape
    NB = relay.shape[0]
    D = nhead * head_dim
    N = TB * L
    row_spec = pl.BlockSpec((N, H), lambda i: (i, 0))
    const2 = lambda shape: pl.BlockSpec(shape, lambda i: (0, 0))   # fetched once (constant index)
    kernel = functools.partial(_fused_layer_kernel, nhead, head_dim, L, TB)
    return pl.pallas_call(
        kernel,
        out_shape=(jax.ShapeDtypeStruct((NBL, H), jnp.float32),
                   jax.ShapeDtypeStruct((NB, 1, H), jnp.float32)),
        grid=(NB // TB,),
        in_specs=[
            row_spec,                                        # nodes  (f32)
            row_spec,                                        # embs   (bf16)
            pl.BlockSpec((TB, 1, H), lambda i: (i, 0, 0)),   # relay
            pl.BlockSpec((TB, L, 1), lambda i: (i, 0, 0)),   # pad mask
            const2((1, H)), const2((1, H)),                  # gamma, beta
            const2((H, D)), const2((1, D)),                  # WQ, bQ
            const2((H, D)), const2((1, D)),                  # WK, bK
            const2((H, D)), const2((1, D)),                  # WV, bV
            const2((D, H)), const2((1, H)),                  # WO, bO
            const2((H, D)), const2((1, D)),                  # WQ2, bQ2
            const2((H, D)), const2((1, D)),                  # WK2, bK2
            const2((D, H)), const2((1, H)),                  # WO2, bO2
        ],
        out_specs=(row_spec, pl.BlockSpec((TB, 1, H), lambda i: (i, 0, 0))),
        compiler_params=pltpu.CompilerParams(dimension_semantics=("parallel",)),
    )(nodes_flat, embs_bf16, relay, pad,
      lp["gamma"], lp["beta"],
      lp["wq"], lp["bq"], lp["wk"], lp["bk"], lp["wv"], lp["bv"], lp["wo"], lp["bo"],
      lp["wq2"], lp["bq2"], lp["wk2"], lp["bk2"], lp["wo2"], lp["bo2"])


def _choose_tb(B, L, H, D):
    """Batch-tile size: fill the MXU M-dim (~256 rows/step), keep >=2 grid steps
    for v7x's two TensorCores when possible, and stay well inside the default
    32 MiB scoped VMEM (v7x only has 64 MiB total)."""
    tb = max(1, 256 // max(L, 1))
    blk_bytes = L * H * 10 + L * 4 + 8 * H        # per-batch: nodes f32 in/out, embs bf16, pad, relay
    tmp_bytes = L * D * 4 * 12                    # per-batch transient f32 slabs inside the body
    budget = 20 * 1024 * 1024
    tb = min(tb, max(1, budget // max(1, 2 * blk_bytes + tmp_bytes)), max(1, B))
    while tb > 1 and -(-B // tb) < 2:             # prefer >=2 grid steps when B > 1
        tb = max(1, tb // 2)
    g = 8 // math.gcd(L, 8)                       # keep block row count (TB*L) sublane aligned
    return -(-tb // g) * g


def star_transformer_forward(data, mask, params, *, num_head, head_dim):
    """data: [B, L, H] float32; mask: [B, L] int (1 = token, 0 = padding).
    Returns (nodes [B, L, H], relay [B, H]) -- same contract as StarTransformer.forward."""
    B, L, H = data.shape
    D = num_head * head_dim
    TB = _choose_tb(B, L, H, D)
    NB = -(-B // TB) * TB                          # pad batch to a multiple of the tile

    data_p = data.astype(jnp.float32)
    pad = (mask == 0).astype(jnp.float32)[:, :, None]            # [B, L, 1], 1.0 = padding
    if NB != B:
        data_p = jnp.concatenate([data_p, jnp.zeros((NB - B, L, H), jnp.float32)], axis=0)
        pad = jnp.concatenate([pad, jnp.ones((NB - B, L, 1), jnp.float32)], axis=0)

    embs_flat = data_p.reshape(NB * L, H)          # original embeddings (constant across layers)
    embs_bf16 = embs_flat.astype(jnp.bfloat16)     # only ever feeds the MXU -> store as bf16
    nodes_flat = embs_flat                         # f32 residual stream
    relay = jnp.mean(data_p, axis=1, keepdims=True)   # [NB, 1, H]

    # weight matrices feed the MXU only -> pre-cast once to bf16; biases/LN stay f32
    bf_params = []
    for lp in params:
        cast = dict(lp)
        for name in ("wq", "wk", "wv", "wo", "wq2", "wk2", "wo2"):
            cast[name] = lp[name].astype(jnp.bfloat16)
        bf_params.append(cast)

    # TODO(synk): pos_emb path (max_len != None) is not implemented (max_len=None config);
    # dropout is identity (eval mode).
    for lp in bf_params:
        nodes_flat, relay = _layer_call(nodes_flat, embs_bf16, relay, pad, lp,
                                        num_head, head_dim, TB, L)

    nodes = nodes_flat[:B * L].reshape(B, L, H)
    return nodes, relay[:B, 0, :]


# ---------------------------------------------------------------------------
# deterministic parameter init (shapes dictated by the module __init__)
# ---------------------------------------------------------------------------
def init_params(key, hidden_size, num_layers, num_head, head_dim):
    D = num_head * head_dim
    params = []
    for i in range(num_layers):
        keys = jax.random.split(jax.random.fold_in(key, i), 16)
        w = lambda k, shape, s: (s * jax.random.normal(k, shape)).astype(jnp.float32)
        params.append(dict(
            gamma=(1.0 + 0.1 * jax.random.normal(keys[0], (1, hidden_size))).astype(jnp.float32),
            beta=w(keys[1], (1, hidden_size), 0.05),
            wq=w(keys[2], (hidden_size, D), 0.15), bq=w(keys[3], (1, D), 0.05),
            wk=w(keys[4], (hidden_size, D), 0.15), bk=w(keys[5], (1, D), 0.05),
            wv=w(keys[6], (hidden_size, D), 0.15), bv=w(keys[7], (1, D), 0.05),
            wo=w(keys[8], (D, hidden_size), 0.15), bo=w(keys[9], (1, hidden_size), 0.05),
            wq2=w(keys[10], (hidden_size, D), 0.15), bq2=w(keys[11], (1, D), 0.05),
            wk2=w(keys[12], (hidden_size, D), 0.15), bk2=w(keys[13], (1, D), 0.05),
            wo2=w(keys[14], (D, hidden_size), 0.15), bo2=w(keys[15], (1, hidden_size), 0.05),
        ))
    return params


# ---------------------------------------------------------------------------
# pure-JAX f32 reference (mirrors the PyTorch forward) for correctness checking
# ---------------------------------------------------------------------------
def reference_forward(data, mask, params, nhead, head_dim):
    B, L, H = data.shape
    D = nhead * head_dim
    inv = 1.0 / math.sqrt(head_dim)
    pad = (mask == 0)
    embs = data
    nodes = embs
    relay = jnp.mean(embs, axis=1, keepdims=True)

    def shift(x, s):
        if s == 0:
            return x
        z = jnp.zeros((B, abs(s), x.shape[-1]), x.dtype)
        if s > 0:
            return jnp.concatenate([x[:, s:], z], axis=1)
        return jnp.concatenate([z, x[:, :L + s]], axis=1)

    for p in params:
        mu = nodes.mean(-1, keepdims=True)
        var = ((nodes - mu) ** 2).mean(-1, keepdims=True)
        xn = (nodes - mu) / jnp.sqrt(var + LN_EPS) * p["gamma"] + p["beta"]
        q = xn @ p["wq"] + p["bq"]
        k = xn @ p["wk"] + p["bk"]
        v = xn @ p["wv"] + p["bv"]
        ak0 = embs @ p["wk"] + p["bk"]
        av0 = embs @ p["wv"] + p["bv"]
        ak1 = jnp.broadcast_to(relay @ p["wk"] + p["bk"], (B, L, D))
        av1 = jnp.broadcast_to(relay @ p["wv"] + p["bv"], (B, L, D))
        K = jnp.stack([shift(k, s) for s in (-2, -1, 0, 1, 2)] + [ak0, ak1], axis=2)
        V = jnp.stack([shift(v, s) for s in (-2, -1, 0, 1, 2)] + [av0, av1], axis=2)
        Qh = q.reshape(B, L, 1, nhead, head_dim)
        Kh = K.reshape(B, L, 7, nhead, head_dim)
        Vh = V.reshape(B, L, 7, nhead, head_dim)
        sc = (Qh * Kh).sum(-1) * inv
        al = jax.nn.softmax(sc, axis=2)
        att = (al[..., None] * Vh).sum(2).reshape(B, L, D)
        ret = att @ p["wo"] + p["bo"]
        nodes = nodes + jnp.where(ret >= 0, ret, NEG_SLOPE * ret)

        y = jnp.concatenate([relay, nodes], axis=1)
        qs = (relay @ p["wq2"] + p["bq2"]).reshape(B, nhead, head_dim)
        ks = (y @ p["wk2"] + p["bk2"]).reshape(B, L + 1, nhead, head_dim)
        pre = jnp.einsum("bhd,blhd->bhl", qs, ks) * inv
        spad = jnp.concatenate([jnp.zeros((B, 1), bool), pad], axis=1)
        pre = jnp.where(spad[:, None, :], MASK_VAL, pre)
        al2 = jax.nn.softmax(pre, axis=-1)
        atts = jnp.einsum("bhl,blhd->bhd", al2, ks).reshape(B, 1, D)
        rout = atts @ p["wo2"] + p["bo2"]
        relay = jnp.where(rout >= 0, rout, NEG_SLOPE * rout)
        nodes = jnp.where(pad[:, :, None], 0.0, nodes)
    return nodes, relay[:, 0, :]


if __name__ == "__main__":
    B, L, H = 4, 8, 32
    num_layers, num_head, head_dim = 2, 4, 8

    key = jax.random.PRNGKey(0)
    kd, kp = jax.random.split(key, 2)
    data = jax.random.normal(kd, (B, L, H), dtype=jnp.float32)
    mask = jnp.ones((B, L), dtype=jnp.int32)
    mask = mask.at[1, 6:].set(0).at[3, 3:].set(0)   # two sequences with padding
    params = init_params(kp, H, num_layers, num_head, head_dim)

    nodes, relay = star_transformer_forward(
        data, mask, params, num_head=num_head, head_dim=head_dim)
    nodes = jax.block_until_ready(nodes)
    relay = jax.block_until_ready(relay)

    with jax.default_matmul_precision("highest"):
        ref_nodes, ref_relay = reference_forward(data, mask, params, num_head, head_dim)

    assert nodes.shape == (B, L, H) and relay.shape == (B, H)
    # bf16 MXU operands (f32 accumulation) vs. the f32 reference -> loosened tolerance
    assert jnp.allclose(nodes, ref_nodes, rtol=5e-2, atol=5e-2), \
        float(jnp.max(jnp.abs(nodes - ref_nodes)))
    assert jnp.allclose(relay, ref_relay, rtol=5e-2, atol=5e-2), \
        float(jnp.max(jnp.abs(relay - ref_relay)))

    print("KERNEL_OK")
</pallas_src>

<mosaic_0001>
module attributes {stable_mosaic.version = 11 : i64} {
  func.func @_fused_layer_kernel(%arg0: i32, %arg1: memref<16x32xf32, #tpu.memory_space<vmem>>, %arg2: memref<16x32xbf16, #tpu.memory_space<vmem>>, %arg3: memref<2x1x32xf32, #tpu.memory_space<vmem>>, %arg4: memref<2x8x1xf32, #tpu.memory_space<vmem>>, %arg5: memref<1x32xf32, #tpu.memory_space<vmem>>, %arg6: memref<1x32xf32, #tpu.memory_space<vmem>>, %arg7: memref<32x32xbf16, #tpu.memory_space<vmem>>, %arg8: memref<1x32xf32, #tpu.memory_space<vmem>>, %arg9: memref<32x32xbf16, #tpu.memory_space<vmem>>, %arg10: memref<1x32xf32, #tpu.memory_space<vmem>>, %arg11: memref<32x32xbf16, #tpu.memory_space<vmem>>, %arg12: memref<1x32xf32, #tpu.memory_space<vmem>>, %arg13: memref<32x32xbf16, #tpu.memory_space<vmem>>, %arg14: memref<1x32xf32, #tpu.memory_space<vmem>>, %arg15: memref<32x32xbf16, #tpu.memory_space<vmem>>, %arg16: memref<1x32xf32, #tpu.memory_space<vmem>>, %arg17: memref<32x32xbf16, #tpu.memory_space<vmem>>, %arg18: memref<1x32xf32, #tpu.memory_space<vmem>>, %arg19: memref<32x32xbf16, #tpu.memory_space<vmem>>, %arg20: memref<1x32xf32, #tpu.memory_space<vmem>>, %arg21: memref<16x32xf32, #tpu.memory_space<vmem>>, %arg22: memref<2x1x32xf32, #tpu.memory_space<vmem>>) attributes {dimension_semantics = [#tpu.dimension_semantics<parallel>], iteration_bounds = array<i64: 2>, scalar_prefetch = 0 : i64, scratch_operands = 0 : i64, tpu.core_type = #tpu.core_type<tc>, window_params = [{transform_indices = @transform_0, window_bounds = array<i64: 16, 32>}, {transform_indices = @transform_1, window_bounds = array<i64: 16, 32>}, {transform_indices = @transform_2, window_bounds = array<i64: 2, 1, 32>}, {transform_indices = @transform_3, window_bounds = array<i64: 2, 8, 1>}, {pipeline_mode = #tpu.pipeline_mode<synchronous>, transform_indices = @transform_4, window_bounds = array<i64: 1, 32>}, {pipeline_mode = #tpu.pipeline_mode<synchronous>, transform_indices = @transform_5, window_bounds = array<i64: 1, 32>}, {pipeline_mode = #tpu.pipeline_mode<synchronous>, transform_indices = @transform_6, window_bounds = array<i64: 32, 32>}, {pipeline_mode = #tpu.pipeline_mode<synchronous>, transform_indices = @transform_7, window_bounds = array<i64: 1, 32>}, {pipeline_mode = #tpu.pipeline_mode<synchronous>, transform_indices = @transform_8, window_bounds = array<i64: 32, 32>}, {pipeline_mode = #tpu.pipeline_mode<synchronous>, transform_indices = @transform_9, window_bounds = array<i64: 1, 32>}, {pipeline_mode = #tpu.pipeline_mode<synchronous>, transform_indices = @transform_10, window_bounds = array<i64: 32, 32>}, {pipeline_mode = #tpu.pipeline_mode<synchronous>, transform_indices = @transform_11, window_bounds = array<i64: 1, 32>}, {pipeline_mode = #tpu.pipeline_mode<synchronous>, transform_indices = @transform_12, window_bounds = array<i64: 32, 32>}, {pipeline_mode = #tpu.pipeline_mode<synchronous>, transform_indices = @transform_13, window_bounds = array<i64: 1, 32>}, {pipeline_mode = #tpu.pipeline_mode<synchronous>, transform_indices = @transform_14, window_bounds = array<i64: 32, 32>}, {pipeline_mode = #tpu.pipeline_mode<synchronous>, transform_indices = @transform_15, window_bounds = array<i64: 1, 32>}, {pipeline_mode = #tpu.pipeline_mode<synchronous>, transform_indices = @transform_16, window_bounds = array<i64: 32, 32>}, {pipeline_mode = #tpu.pipeline_mode<synchronous>, transform_indices = @transform_17, window_bounds = array<i64: 1, 32>}, {pipeline_mode = #tpu.pipeline_mode<synchronous>, transform_indices = @transform_18, window_bounds = array<i64: 32, 32>}, {pipeline_mode = #tpu.pipeline_mode<synchronous>, transform_indices = @transform_19, window_bounds = array<i64: 1, 32>}, {transform_indices = @transform_20, window_bounds = array<i64: 16, 32>}, {transform_indices = @transform_21, window_bounds = array<i64: 2, 1, 32>}]} {
    %c0 = arith.constant 0 : index
    %c0_0 = arith.constant 0 : index
    %0 = vector.load %arg1[%c0, %c0_0] : memref<16x32xf32, #tpu.memory_space<vmem>>, vector<16x32xf32>
    %c0_1 = arith.constant 0 : index
    %c0_2 = arith.constant 0 : index
    %1 = vector.load %arg2[%c0_1, %c0_2] : memref<16x32xbf16, #tpu.memory_space<vmem>>, vector<16x32xbf16>
    %c0_3 = arith.constant 0 : index
    %c0_4 = arith.constant 0 : index
    %c0_5 = arith.constant 0 : index
    %2 = vector.load %arg3[%c0_3, %c0_4, %c0_5] : memref<2x1x32xf32, #tpu.memory_space<vmem>>, vector<2x1x32xf32>
    %3 = vector.shape_cast %2 : vector<2x1x32xf32> to vector<2x32xf32>
    %c0_6 = arith.constant 0 : index
    %c0_7 = arith.constant 0 : index
    %c0_8 = arith.constant 0 : index
    %4 = vector.load %arg4[%c0_6, %c0_7, %c0_8] : memref<2x8x1xf32, #tpu.memory_space<vmem>>, vector<2x8x1xf32>
    %5 = vector.shape_cast %4 : vector<2x8x1xf32> to vector<16x1xf32>
    %6 = tpu.iota {dimensions = array<i32: 1>} : vector<2x8x1xi32>
    %7 = vector.shape_cast %6 : vector<2x8x1xi32> to vector<16x1xi32>
    %cst = arith.constant dense<0.000000e+00> : vector<16xf32>
    %8 = vector.multi_reduction <add>, %0, %cst [1] : vector<16x32xf32> to vector<16xf32>
    %9 = vector.shape_cast %8 : vector<16xf32> to vector<16x1xf32>
    %cst_9 = arith.constant 3.200000e+01 : f32
    %10 = vector.broadcast %cst_9 : f32 to vector<16x1xf32>
    %11 = arith.divf %9, %10 : vector<16x1xf32>
    %12 = vector.broadcast %11 : vector<16x1xf32> to vector<16x32xf32>
    %13 = arith.subf %0, %12 : vector<16x32xf32>
    %14 = arith.mulf %13, %13 : vector<16x32xf32>
    %cst_10 = arith.constant dense<0.000000e+00> : vector<16xf32>
    %15 = vector.multi_reduction <add>, %14, %cst_10 [1] : vector<16x32xf32> to vector<16xf32>
    %16 = vector.shape_cast %15 : vector<16xf32> to vector<16x1xf32>
    %cst_11 = arith.constant 3.200000e+01 : f32
    %17 = vector.broadcast %cst_11 : f32 to vector<16x1xf32>
    %18 = arith.divf %16, %17 : vector<16x1xf32>
    %cst_12 = arith.constant 9.99999974E-6 : f32
    %19 = vector.broadcast %cst_12 : f32 to vector<16x1xf32>
    %20 = arith.addf %18, %19 : vector<16x1xf32>
    %21 = math.rsqrt %20 : vector<16x1xf32>
    %22 = vector.broadcast %21 : vector<16x1xf32> to vector<16x32xf32>
    %23 = arith.mulf %13, %22 : vector<16x32xf32>
    %c0_13 = arith.constant 0 : index
    %c0_14 = arith.constant 0 : index
    %24 = vector.load %arg5[%c0_13, %c0_14] : memref<1x32xf32, #tpu.memory_space<vmem>>, vector<1x32xf32>
    %25 = vector.broadcast %24 : vector<1x32xf32> to vector<16x32xf32>
    %26 = arith.mulf %23, %25 : vector<16x32xf32>
    %c0_15 = arith.constant 0 : index
    %c0_16 = arith.constant 0 : index
    %27 = vector.load %arg6[%c0_15, %c0_16] : memref<1x32xf32, #tpu.memory_space<vmem>>, vector<1x32xf32>
    %28 = vector.broadcast %27 : vector<1x32xf32> to vector<16x32xf32>
    %29 = arith.addf %26, %28 : vector<16x32xf32>
    %c0_17 = arith.constant 0 : index
    %c0_18 = arith.constant 0 : index
    %30 = vector.load %arg7[%c0_17, %c0_18] : memref<32x32xbf16, #tpu.memory_space<vmem>>, vector<32x32xbf16>
    %c0_19 = arith.constant 0 : index
    %c0_20 = arith.constant 0 : index
    %31 = vector.load %arg9[%c0_19, %c0_20] : memref<32x32xbf16, #tpu.memory_space<vmem>>, vector<32x32xbf16>
    %c0_21 = arith.constant 0 : index
    %c0_22 = arith.constant 0 : index
    %32 = vector.load %arg11[%c0_21, %c0_22] : memref<32x32xbf16, #tpu.memory_space<vmem>>, vector<32x32xbf16>
    %c0_23 = arith.constant 0 : index
    %c0_24 = arith.constant 0 : index
    %33 = vector.load %arg13[%c0_23, %c0_24] : memref<32x32xbf16, #tpu.memory_space<vmem>>, vector<32x32xbf16>
    %c0_25 = arith.constant 0 : index
    %c0_26 = arith.constant 0 : index
    %34 = vector.load %arg8[%c0_25, %c0_26] : memref<1x32xf32, #tpu.memory_space<vmem>>, vector<1x32xf32>
    %c0_27 = arith.constant 0 : index
    %c0_28 = arith.constant 0 : index
    %35 = vector.load %arg10[%c0_27, %c0_28] : memref<1x32xf32, #tpu.memory_space<vmem>>, vector<1x32xf32>
    %c0_29 = arith.constant 0 : index
    %c0_30 = arith.constant 0 : index
    %36 = vector.load %arg12[%c0_29, %c0_30] : memref<1x32xf32, #tpu.memory_space<vmem>>, vector<1x32xf32>
    %c0_31 = arith.constant 0 : index
    %c0_32 = arith.constant 0 : index
    %37 = vector.load %arg14[%c0_31, %c0_32] : memref<1x32xf32, #tpu.memory_space<vmem>>, vector<1x32xf32>
    %38 = arith.truncf %29 : vector<16x32xf32> to vector<16x32xbf16>
    %39 = arith.truncf %3 : vector<2x32xf32> to vector<2x32xbf16>
    %cst_33 = arith.constant dense<0.000000e+00> : vector<16x32xf32>
    %40 = tpu.matmul %38, %30, %cst_33 {dimension_numbers = #tpu.dot_dimension_numbers<[1], [0], [0], [1], [0, 0, 1, 1], [], []>} : vector<16x32xbf16>, vector<32x32xbf16>, vector<16x32xf32> -> vector<16x32xf32>
    %41 = vector.broadcast %34 : vector<1x32xf32> to vector<16x32xf32>
    %42 = arith.addf %40, %41 : vector<16x32xf32>
    %cst_34 = arith.constant dense<0.000000e+00> : vector<16x32xf32>
    %43 = tpu.matmul %38, %31, %cst_34 {dimension_numbers = #tpu.dot_dimension_numbers<[1], [0], [0], [1], [0, 0, 1, 1], [], []>} : vector<16x32xbf16>, vector<32x32xbf16>, vector<16x32xf32> -> vector<16x32xf32>
    %44 = vector.broadcast %35 : vector<1x32xf32> to vector<16x32xf32>
    %45 = arith.addf %43, %44 : vector<16x32xf32>
    %cst_35 = arith.constant dense<0.000000e+00> : vector<16x32xf32>
    %46 = tpu.matmul %38, %32, %cst_35 {dimension_numbers = #tpu.dot_dimension_numbers<[1], [0], [0], [1], [0, 0, 1, 1], [], []>} : vector<16x32xbf16>, vector<32x32xbf16>, vector<16x32xf32> -> vector<16x32xf32>
    %47 = vector.broadcast %36 : vector<1x32xf32> to vector<16x32xf32>
    %48 = arith.addf %46, %47 : vector<16x32xf32>
    %cst_36 = arith.constant dense<0.000000e+00> : vector<16x32xf32>
    %49 = tpu.matmul %1, %31, %cst_36 {dimension_numbers = #tpu.dot_dimension_numbers<[1], [0], [0], [1], [0, 0, 1, 1], [], []>} : vector<16x32xbf16>, vector<32x32xbf16>, vector<16x32xf32> -> vector<16x32xf32>
    %50 = vector.broadcast %35 : vector<1x32xf32> to vector<16x32xf32>
    %51 = arith.addf %49, %50 : vector<16x32xf32>
    %cst_37 = arith.constant dense<0.000000e+00> : vector<16x32xf32>
    %52 = tpu.matmul %1, %32, %cst_37 {dimension_numbers = #tpu.dot_dimension_numbers<[1], [0], [0], [1], [0, 0, 1, 1], [], []>} : vector<16x32xbf16>, vector<32x32xbf16>, vector<16x32xf32> -> vector<16x32xf32>
    %53 = vector.broadcast %36 : vector<1x32xf32> to vector<16x32xf32>
    %54 = arith.addf %52, %53 : vector<16x32xf32>
    %cst_38 = arith.constant dense<0.000000e+00> : vector<2x32xf32>
    %55 = tpu.matmul %39, %31, %cst_38 {dimension_numbers = #tpu.dot_dimension_numbers<[1], [0], [0], [1], [0, 0, 1, 1], [], []>} : vector<2x32xbf16>, vector<32x32xbf16>, vector<2x32xf32> -> vector<2x32xf32>
    %56 = vector.broadcast %35 : vector<1x32xf32> to vector<2x32xf32>
    %57 = arith.addf %55, %56 : vector<2x32xf32>
    %cst_39 = arith.constant dense<0.000000e+00> : vector<2x32xf32>
    %58 = tpu.matmul %39, %32, %cst_39 {dimension_numbers = #tpu.dot_dimension_numbers<[1], [0], [0], [1], [0, 0, 1, 1], [], []>} : vector<2x32xbf16>, vector<32x32xbf16>, vector<2x32xf32> -> vector<2x32xf32>
    %59 = vector.broadcast %36 : vector<1x32xf32> to vector<2x32xf32>
    %60 = arith.addf %58, %59 : vector<2x32xf32>
    %c2_i32 = arith.constant 2 : i32
    %61 = tpu.dynamic_rotate %45 by %c2_i32 dim 0 : vector<16x32xf32>, i32 -> vector<16x32xf32>
    %c2_i32_40 = arith.constant 2 : i32
    %62 = vector.broadcast %c2_i32_40 : i32 to vector<16x1xi32>
    %63 = arith.cmpi sge, %7, %62 : vector<16x1xi32>
    %cst_41 = arith.constant 0.000000e+00 : f32
    %64 = vector.shape_cast %63 : vector<16x1xi1> to vector<16x1xi1>
    %65 = vector.broadcast %64 : vector<16x1xi1> to vector<16x32xi1>
    %66 = vector.broadcast %cst_41 : f32 to vector<16x32xf32>
    %67 = arith.select %65, %61, %66 : vector<16x32xi1>, vector<16x32xf32>
    %68 = arith.mulf %42, %67 : vector<16x32xf32>
    %69 = vector.extract_strided_slice %68 {offsets = [0, 0], sizes = [16, 8], strides = [1, 1]} : vector<16x32xf32> to vector<16x8xf32>
    %cst_42 = arith.constant dense<0.000000e+00> : vector<16xf32>
    %70 = vector.multi_reduction <add>, %69, %cst_42 [1] : vector<16x8xf32> to vector<16xf32>
    %71 = vector.shape_cast %70 : vector<16xf32> to vector<16x1xf32>
    %72 = vector.extract_strided_slice %68 {offsets = [0, 8], sizes = [16, 8], strides = [1, 1]} : vector<16x32xf32> to vector<16x8xf32>
    %cst_43 = arith.constant dense<0.000000e+00> : vector<16xf32>
    %73 = vector.multi_reduction <add>, %72, %cst_43 [1] : vector<16x8xf32> to vector<16xf32>
    %74 = vector.shape_cast %73 : vector<16xf32> to vector<16x1xf32>
    %75 = vector.extract_strided_slice %68 {offsets = [0, 16], sizes = [16, 8], strides = [1, 1]} : vector<16x32xf32> to vector<16x8xf32>
    %cst_44 = arith.constant dense<0.000000e+00> : vector<16xf32>
    %76 = vector.multi_reduction <add>, %75, %cst_44 [1] : vector<16x8xf32> to vector<16xf32>
    %77 = vector.shape_cast %76 : vector<16xf32> to vector<16x1xf32>
    %78 = vector.extract_strided_slice %68 {offsets = [0, 24], sizes = [16, 8], strides = [1, 1]} : vector<16x32xf32> to vector<16x8xf32>
    %cst_45 = arith.constant dense<0.000000e+00> : vector<16xf32>
    %79 = vector.multi_reduction <add>, %78, %cst_45 [1] : vector<16x8xf32> to vector<16xf32>
    %80 = vector.shape_cast %79 : vector<16xf32> to vector<16x1xf32>
    %81 = tpu.concatenate %71, %74, %77, %80 in 1 : vector<16x1xf32>, vector<16x1xf32>, vector<16x1xf32>, vector<16x1xf32> -> vector<16x4xf32>
    %cst_46 = arith.constant 0.353553385 : f32
    %82 = vector.broadcast %cst_46 : f32 to vector<16x4xf32>
    %83 = arith.mulf %81, %82 : vector<16x4xf32>
    %c1_i32 = arith.constant 1 : i32
    %84 = tpu.dynamic_rotate %45 by %c1_i32 dim 0 : vector<16x32xf32>, i32 -> vector<16x32xf32>
    %c1_i32_47 = arith.constant 1 : i32
    %85 = vector.broadcast %c1_i32_47 : i32 to vector<16x1xi32>
    %86 = arith.cmpi sge, %7, %85 : vector<16x1xi32>
    %cst_48 = arith.constant 0.000000e+00 : f32
    %87 = vector.shape_cast %86 : vector<16x1xi1> to vector<16x1xi1>
    %88 = vector.broadcast %87 : vector<16x1xi1> to vector<16x32xi1>
    %89 = vector.broadcast %cst_48 : f32 to vector<16x32xf32>
    %90 = arith.select %88, %84, %89 : vector<16x32xi1>, vector<16x32xf32>
    %91 = arith.mulf %42, %90 : vector<16x32xf32>
    %92 = vector.extract_strided_slice %91 {offsets = [0, 0], sizes = [16, 8], strides = [1, 1]} : vector<16x32xf32> to vector<16x8xf32>
    %cst_49 = arith.constant dense<0.000000e+00> : vector<16xf32>
    %93 = vector.multi_reduction <add>, %92, %cst_49 [1] : vector<16x8xf32> to vector<16xf32>
    %94 = vector.shape_cast %93 : vector<16xf32> to vector<16x1xf32>
    %95 = vector.extract_strided_slice %91 {offsets = [0, 8], sizes = [16, 8], strides = [1, 1]} : vector<16x32xf32> to vector<16x8xf32>
    %cst_50 = arith.constant dense<0.000000e+00> : vector<16xf32>
    %96 = vector.multi_reduction <add>, %95, %cst_50 [1] : vector<16x8xf32> to vector<16xf32>
    %97 = vector.shape_cast %96 : vector<16xf32> to vector<16x1xf32>
    %98 = vector.extract_strided_slice %91 {offsets = [0, 16], sizes = [16, 8], strides = [1, 1]} : vector<16x32xf32> to vector<16x8xf32>
    %cst_51 = arith.constant dense<0.000000e+00> : vector<16xf32>
    %99 = vector.multi_reduction <add>, %98, %cst_51 [1] : vector<16x8xf32> to vector<16xf32>
    %100 = vector.shape_cast %99 : vector<16xf32> to vector<16x1xf32>
    %101 = vector.extract_strided_slice %91 {offsets = [0, 24], sizes = [16, 8], strides = [1, 1]} : vector<16x32xf32> to vector<16x8xf32>
    %cst_52 = arith.constant dense<0.000000e+00> : vector<16xf32>
    %102 = vector.multi_reduction <add>, %101, %cst_52 [1] : vector<16x8xf32> to vector<16xf32>
    %103 = vector.shape_cast %102 : vector<16xf32> to vector<16x1xf32>
    %104 = tpu.concatenate %94, %97, %100, %103 in 1 : vector<16x1xf32>, vector<16x1xf32>, vector<16x1xf32>, vector<16x1xf32> -> vector<16x4xf32>
    %cst_53 = arith.constant 0.353553385 : f32
    %105 = vector.broadcast %cst_53 : f32 to vector<16x4xf32>
    %106 = arith.mulf %104, %105 : vector<16x4xf32>
    %107 = arith.mulf %42, %45 : vector<16x32xf32>
    %108 = vector.extract_strided_slice %107 {offsets = [0, 0], sizes = [16, 8], strides = [1, 1]} : vector<16x32xf32> to vector<16x8xf32>
    %cst_54 = arith.constant dense<0.000000e+00> : vector<16xf32>
    %109 = vector.multi_reduction <add>, %108, %cst_54 [1] : vector<16x8xf32> to vector<16xf32>
    %110 = vector.shape_cast %109 : vector<16xf32> to vector<16x1xf32>
    %111 = vector.extract_strided_slice %107 {offsets = [0, 8], sizes = [16, 8], strides = [1, 1]} : vector<16x32xf32> to vector<16x8xf32>
    %cst_55 = arith.constant dense<0.000000e+00> : vector<16xf32>
    %112 = vector.multi_reduction <add>, %111, %cst_55 [1] : vector<16x8xf32> to vector<16xf32>
    %113 = vector.shape_cast %112 : vector<16xf32> to vector<16x1xf32>
    %114 = vector.extract_strided_slice %107 {offsets = [0, 16], sizes = [16, 8], strides = [1, 1]} : vector<16x32xf32> to vector<16x8xf32>
    %cst_56 = arith.constant dense<0.000000e+00> : vector<16xf32>
    %115 = vector.multi_reduction <add>, %114, %cst_56 [1] : vector<16x8xf32> to vector<16xf32>
    %116 = vector.shape_cast %115 : vector<16xf32> to vector<16x1xf32>
    %117 = vector.extract_strided_slice %107 {offsets = [0, 24], sizes = [16, 8], strides = [1, 1]} : vector<16x32xf32> to vector<16x8xf32>
    %cst_57 = arith.constant dense<0.000000e+00> : vector<16xf32>
    %118 = vector.multi_reduction <add>, %117, %cst_57 [1] : vector<16x8xf32> to vector<16xf32>
    %119 = vector.shape_cast %118 : vector<16xf32> to vector<16x1xf32>
    %120 = tpu.concatenate %110, %113, %116, %119 in 1 : vector<16x1xf32>, vector<16x1xf32>, vector<16x1xf32>, vector<16x1xf32> -> vector<16x4xf32>
    %cst_58 = arith.constant 0.353553385 : f32
    %121 = vector.broadcast %cst_58 : f32 to vector<16x4xf32>
    %122 = arith.mulf %120, %121 : vector<16x4xf32>
    %c15_i32 = arith.constant 15 : i32
    %123 = tpu.dynamic_rotate %45 by %c15_i32 dim 0 : vector<16x32xf32>, i32 -> vector<16x32xf32>
    %c7_i32 = arith.constant 7 : i32
    %124 = vector.broadcast %c7_i32 : i32 to vector<16x1xi32>
    %125 = arith.cmpi slt, %7, %124 : vector<16x1xi32>
    %cst_59 = arith.constant 0.000000e+00 : f32
    %126 = vector.shape_cast %125 : vector<16x1xi1> to vector<16x1xi1>
    %127 = vector.broadcast %126 : vector<16x1xi1> to vector<16x32xi1>
    %128 = vector.broadcast %cst_59 : f32 to vector<16x32xf32>
    %129 = arith.select %127, %123, %128 : vector<16x32xi1>, vector<16x32xf32>
    %130 = arith.mulf %42, %129 : vector<16x32xf32>
    %131 = vector.extract_strided_slice %130 {offsets = [0, 0], sizes = [16, 8], strides = [1, 1]} : vector<16x32xf32> to vector<16x8xf32>
    %cst_60 = arith.constant dense<0.000000e+00> : vector<16xf32>
    %132 = vector.multi_reduction <add>, %131, %cst_60 [1] : vector<16x8xf32> to vector<16xf32>
    %133 = vector.shape_cast %132 : vector<16xf32> to vector<16x1xf32>
    %134 = vector.extract_strided_slice %130 {offsets = [0, 8], sizes = [16, 8], strides = [1, 1]} : vector<16x32xf32> to vector<16x8xf32>
    %cst_61 = arith.constant dense<0.000000e+00> : vector<16xf32>
    %135 = vector.multi_reduction <add>, %134, %cst_61 [1] : vector<16x8xf32> to vector<16xf32>
    %136 = vector.shape_cast %135 : vector<16xf32> to vector<16x1xf32>
    %137 = vector.extract_strided_slice %130 {offsets = [0, 16], sizes = [16, 8], strides = [1, 1]} : vector<16x32xf32> to vector<16x8xf32>
    %cst_62 = arith.constant dense<0.000000e+00> : vector<16xf32>
    %138 = vector.multi_reduction <add>, %137, %cst_62 [1] : vector<16x8xf32> to vector<16xf32>
    %139 = vector.shape_cast %138 : vector<16xf32> to vector<16x1xf32>
    %140 = vector.extract_strided_slice %130 {offsets = [0, 24], sizes = [16, 8], strides = [1, 1]} : vector<16x32xf32> to vector<16x8xf32>
    %cst_63 = arith.constant dense<0.000000e+00> : vector<16xf32>
    %141 = vector.multi_reduction <add>, %140, %cst_63 [1] : vector<16x8xf32> to vector<16xf32>
    %142 = vector.shape_cast %141 : vector<16xf32> to vector<16x1xf32>
    %143 = tpu.concatenate %133, %136, %139, %142 in 1 : vector<16x1xf32>, vector<16x1xf32>, vector<16x1xf32>, vector<16x1xf32> -> vector<16x4xf32>
    %cst_64 = arith.constant 0.353553385 : f32
    %144 = vector.broadcast %cst_64 : f32 to vector<16x4xf32>
    %145 = arith.mulf %143, %144 : vector<16x4xf32>
    %c14_i32 = arith.constant 14 : i32
    %146 = tpu.dynamic_rotate %45 by %c14_i32 dim 0 : vector<16x32xf32>, i32 -> vector<16x32xf32>
    %c6_i32 = arith.constant 6 : i32
    %147 = vector.broadcast %c6_i32 : i32 to vector<16x1xi32>
    %148 = arith.cmpi slt, %7, %147 : vector<16x1xi32>
    %cst_65 = arith.constant 0.000000e+00 : f32
    %149 = vector.shape_cast %148 : vector<16x1xi1> to vector<16x1xi1>
    %150 = vector.broadcast %149 : vector<16x1xi1> to vector<16x32xi1>
    %151 = vector.broadcast %cst_65 : f32 to vector<16x32xf32>
    %152 = arith.select %150, %146, %151 : vector<16x32xi1>, vector<16x32xf32>
    %153 = arith.mulf %42, %152 : vector<16x32xf32>
    %154 = vector.extract_strided_slice %153 {offsets = [0, 0], sizes = [16, 8], strides = [1, 1]} : vector<16x32xf32> to vector<16x8xf32>
    %cst_66 = arith.constant dense<0.000000e+00> : vector<16xf32>
    %155 = vector.multi_reduction <add>, %154, %cst_66 [1] : vector<16x8xf32> to vector<16xf32>
    %156 = vector.shape_cast %155 : vector<16xf32> to vector<16x1xf32>
    %157 = vector.extract_strided_slice %153 {offsets = [0, 8], sizes = [16, 8], strides = [1, 1]} : vector<16x32xf32> to vector<16x8xf32>
    %cst_67 = arith.constant dense<0.000000e+00> : vector<16xf32>
    %158 = vector.multi_reduction <add>, %157, %cst_67 [1] : vector<16x8xf32> to vector<16xf32>
    %159 = vector.shape_cast %158 : vector<16xf32> to vector<16x1xf32>
    %160 = vector.extract_strided_slice %153 {offsets = [0, 16], sizes = [16, 8], strides = [1, 1]} : vector<16x32xf32> to vector<16x8xf32>
    %cst_68 = arith.constant dense<0.000000e+00> : vector<16xf32>
    %161 = vector.multi_reduction <add>, %160, %cst_68 [1] : vector<16x8xf32> to vector<16xf32>
    %162 = vector.shape_cast %161 : vector<16xf32> to vector<16x1xf32>
    %163 = vector.extract_strided_slice %153 {offsets = [0, 24], sizes = [16, 8], strides = [1, 1]} : vector<16x32xf32> to vector<16x8xf32>
    %cst_69 = arith.constant dense<0.000000e+00> : vector<16xf32>
    %164 = vector.multi_reduction <add>, %163, %cst_69 [1] : vector<16x8xf32> to vector<16xf32>
    %165 = vector.shape_cast %164 : vector<16xf32> to vector<16x1xf32>
    %166 = tpu.concatenate %156, %159, %162, %165 in 1 : vector<16x1xf32>, vector<16x1xf32>, vector<16x1xf32>, vector<16x1xf32> -> vector<16x4xf32>
    %cst_70 = arith.constant 0.353553385 : f32
    %167 = vector.broadcast %cst_70 : f32 to vector<16x4xf32>
    %168 = arith.mulf %166, %167 : vector<16x4xf32>
    %169 = arith.mulf %42, %51 : vector<16x32xf32>
    %170 = vector.extract_strided_slice %169 {offsets = [0, 0], sizes = [16, 8], strides = [1, 1]} : vector<16x32xf32> to vector<16x8xf32>
    %cst_71 = arith.constant dense<0.000000e+00> : vector<16xf32>
    %171 = vector.multi_reduction <add>, %170, %cst_71 [1] : vector<16x8xf32> to vector<16xf32>
    %172 = vector.shape_cast %171 : vector<16xf32> to vector<16x1xf32>
    %173 = vector.extract_strided_slice %169 {offsets = [0, 8], sizes = [16, 8], strides = [1, 1]} : vector<16x32xf32> to vector<16x8xf32>
    %cst_72 = arith.constant dense<0.000000e+00> : vector<16xf32>
    %174 = vector.multi_reduction <add>, %173, %cst_72 [1] : vector<16x8xf32> to vector<16xf32>
    %175 = vector.shape_cast %174 : vector<16xf32> to vector<16x1xf32>
    %176 = vector.extract_strided_slice %169 {offsets = [0, 16], sizes = [16, 8], strides = [1, 1]} : vector<16x32xf32> to vector<16x8xf32>
    %cst_73 = arith.constant dense<0.000000e+00> : vector<16xf32>
    %177 = vector.multi_reduction <add>, %176, %cst_73 [1] : vector<16x8xf32> to vector<16xf32>
    %178 = vector.shape_cast %177 : vector<16xf32> to vector<16x1xf32>
    %179 = vector.extract_strided_slice %169 {offsets = [0, 24], sizes = [16, 8], strides = [1, 1]} : vector<16x32xf32> to vector<16x8xf32>
    %cst_74 = arith.constant dense<0.000000e+00> : vector<16xf32>
    %180 = vector.multi_reduction <add>, %179, %cst_74 [1] : vector<16x8xf32> to vector<16xf32>
    %181 = vector.shape_cast %180 : vector<16xf32> to vector<16x1xf32>
    %182 = tpu.concatenate %172, %175, %178, %181 in 1 : vector<16x1xf32>, vector<16x1xf32>, vector<16x1xf32>, vector<16x1xf32> -> vector<16x4xf32>
    %cst_75 = arith.constant 0.353553385 : f32
    %183 = vector.broadcast %cst_75 : f32 to vector<16x4xf32>
    %184 = arith.mulf %182, %183 : vector<16x4xf32>
    %185 = vector.shape_cast %57 : vector<2x32xf32> to vector<2x1x32xf32>
    %186 = vector.shape_cast %185 : vector<2x1x32xf32> to vector<2x1x32xf32>
    %187 = vector.broadcast %186 : vector<2x1x32xf32> to vector<2x8x32xf32>
    %188 = vector.shape_cast %187 : vector<2x8x32xf32> to vector<16x32xf32>
    %189 = arith.mulf %42, %188 : vector<16x32xf32>
    %190 = vector.extract_strided_slice %189 {offsets = [0, 0], sizes = [16, 8], strides = [1, 1]} : vector<16x32xf32> to vector<16x8xf32>
    %cst_76 = arith.constant dense<0.000000e+00> : vector<16xf32>
    %191 = vector.multi_reduction <add>, %190, %cst_76 [1] : vector<16x8xf32> to vector<16xf32>
    %192 = vector.shape_cast %191 : vector<16xf32> to vector<16x1xf32>
    %193 = vector.extract_strided_slice %189 {offsets = [0, 8], sizes = [16, 8], strides = [1, 1]} : vector<16x32xf32> to vector<16x8xf32>
    %cst_77 = arith.constant dense<0.000000e+00> : vector<16xf32>
    %194 = vector.multi_reduction <add>, %193, %cst_77 [1] : vector<16x8xf32> to vector<16xf32>
    %195 = vector.shape_cast %194 : vector<16xf32> to vector<16x1xf32>
    %196 = vector.extract_strided_slice %189 {offsets = [0, 16], sizes = [16, 8], strides = [1, 1]} : vector<16x32xf32> to vector<16x8xf32>
    %cst_78 = arith.constant dense<0.000000e+00> : vector<16xf32>
    %197 = vector.multi_reduction <add>, %196, %cst_78 [1] : vector<16x8xf32> to vector<16xf32>
    %198 = vector.shape_cast %197 : vector<16xf32> to vector<16x1xf32>
    %199 = vector.extract_strided_slice %189 {offsets = [0, 24], sizes = [16, 8], strides = [1, 1]} : vector<16x32xf32> to vector<16x8xf32>
    %cst_79 = arith.constant dense<0.000000e+00> : vector<16xf32>
    %200 = vector.multi_reduction <add>, %199, %cst_79 [1] : vector<16x8xf32> to vector<16xf32>
    %201 = vector.shape_cast %200 : vector<16xf32> to vector<16x1xf32>
    %202 = tpu.concatenate %192, %195, %198, %201 in 1 : vector<16x1xf32>, vector<16x1xf32>, vector<16x1xf32>, vector<16x1xf32> -> vector<16x4xf32>
    %cst_80 = arith.constant 0.353553385 : f32
    %203 = vector.broadcast %cst_80 : f32 to vector<16x4xf32>
    %204 = arith.mulf %202, %203 : vector<16x4xf32>
    %205 = arith.maximumf %83, %106 : vector<16x4xf32>
    %206 = arith.maximumf %205, %122 : vector<16x4xf32>
    %207 = arith.maximumf %206, %145 : vector<16x4xf32>
    %208 = arith.maximumf %207, %168 : vector<16x4xf32>
    %209 = arith.maximumf %208, %184 : vector<16x4xf32>
    %210 = arith.maximumf %209, %204 : vector<16x4xf32>
    %211 = tpu.concatenate %83, %106, %122, %145, %168, %184, %204 in 1 : vector<16x4xf32>, vector<16x4xf32>, vector<16x4xf32>, vector<16x4xf32>, vector<16x4xf32>, vector<16x4xf32>, vector<16x4xf32> -> vector<16x28xf32>
    %212 = tpu.concatenate %210, %210, %210, %210, %210, %210, %210 in 1 : vector<16x4xf32>, vector<16x4xf32>, vector<16x4xf32>, vector<16x4xf32>, vector<16x4xf32>, vector<16x4xf32>, vector<16x4xf32> -> vector<16x28xf32>
    %213 = arith.subf %211, %212 : vector<16x28xf32>
    %214 = math.exp %213 : vector<16x28xf32>
    %215 = vector.extract_strided_slice %214 {offsets = [0, 0], sizes = [16, 4], strides = [1, 1]} : vector<16x28xf32> to vector<16x4xf32>
    %216 = vector.extract_strided_slice %214 {offsets = [0, 4], sizes = [16, 4], strides = [1, 1]} : vector<16x28xf32> to vector<16x4xf32>
    %217 = arith.addf %215, %216 : vector<16x4xf32>
    %218 = vector.extract_strided_slice %214 {offsets = [0, 8], sizes = [16, 4], strides = [1, 1]} : vector<16x28xf32> to vector<16x4xf32>
    %219 = arith.addf %217, %218 : vector<16x4xf32>
    %220 = vector.extract_strided_slice %214 {offsets = [0, 12], sizes = [16, 4], strides = [1, 1]} : vector<16x28xf32> to vector<16x4xf32>
    %221 = arith.addf %219, %220 : vector<16x4xf32>
    %222 = vector.extract_strided_slice %214 {offsets = [0, 16], sizes = [16, 4], strides = [1, 1]} : vector<16x28xf32> to vector<16x4xf32>
    %223 = arith.addf %221, %222 : vector<16x4xf32>
    %224 = vector.extract_strided_slice %214 {offsets = [0, 20], sizes = [16, 4], strides = [1, 1]} : vector<16x28xf32> to vector<16x4xf32>
    %225 = arith.addf %223, %224 : vector<16x4xf32>
    %226 = vector.extract_strided_slice %214 {offsets = [0, 24], sizes = [16, 4], strides = [1, 1]} : vector<16x28xf32> to vector<16x4xf32>
    %227 = arith.addf %225, %226 : vector<16x4xf32>
    %228 = tpu.reciprocal %227 {approx = true} : vector<16x4xf32> -> vector<16x4xf32>
    %cst_81 = arith.constant 0.000000e+00 : f32
    %229 = vector.broadcast %cst_81 : f32 to vector<16x32xf32>
    %230 = vector.extract_strided_slice %214 {offsets = [0, 0], sizes = [16, 4], strides = [1, 1]} : vector<16x28xf32> to vector<16x4xf32>
    %231 = arith.mulf %230, %228 : vector<16x4xf32>
    %232 = vector.extract_strided_slice %231 {offsets = [0, 0], sizes = [16, 1], strides = [1, 1]} : vector<16x4xf32> to vector<16x1xf32>
    %233 = vector.shape_cast %232 : vector<16x1xf32> to vector<16x1xf32>
    %234 = vector.broadcast %233 : vector<16x1xf32> to vector<16x8xf32>
    %235 = vector.extract_strided_slice %231 {offsets = [0, 1], sizes = [16, 1], strides = [1, 1]} : vector<16x4xf32> to vector<16x1xf32>
    %236 = vector.shape_cast %235 : vector<16x1xf32> to vector<16x1xf32>
    %237 = vector.broadcast %236 : vector<16x1xf32> to vector<16x8xf32>
    %238 = vector.extract_strided_slice %231 {offsets = [0, 2], sizes = [16, 1], strides = [1, 1]} : vector<16x4xf32> to vector<16x1xf32>
    %239 = vector.shape_cast %238 : vector<16x1xf32> to vector<16x1xf32>
    %240 = vector.broadcast %239 : vector<16x1xf32> to vector<16x8xf32>
    %241 = vector.extract_strided_slice %231 {offsets = [0, 3], sizes = [16, 1], strides = [1, 1]} : vector<16x4xf32> to vector<16x1xf32>
    %242 = vector.shape_cast %241 : vector<16x1xf32> to vector<16x1xf32>
    %243 = vector.broadcast %242 : vector<16x1xf32> to vector<16x8xf32>
    %244 = tpu.concatenate %234, %237, %240, %243 in 1 : vector<16x8xf32>, vector<16x8xf32>, vector<16x8xf32>, vector<16x8xf32> -> vector<16x32xf32>
    %c2_i32_82 = arith.constant 2 : i32
    %245 = tpu.dynamic_rotate %48 by %c2_i32_82 dim 0 : vector<16x32xf32>, i32 -> vector<16x32xf32>
    %c2_i32_83 = arith.constant 2 : i32
    %246 = vector.broadcast %c2_i32_83 : i32 to vector<16x1xi32>
    %247 = arith.cmpi sge, %7, %246 : vector<16x1xi32>
    %cst_84 = arith.constant 0.000000e+00 : f32
    %248 = vector.shape_cast %247 : vector<16x1xi1> to vector<16x1xi1>
    %249 = vector.broadcast %248 : vector<16x1xi1> to vector<16x32xi1>
    %250 = vector.broadcast %cst_84 : f32 to vector<16x32xf32>
    %251 = arith.select %249, %245, %250 : vector<16x32xi1>, vector<16x32xf32>
    %252 = arith.mulf %244, %251 : vector<16x32xf32>
    %253 = arith.addf %229, %252 : vector<16x32xf32>
    %254 = vector.extract_strided_slice %214 {offsets = [0, 4], sizes = [16, 4], strides = [1, 1]} : vector<16x28xf32> to vector<16x4xf32>
    %255 = arith.mulf %254, %228 : vector<16x4xf32>
    %256 = vector.extract_strided_slice %255 {offsets = [0, 0], sizes = [16, 1], strides = [1, 1]} : vector<16x4xf32> to vector<16x1xf32>
    %257 = vector.shape_cast %256 : vector<16x1xf32> to vector<16x1xf32>
    %258 = vector.broadcast %257 : vector<16x1xf32> to vector<16x8xf32>
    %259 = vector.extract_strided_slice %255 {offsets = [0, 1], sizes = [16, 1], strides = [1, 1]} : vector<16x4xf32> to vector<16x1xf32>
    %260 = vector.shape_cast %259 : vector<16x1xf32> to vector<16x1xf32>
    %261 = vector.broadcast %260 : vector<16x1xf32> to vector<16x8xf32>
    %262 = vector.extract_strided_slice %255 {offsets = [0, 2], sizes = [16, 1], strides = [1, 1]} : vector<16x4xf32> to vector<16x1xf32>
    %263 = vector.shape_cast %262 : vector<16x1xf32> to vector<16x1xf32>
    %264 = vector.broadcast %263 : vector<16x1xf32> to vector<16x8xf32>
    %265 = vector.extract_strided_slice %255 {offsets = [0, 3], sizes = [16, 1], strides = [1, 1]} : vector<16x4xf32> to vector<16x1xf32>
    %266 = vector.shape_cast %265 : vector<16x1xf32> to vector<16x1xf32>
    %267 = vector.broadcast %266 : vector<16x1xf32> to vector<16x8xf32>
    %268 = tpu.concatenate %258, %261, %264, %267 in 1 : vector<16x8xf32>, vector<16x8xf32>, vector<16x8xf32>, vector<16x8xf32> -> vector<16x32xf32>
    %c1_i32_85 = arith.constant 1 : i32
    %269 = tpu.dynamic_rotate %48 by %c1_i32_85 dim 0 : vector<16x32xf32>, i32 -> vector<16x32xf32>
    %c1_i32_86 = arith.constant 1 : i32
    %270 = vector.broadcast %c1_i32_86 : i32 to vector<16x1xi32>
    %271 = arith.cmpi sge, %7, %270 : vector<16x1xi32>
    %cst_87 = arith.constant 0.000000e+00 : f32
    %272 = vector.shape_cast %271 : vector<16x1xi1> to vector<16x1xi1>
    %273 = vector.broadcast %272 : vector<16x1xi1> to vector<16x32xi1>
    %274 = vector.broadcast %cst_87 : f32 to vector<16x32xf32>
    %275 = arith.select %273, %269, %274 : vector<16x32xi1>, vector<16x32xf32>
    %276 = arith.mulf %268, %275 : vector<16x32xf32>
    %277 = arith.addf %253, %276 : vector<16x32xf32>
    %278 = vector.extract_strided_slice %214 {offsets = [0, 8], sizes = [16, 4], strides = [1, 1]} : vector<16x28xf32> to vector<16x4xf32>
    %279 = arith.mulf %278, %228 : vector<16x4xf32>
    %280 = vector.extract_strided_slice %279 {offsets = [0, 0], sizes = [16, 1], strides = [1, 1]} : vector<16x4xf32> to vector<16x1xf32>
    %281 = vector.shape_cast %280 : vector<16x1xf32> to vector<16x1xf32>
    %282 = vector.broadcast %281 : vector<16x1xf32> to vector<16x8xf32>
    %283 = vector.extract_strided_slice %279 {offsets = [0, 1], sizes = [16, 1], strides = [1, 1]} : vector<16x4xf32> to vector<16x1xf32>
    %284 = vector.shape_cast %283 : vector<16x1xf32> to vector<16x1xf32>
    %285 = vector.broadcast %284 : vector<16x1xf32> to vector<16x8xf32>
    %286 = vector.extract_strided_slice %279 {offsets = [0, 2], sizes = [16, 1], strides = [1, 1]} : vector<16x4xf32> to vector<16x1xf32>
    %287 = vector.shape_cast %286 : vector<16x1xf32> to vector<16x1xf32>
    %288 = vector.broadcast %287 : vector<16x1xf32> to vector<16x8xf32>
    %289 = vector.extract_strided_slice %279 {offsets = [0, 3], sizes = [16, 1], strides = [1, 1]} : vector<16x4xf32> to vector<16x1xf32>
    %290 = vector.shape_cast %289 : vector<16x1xf32> to vector<16x1xf32>
    %291 = vector.broadcast %290 : vector<16x1xf32> to vector<16x8xf32>
    %292 = tpu.concatenate %282, %285, %288, %291 in 1 : vector<16x8xf32>, vector<16x8xf32>, vector<16x8xf32>, vector<16x8xf32> -> vector<16x32xf32>
    %293 = arith.mulf %292, %48 : vector<16x32xf32>
    %294 = arith.addf %277, %293 : vector<16x32xf32>
    %295 = vector.extract_strided_slice %214 {offsets = [0, 12], sizes = [16, 4], strides = [1, 1]} : vector<16x28xf32> to vector<16x4xf32>
    %296 = arith.mulf %295, %228 : vector<16x4xf32>
    %297 = vector.extract_strided_slice %296 {offsets = [0, 0], sizes = [16, 1], strides = [1, 1]} : vector<16x4xf32> to vector<16x1xf32>
    %298 = vector.shape_cast %297 : vector<16x1xf32> to vector<16x1xf32>
    %299 = vector.broadcast %298 : vector<16x1xf32> to vector<16x8xf32>
    %300 = vector.extract_strided_slice %296 {offsets = [0, 1], sizes = [16, 1], strides = [1, 1]} : vector<16x4xf32> to vector<16x1xf32>
    %301 = vector.shape_cast %300 : vector<16x1xf32> to vector<16x1xf32>
    %302 = vector.broadcast %301 : vector<16x1xf32> to vector<16x8xf32>
    %303 = vector.extract_strided_slice %296 {offsets = [0, 2], sizes = [16, 1], strides = [1, 1]} : vector<16x4xf32> to vector<16x1xf32>
    %304 = vector.shape_cast %303 : vector<16x1xf32> to vector<16x1xf32>
    %305 = vector.broadcast %304 : vector<16x1xf32> to vector<16x8xf32>
    %306 = vector.extract_strided_slice %296 {offsets = [0, 3], sizes = [16, 1], strides = [1, 1]} : vector<16x4xf32> to vector<16x1xf32>
    %307 = vector.shape_cast %306 : vector<16x1xf32> to vector<16x1xf32>
    %308 = vector.broadcast %307 : vector<16x1xf32> to vector<16x8xf32>
    %309 = tpu.concatenate %299, %302, %305, %308 in 1 : vector<16x8xf32>, vector<16x8xf32>, vector<16x8xf32>, vector<16x8xf32> -> vector<16x32xf32>
    %c15_i32_88 = arith.constant 15 : i32
    %310 = tpu.dynamic_rotate %48 by %c15_i32_88 dim 0 : vector<16x32xf32>, i32 -> vector<16x32xf32>
    %c7_i32_89 = arith.constant 7 : i32
    %311 = vector.broadcast %c7_i32_89 : i32 to vector<16x1xi32>
    %312 = arith.cmpi slt, %7, %311 : vector<16x1xi32>
    %cst_90 = arith.constant 0.000000e+00 : f32
    %313 = vector.shape_cast %312 : vector<16x1xi1> to vector<16x1xi1>
    %314 = vector.broadcast %313 : vector<16x1xi1> to vector<16x32xi1>
    %315 = vector.broadcast %cst_90 : f32 to vector<16x32xf32>
    %316 = arith.select %314, %310, %315 : vector<16x32xi1>, vector<16x32xf32>
    %317 = arith.mulf %309, %316 : vector<16x32xf32>
    %318 = arith.addf %294, %317 : vector<16x32xf32>
    %319 = vector.extract_strided_slice %214 {offsets = [0, 16], sizes = [16, 4], strides = [1, 1]} : vector<16x28xf32> to vector<16x4xf32>
    %320 = arith.mulf %319, %228 : vector<16x4xf32>
    %321 = vector.extract_strided_slice %320 {offsets = [0, 0], sizes = [16, 1], strides = [1, 1]} : vector<16x4xf32> to vector<16x1xf32>
    %322 = vector.shape_cast %321 : vector<16x1xf32> to vector<16x1xf32>
    %323 = vector.broadcast %322 : vector<16x1xf32> to vector<16x8xf32>
    %324 = vector.extract_strided_slice %320 {offsets = [0, 1], sizes = [16, 1], strides = [1, 1]} : vector<16x4xf32> to vector<16x1xf32>
    %325 = vector.shape_cast %324 : vector<16x1xf32> to vector<16x1xf32>
    %326 = vector.broadcast %325 : vector<16x1xf32> to vector<16x8xf32>
    %327 = vector.extract_strided_slice %320 {offsets = [0, 2], sizes = [16, 1], strides = [1, 1]} : vector<16x4xf32> to vector<16x1xf32>
    %328 = vector.shape_cast %327 : vector<16x1xf32> to vector<16x1xf32>
    %329 = vector.broadcast %328 : vector<16x1xf32> to vector<16x8xf32>
    %330 = vector.extract_strided_slice %320 {offsets = [0, 3], sizes = [16, 1], strides = [1, 1]} : vector<16x4xf32> to vector<16x1xf32>
    %331 = vector.shape_cast %330 : vector<16x1xf32> to vector<16x1xf32>
    %332 = vector.broadcast %331 : vector<16x1xf32> to vector<16x8xf32>
    %333 = tpu.concatenate %323, %326, %329, %332 in 1 : vector<16x8xf32>, vector<16x8xf32>, vector<16x8xf32>, vector<16x8xf32> -> vector<16x32xf32>
    %c14_i32_91 = arith.constant 14 : i32
    %334 = tpu.dynamic_rotate %48 by %c14_i32_91 dim 0 : vector<16x32xf32>, i32 -> vector<16x32xf32>
    %c6_i32_92 = arith.constant 6 : i32
    %335 = vector.broadcast %c6_i32_92 : i32 to vector<16x1xi32>
    %336 = arith.cmpi slt, %7, %335 : vector<16x1xi32>
    %cst_93 = arith.constant 0.000000e+00 : f32
    %337 = vector.shape_cast %336 : vector<16x1xi1> to vector<16x1xi1>
    %338 = vector.broadcast %337 : vector<16x1xi1> to vector<16x32xi1>
    %339 = vector.broadcast %cst_93 : f32 to vector<16x32xf32>
    %340 = arith.select %338, %334, %339 : vector<16x32xi1>, vector<16x32xf32>
    %341 = arith.mulf %333, %340 : vector<16x32xf32>
    %342 = arith.addf %318, %341 : vector<16x32xf32>
    %343 = vector.extract_strided_slice %214 {offsets = [0, 20], sizes = [16, 4], strides = [1, 1]} : vector<16x28xf32> to vector<16x4xf32>
    %344 = arith.mulf %343, %228 : vector<16x4xf32>
    %345 = vector.extract_strided_slice %344 {offsets = [0, 0], sizes = [16, 1], strides = [1, 1]} : vector<16x4xf32> to vector<16x1xf32>
    %346 = vector.shape_cast %345 : vector<16x1xf32> to vector<16x1xf32>
    %347 = vector.broadcast %346 : vector<16x1xf32> to vector<16x8xf32>
    %348 = vector.extract_strided_slice %344 {offsets = [0, 1], sizes = [16, 1], strides = [1, 1]} : vector<16x4xf32> to vector<16x1xf32>
    %349 = vector.shape_cast %348 : vector<16x1xf32> to vector<16x1xf32>
    %350 = vector.broadcast %349 : vector<16x1xf32> to vector<16x8xf32>
    %351 = vector.extract_strided_slice %344 {offsets = [0, 2], sizes = [16, 1], strides = [1, 1]} : vector<16x4xf32> to vector<16x1xf32>
    %352 = vector.shape_cast %351 : vector<16x1xf32> to vector<16x1xf32>
    %353 = vector.broadcast %352 : vector<16x1xf32> to vector<16x8xf32>
    %354 = vector.extract_strided_slice %344 {offsets = [0, 3], sizes = [16, 1], strides = [1, 1]} : vector<16x4xf32> to vector<16x1xf32>
    %355 = vector.shape_cast %354 : vector<16x1xf32> to vector<16x1xf32>
    %356 = vector.broadcast %355 : vector<16x1xf32> to vector<16x8xf32>
    %357 = tpu.concatenate %347, %350, %353, %356 in 1 : vector<16x8xf32>, vector<16x8xf32>, vector<16x8xf32>, vector<16x8xf32> -> vector<16x32xf32>
    %358 = arith.mulf %357, %54 : vector<16x32xf32>
    %359 = arith.addf %342, %358 : vector<16x32xf32>
    %360 = vector.extract_strided_slice %214 {offsets = [0, 24], sizes = [16, 4], strides = [1, 1]} : vector<16x28xf32> to vector<16x4xf32>
    %361 = arith.mulf %360, %228 : vector<16x4xf32>
    %362 = vector.extract_strided_slice %361 {offsets = [0, 0], sizes = [16, 1], strides = [1, 1]} : vector<16x4xf32> to vector<16x1xf32>
    %363 = vector.shape_cast %362 : vector<16x1xf32> to vector<16x1xf32>
    %364 = vector.broadcast %363 : vector<16x1xf32> to vector<16x8xf32>
    %365 = vector.extract_strided_slice %361 {offsets = [0, 1], sizes = [16, 1], strides = [1, 1]} : vector<16x4xf32> to vector<16x1xf32>
    %366 = vector.shape_cast %365 : vector<16x1xf32> to vector<16x1xf32>
    %367 = vector.broadcast %366 : vector<16x1xf32> to vector<16x8xf32>
    %368 = vector.extract_strided_slice %361 {offsets = [0, 2], sizes = [16, 1], strides = [1, 1]} : vector<16x4xf32> to vector<16x1xf32>
    %369 = vector.shape_cast %368 : vector<16x1xf32> to vector<16x1xf32>
    %370 = vector.broadcast %369 : vector<16x1xf32> to vector<16x8xf32>
    %371 = vector.extract_strided_slice %361 {offsets = [0, 3], sizes = [16, 1], strides = [1, 1]} : vector<16x4xf32> to vector<16x1xf32>
    %372 = vector.shape_cast %371 : vector<16x1xf32> to vector<16x1xf32>
    %373 = vector.broadcast %372 : vector<16x1xf32> to vector<16x8xf32>
    %374 = tpu.concatenate %364, %367, %370, %373 in 1 : vector<16x8xf32>, vector<16x8xf32>, vector<16x8xf32>, vector<16x8xf32> -> vector<16x32xf32>
    %375 = vector.shape_cast %60 : vector<2x32xf32> to vector<2x1x32xf32>
    %376 = vector.shape_cast %375 : vector<2x1x32xf32> to vector<2x1x32xf32>
    %377 = vector.broadcast %376 : vector<2x1x32xf32> to vector<2x8x32xf32>
    %378 = vector.shape_cast %377 : vector<2x8x32xf32> to vector<16x32xf32>
    %379 = arith.mulf %374, %378 : vector<16x32xf32>
    %380 = arith.addf %359, %379 : vector<16x32xf32>
    %381 = arith.truncf %380 : vector<16x32xf32> to vector<16x32xbf16>
    %cst_94 = arith.constant dense<0.000000e+00> : vector<16x32xf32>
    %382 = tpu.matmul %381, %33, %cst_94 {dimension_numbers = #tpu.dot_dimension_numbers<[1], [0], [0], [1], [0, 0, 1, 1], [], []>} : vector<16x32xbf16>, vector<32x32xbf16>, vector<16x32xf32> -> vector<16x32xf32>
    %383 = vector.broadcast %37 : vector<1x32xf32> to vector<16x32xf32>
    %384 = arith.addf %382, %383 : vector<16x32xf32>
    %cst_95 = arith.constant 0.000000e+00 : f32
    %385 = vector.broadcast %cst_95 : f32 to vector<16x32xf32>
    %386 = arith.cmpf oge, %384, %385 : vector<16x32xf32>
    %cst_96 = arith.constant 0.00999999977 : f32
    %387 = vector.broadcast %cst_96 : f32 to vector<16x32xf32>
    %388 = arith.mulf %387, %384 : vector<16x32xf32>
    %389 = arith.select %386, %384, %388 : vector<16x32xi1>, vector<16x32xf32>
    %390 = arith.addf %0, %389 : vector<16x32xf32>
    %cst_97 = arith.constant 0.000000e+00 : f32
    %391 = vector.broadcast %cst_97 : f32 to vector<16x1xf32>
    %392 = arith.cmpf ogt, %5, %391 : vector<16x1xf32>
    %cst_98 = arith.constant 0.000000e+00 : f32
    %393 = vector.shape_cast %392 : vector<16x1xi1> to vector<16x1xi1>
    %394 = vector.broadcast %393 : vector<16x1xi1> to vector<16x32xi1>
    %395 = vector.broadcast %cst_98 : f32 to vector<16x32xf32>
    %396 = arith.select %394, %395, %390 : vector<16x32xi1>, vector<16x32xf32>
    %c0_99 = arith.constant 0 : index
    %c0_100 = arith.constant 0 : index
    %397 = vector.load %arg21[%c0_99, %c0_100] : memref<16x32xf32, #tpu.memory_space<vmem>>, vector<16x32xf32>
    tpu.vector_store %arg21[%c0_99, %c0_100], %396 {strides = array<i32>} : memref<16x32xf32, #tpu.memory_space<vmem>>, vector<16x32xf32>,
    %c0_101 = arith.constant 0 : index
    %c0_102 = arith.constant 0 : index
    %398 = vector.load %arg15[%c0_101, %c0_102] : memref<32x32xbf16, #tpu.memory_space<vmem>>, vector<32x32xbf16>
    %c0_103 = arith.constant 0 : index
    %c0_104 = arith.constant 0 : index
    %399 = vector.load %arg17[%c0_103, %c0_104] : memref<32x32xbf16, #tpu.memory_space<vmem>>, vector<32x32xbf16>
    %c0_105 = arith.constant 0 : index
    %c0_106 = arith.constant 0 : index
    %400 = vector.load %arg19[%c0_105, %c0_106] : memref<32x32xbf16, #tpu.memory_space<vmem>>, vector<32x32xbf16>
    %c0_107 = arith.constant 0 : index
    %c0_108 = arith.constant 0 : index
    %401 = vector.load %arg16[%c0_107, %c0_108] : memref<1x32xf32, #tpu.memory_space<vmem>>, vector<1x32xf32>
    %c0_109 = arith.constant 0 : index
    %c0_110 = arith.constant 0 : index
    %402 = vector.load %arg18[%c0_109, %c0_110] : memref<1x32xf32, #tpu.memory_space<vmem>>, vector<1x32xf32>
    %c0_111 = arith.constant 0 : index
    %c0_112 = arith.constant 0 : index
    %403 = vector.load %arg20[%c0_111, %c0_112] : memref<1x32xf32, #tpu.memory_space<vmem>>, vector<1x32xf32>
    %cst_113 = arith.constant dense<0.000000e+00> : vector<2x32xf32>
    %404 = tpu.matmul %39, %398, %cst_113 {dimension_numbers = #tpu.dot_dimension_numbers<[1], [0], [0], [1], [0, 0, 1, 1], [], []>} : vector<2x32xbf16>, vector<32x32xbf16>, vector<2x32xf32> -> vector<2x32xf32>
    %405 = vector.broadcast %401 : vector<1x32xf32> to vector<2x32xf32>
    %406 = arith.addf %404, %405 : vector<2x32xf32>
    %cst_114 = arith.constant dense<0.000000e+00> : vector<2x32xf32>
    %407 = tpu.matmul %39, %399, %cst_114 {dimension_numbers = #tpu.dot_dimension_numbers<[1], [0], [0], [1], [0, 0, 1, 1], [], []>} : vector<2x32xbf16>, vector<32x32xbf16>, vector<2x32xf32> -> vector<2x32xf32>
    %408 = vector.broadcast %402 : vector<1x32xf32> to vector<2x32xf32>
    %409 = arith.addf %407, %408 : vector<2x32xf32>
    %410 = arith.truncf %390 : vector<16x32xf32> to vector<16x32xbf16>
    %cst_115 = arith.constant dense<0.000000e+00> : vector<16x32xf32>
    %411 = tpu.matmul %410, %399, %cst_115 {dimension_numbers = #tpu.dot_dimension_numbers<[1], [0], [0], [1], [0, 0, 1, 1], [], []>} : vector<16x32xbf16>, vector<32x32xbf16>, vector<16x32xf32> -> vector<16x32xf32>
    %412 = vector.broadcast %402 : vector<1x32xf32> to vector<16x32xf32>
    %413 = arith.addf %411, %412 : vector<16x32xf32>
    %414 = vector.shape_cast %413 : vector<16x32xf32> to vector<2x8x32xf32>
    %415 = vector.shape_cast %406 : vector<2x32xf32> to vector<2x1x32xf32>
    %416 = vector.broadcast %415 : vector<2x1x32xf32> to vector<2x8x32xf32>
    %417 = arith.mulf %414, %416 : vector<2x8x32xf32>
    %418 = vector.extract_strided_slice %417 {offsets = [0, 0, 0], sizes = [2, 8, 8], strides = [1, 1, 1]} : vector<2x8x32xf32> to vector<2x8x8xf32>
    %cst_116 = arith.constant dense<0.000000e+00> : vector<2x8xf32>
    %419 = vector.multi_reduction <add>, %418, %cst_116 [2] : vector<2x8x8xf32> to vector<2x8xf32>
    %420 = vector.shape_cast %419 : vector<2x8xf32> to vector<2x8x1xf32>
    %421 = vector.extract_strided_slice %417 {offsets = [0, 0, 8], sizes = [2, 8, 8], strides = [1, 1, 1]} : vector<2x8x32xf32> to vector<2x8x8xf32>
    %cst_117 = arith.constant dense<0.000000e+00> : vector<2x8xf32>
    %422 = vector.multi_reduction <add>, %421, %cst_117 [2] : vector<2x8x8xf32> to vector<2x8xf32>
    %423 = vector.shape_cast %422 : vector<2x8xf32> to vector<2x8x1xf32>
    %424 = vector.extract_strided_slice %417 {offsets = [0, 0, 16], sizes = [2, 8, 8], strides = [1, 1, 1]} : vector<2x8x32xf32> to vector<2x8x8xf32>
    %cst_118 = arith.constant dense<0.000000e+00> : vector<2x8xf32>
    %425 = vector.multi_reduction <add>, %424, %cst_118 [2] : vector<2x8x8xf32> to vector<2x8xf32>
    %426 = vector.shape_cast %425 : vector<2x8xf32> to vector<2x8x1xf32>
    %427 = vector.extract_strided_slice %417 {offsets = [0, 0, 24], sizes = [2, 8, 8], strides = [1, 1, 1]} : vector<2x8x32xf32> to vector<2x8x8xf32>
    %cst_119 = arith.constant dense<0.000000e+00> : vector<2x8xf32>
    %428 = vector.multi_reduction <add>, %427, %cst_119 [2] : vector<2x8x8xf32> to vector<2x8xf32>
    %429 = vector.shape_cast %428 : vector<2x8xf32> to vector<2x8x1xf32>
    %430 = tpu.concatenate %420, %423, %426, %429 in 2 : vector<2x8x1xf32>, vector<2x8x1xf32>, vector<2x8x1xf32>, vector<2x8x1xf32> -> vector<2x8x4xf32>
    %cst_120 = arith.constant 0.353553385 : f32
    %431 = vector.broadcast %cst_120 : f32 to vector<2x8x4xf32>
    %432 = arith.mulf %430, %431 : vector<2x8x4xf32>
    %433 = arith.mulf %409, %406 : vector<2x32xf32>
    %434 = vector.extract_strided_slice %433 {offsets = [0, 0], sizes = [2, 8], strides = [1, 1]} : vector<2x32xf32> to vector<2x8xf32>
    %cst_121 = arith.constant dense<0.000000e+00> : vector<2xf32>
    %435 = vector.multi_reduction <add>, %434, %cst_121 [1] : vector<2x8xf32> to vector<2xf32>
    %436 = vector.shape_cast %435 : vector<2xf32> to vector<2x1xf32>
    %437 = vector.extract_strided_slice %433 {offsets = [0, 8], sizes = [2, 8], strides = [1, 1]} : vector<2x32xf32> to vector<2x8xf32>
    %cst_122 = arith.constant dense<0.000000e+00> : vector<2xf32>
    %438 = vector.multi_reduction <add>, %437, %cst_122 [1] : vector<2x8xf32> to vector<2xf32>
    %439 = vector.shape_cast %438 : vector<2xf32> to vector<2x1xf32>
    %440 = vector.extract_strided_slice %433 {offsets = [0, 16], sizes = [2, 8], strides = [1, 1]} : vector<2x32xf32> to vector<2x8xf32>
    %cst_123 = arith.constant dense<0.000000e+00> : vector<2xf32>
    %441 = vector.multi_reduction <add>, %440, %cst_123 [1] : vector<2x8xf32> to vector<2xf32>
    %442 = vector.shape_cast %441 : vector<2xf32> to vector<2x1xf32>
    %443 = vector.extract_strided_slice %433 {offsets = [0, 24], sizes = [2, 8], strides = [1, 1]} : vector<2x32xf32> to vector<2x8xf32>
    %cst_124 = arith.constant dense<0.000000e+00> : vector<2xf32>
    %444 = vector.multi_reduction <add>, %443, %cst_124 [1] : vector<2x8xf32> to vector<2xf32>
    %445 = vector.shape_cast %444 : vector<2xf32> to vector<2x1xf32>
    %446 = tpu.concatenate %436, %439, %442, %445 in 1 : vector<2x1xf32>, vector<2x1xf32>, vector<2x1xf32>, vector<2x1xf32> -> vector<2x4xf32>
    %cst_125 = arith.constant 0.353553385 : f32
    %447 = vector.broadcast %cst_125 : f32 to vector<2x4xf32>
    %448 = arith.mulf %446, %447 : vector<2x4xf32>
    %cst_126 = arith.constant 0.000000e+00 : f32
    %449 = vector.broadcast %cst_126 : f32 to vector<2x8x1xf32>
    %450 = arith.cmpf ogt, %4, %449 : vector<2x8x1xf32>
    %cst_127 = arith.constant -1.000000e+10 : f32
    %451 = vector.shape_cast %450 : vector<2x8x1xi1> to vector<2x8x1xi1>
    %452 = vector.broadcast %451 : vector<2x8x1xi1> to vector<2x8x4xi1>
    %453 = vector.broadcast %cst_127 : f32 to vector<2x8x4xf32>
    %454 = arith.select %452, %453, %432 : vector<2x8x4xi1>, vector<2x8x4xf32>
    %cst_128 = arith.constant dense<0xFF800000> : vector<2x4xf32>
    %455 = vector.multi_reduction <maximumf>, %454, %cst_128 [1] : vector<2x8x4xf32> to vector<2x4xf32>
    %456 = arith.maximumf %448, %455 : vector<2x4xf32>
    %457 = arith.subf %448, %456 : vector<2x4xf32>
    %458 = math.exp %457 : vector<2x4xf32>
    %459 = vector.shape_cast %456 : vector<2x4xf32> to vector<2x1x4xf32>
    %460 = vector.broadcast %459 : vector<2x1x4xf32> to vector<2x8x4xf32>
    %461 = arith.subf %454, %460 : vector<2x8x4xf32>
    %462 = math.exp %461 : vector<2x8x4xf32>
    %cst_129 = arith.constant dense<0.000000e+00> : vector<2x4xf32>
    %463 = vector.multi_reduction <add>, %462, %cst_129 [1] : vector<2x8x4xf32> to vector<2x4xf32>
    %464 = arith.addf %458, %463 : vector<2x4xf32>
    %465 = tpu.reciprocal %464 {approx = true} : vector<2x4xf32> -> vector<2x4xf32>
    %466 = arith.mulf %458, %465 : vector<2x4xf32>
    %467 = vector.shape_cast %465 : vector<2x4xf32> to vector<2x1x4xf32>
    %468 = vector.broadcast %467 : vector<2x1x4xf32> to vector<2x8x4xf32>
    %469 = arith.mulf %462, %468 : vector<2x8x4xf32>
    %470 = vector.extract_strided_slice %466 {offsets = [0, 0], sizes = [2, 1], strides = [1, 1]} : vector<2x4xf32> to vector<2x1xf32>
    %471 = vector.shape_cast %470 : vector<2x1xf32> to vector<2x1xf32>
    %472 = vector.broadcast %471 : vector<2x1xf32> to vector<2x8xf32>
    %473 = vector.extract_strided_slice %466 {offsets = [0, 1], sizes = [2, 1], strides = [1, 1]} : vector<2x4xf32> to vector<2x1xf32>
    %474 = vector.shape_cast %473 : vector<2x1xf32> to vector<2x1xf32>
    %475 = vector.broadcast %474 : vector<2x1xf32> to vector<2x8xf32>
    %476 = vector.extract_strided_slice %466 {offsets = [0, 2], sizes = [2, 1], strides = [1, 1]} : vector<2x4xf32> to vector<2x1xf32>
    %477 = vector.shape_cast %476 : vector<2x1xf32> to vector<2x1xf32>
    %478 = vector.broadcast %477 : vector<2x1xf32> to vector<2x8xf32>
    %479 = vector.extract_strided_slice %466 {offsets = [0, 3], sizes = [2, 1], strides = [1, 1]} : vector<2x4xf32> to vector<2x1xf32>
    %480 = vector.shape_cast %479 : vector<2x1xf32> to vector<2x1xf32>
    %481 = vector.broadcast %480 : vector<2x1xf32> to vector<2x8xf32>
    %482 = tpu.concatenate %472, %475, %478, %481 in 1 : vector<2x8xf32>, vector<2x8xf32>, vector<2x8xf32>, vector<2x8xf32> -> vector<2x32xf32>
    %483 = arith.mulf %482, %409 : vector<2x32xf32>
    %484 = vector.extract_strided_slice %469 {offsets = [0, 0, 0], sizes = [2, 8, 1], strides = [1, 1, 1]} : vector<2x8x4xf32> to vector<2x8x1xf32>
    %485 = vector.shape_cast %484 : vector<2x8x1xf32> to vector<2x8x1xf32>
    %486 = vector.broadcast %485 : vector<2x8x1xf32> to vector<2x8x8xf32>
    %487 = vector.extract_strided_slice %469 {offsets = [0, 0, 1], sizes = [2, 8, 1], strides = [1, 1, 1]} : vector<2x8x4xf32> to vector<2x8x1xf32>
    %488 = vector.shape_cast %487 : vector<2x8x1xf32> to vector<2x8x1xf32>
    %489 = vector.broadcast %488 : vector<2x8x1xf32> to vector<2x8x8xf32>
    %490 = vector.extract_strided_slice %469 {offsets = [0, 0, 2], sizes = [2, 8, 1], strides = [1, 1, 1]} : vector<2x8x4xf32> to vector<2x8x1xf32>
    %491 = vector.shape_cast %490 : vector<2x8x1xf32> to vector<2x8x1xf32>
    %492 = vector.broadcast %491 : vector<2x8x1xf32> to vector<2x8x8xf32>
    %493 = vector.extract_strided_slice %469 {offsets = [0, 0, 3], sizes = [2, 8, 1], strides = [1, 1, 1]} : vector<2x8x4xf32> to vector<2x8x1xf32>
    %494 = vector.shape_cast %493 : vector<2x8x1xf32> to vector<2x8x1xf32>
    %495 = vector.broadcast %494 : vector<2x8x1xf32> to vector<2x8x8xf32>
    %496 = tpu.concatenate %486, %489, %492, %495 in 2 : vector<2x8x8xf32>, vector<2x8x8xf32>, vector<2x8x8xf32>, vector<2x8x8xf32> -> vector<2x8x32xf32>
    %497 = arith.mulf %496, %414 : vector<2x8x32xf32>
    %cst_130 = arith.constant dense<0.000000e+00> : vector<2x32xf32>
    %498 = vector.multi_reduction <add>, %497, %cst_130 [1] : vector<2x8x32xf32> to vector<2x32xf32>
    %499 = arith.addf %483, %498 : vector<2x32xf32>
    %500 = arith.truncf %499 : vector<2x32xf32> to vector<2x32xbf16>
    %cst_131 = arith.constant dense<0.000000e+00> : vector<2x32xf32>
    %501 = tpu.matmul %500, %400, %cst_131 {dimension_numbers = #tpu.dot_dimension_numbers<[1], [0], [0], [1], [0, 0, 1, 1], [], []>} : vector<2x32xbf16>, vector<32x32xbf16>, vector<2x32xf32> -> vector<2x32xf32>
    %502 = vector.broadcast %403 : vector<1x32xf32> to vector<2x32xf32>
    %503 = arith.addf %501, %502 : vector<2x32xf32>
    %cst_132 = arith.constant 0.000000e+00 : f32
    %504 = vector.broadcast %cst_132 : f32 to vector<2x32xf32>
    %505 = arith.cmpf oge, %503, %504 : vector<2x32xf32>
    %cst_133 = arith.constant 0.00999999977 : f32
    %506 = vector.broadcast %cst_133 : f32 to vector<2x32xf32>
    %507 = arith.mulf %506, %503 : vector<2x32xf32>
    %508 = arith.select %505, %503, %507 : vector<2x32xi1>, vector<2x32xf32>
    %509 = vector.shape_cast %508 : vector<2x32xf32> to vector<2x1x32xf32>
    %c0_134 = arith.constant 0 : index
    %c0_135 = arith.constant 0 : index
    %c0_136 = arith.constant 0 : index
    %510 = vector.load %arg22[%c0_134, %c0_135, %c0_136] : memref<2x1x32xf32, #tpu.memory_space<vmem>>, vector<2x1x32xf32>
    tpu.vector_store %arg22[%c0_134, %c0_135, %c0_136], %509 {strides = array<i32>} : memref<2x1x32xf32, #tpu.memory_space<vmem>>, vector<2x1x32xf32>,
    return
  }
  func.func @transform_0(%arg0: i32) -> (i32, i32) {
    %c0_i32 = arith.constant 0 : i32
    %c0_i32_0 = arith.constant 0 : i32
    return %arg0, %c0_i32 : i32, i32
  }
  func.func @transform_1(%arg0: i32) -> (i32, i32) {
    %c0_i32 = arith.constant 0 : i32
    %c0_i32_0 = arith.constant 0 : i32
    return %arg0, %c0_i32 : i32, i32
  }
  func.func @transform_2(%arg0: i32) -> (i32, i32, i32) {
    %c0_i32 = arith.constant 0 : i32
    %c0_i32_0 = arith.constant 0 : i32
    %c0_i32_1 = arith.constant 0 : i32
    return %arg0, %c0_i32, %c0_i32_0 : i32, i32, i32
  }
  func.func @transform_3(%arg0: i32) -> (i32, i32, i32) {
    %c0_i32 = arith.constant 0 : i32
    %c0_i32_0 = arith.constant 0 : i32
    %c0_i32_1 = arith.constant 0 : i32
    return %arg0, %c0_i32, %c0_i32_0 : i32, i32, i32
  }
  func.func @transform_4(%arg0: i32) -> (i32, i32) {
    %c0_i32 = arith.constant 0 : i32
    %c0_i32_0 = arith.constant 0 : i32
    %c0_i32_1 = arith.constant 0 : i32
    return %c0_i32, %c0_i32_0 : i32, i32
  }
  func.func @transform_5(%arg0: i32) -> (i32, i32) {
    %c0_i32 = arith.constant 0 : i32
    %c0_i32_0 = arith.constant 0 : i32
    %c0_i32_1 = arith.constant 0 : i32
    return %c0_i32, %c0_i32_0 : i32, i32
  }
  func.func @transform_6(%arg0: i32) -> (i32, i32) {
    %c0_i32 = arith.constant 0 : i32
    %c0_i32_0 = arith.constant 0 : i32
    %c0_i32_1 = arith.constant 0 : i32
    return %c0_i32, %c0_i32_0 : i32, i32
  }
  func.func @transform_7(%arg0: i32) -> (i32, i32) {
    %c0_i32 = arith.constant 0 : i32
    %c0_i32_0 = arith.constant 0 : i32
    %c0_i32_1 = arith.constant 0 : i32
    return %c0_i32, %c0_i32_0 : i32, i32
  }
  func.func @transform_8(%arg0: i32) -> (i32, i32) {
    %c0_i32 = arith.constant 0 : i32
    %c0_i32_0 = arith.constant 0 : i32
    %c0_i32_1 = arith.constant 0 : i32
    return %c0_i32, %c0_i32_0 : i32, i32
  }
  func.func @transform_9(%arg0: i32) -> (i32, i32) {
    %c0_i32 = arith.constant 0 : i32
    %c0_i32_0 = arith.constant 0 : i32
    %c0_i32_1 = arith.constant 0 : i32
    return %c0_i32, %c0_i32_0 : i32, i32
  }
  func.func @transform_10(%arg0: i32) -> (i32, i32) {
    %c0_i32 = arith.constant 0 : i32
    %c0_i32_0 = arith.constant 0 : i32
    %c0_i32_1 = arith.constant 0 : i32
    return %c0_i32, %c0_i32_0 : i32, i32
  }
  func.func @transform_11(%arg0: i32) -> (i32, i32) {
    %c0_i32 = arith.constant 0 : i32
    %c0_i32_0 = arith.constant 0 : i32
    %c0_i32_1 = arith.constant 0 : i32
    return %c0_i32, %c0_i32_0 : i32, i32
  }
  func.func @transform_12(%arg0: i32) -> (i32, i32) {
    %c0_i32 = arith.constant 0 : i32
    %c0_i32_0 = arith.constant 0 : i32
    %c0_i32_1 = arith.constant 0 : i32
    return %c0_i32, %c0_i32_0 : i32, i32
  }
  func.func @transform_13(%arg0: i32) -> (i32, i32) {
    %c0_i32 = arith.constant 0 : i32
    %c0_i32_0 = arith.constant 0 : i32
    %c0_i32_1 = arith.constant 0 : i32
    return %c0_i32, %c0_i32_0 : i32, i32
  }
  func.func @transform_14(%arg0: i32) -> (i32, i32) {
    %c0_i32 = arith.constant 0 : i32
    %c0_i32_0 = arith.constant 0 : i32
    %c0_i32_1 = arith.constant 0 : i32
    return %c0_i32, %c0_i32_0 : i32, i32
  }
  func.func @transform_15(%arg0: i32) -> (i32, i32) {
    %c0_i32 = arith.constant 0 : i32
    %c0_i32_0 = arith.constant 0 : i32
    %c0_i32_1 = arith.constant 0 : i32
    return %c0_i32, %c0_i32_0 : i32, i32
  }
  func.func @transform_16(%arg0: i32) -> (i32, i32) {
    %c0_i32 = arith.constant 0 : i32
    %c0_i32_0 = arith.constant 0 : i32
    %c0_i32_1 = arith.constant 0 : i32
    return %c0_i32, %c0_i32_0 : i32, i32
  }
  func.func @transform_17(%arg0: i32) -> (i32, i32) {
    %c0_i32 = arith.constant 0 : i32
    %c0_i32_0 = arith.constant 0 : i32
    %c0_i32_1 = arith.constant 0 : i32
    return %c0_i32, %c0_i32_0 : i32, i32
  }
  func.func @transform_18(%arg0: i32) -> (i32, i32) {
    %c0_i32 = arith.constant 0 : i32
    %c0_i32_0 = arith.constant 0 : i32
    %c0_i32_1 = arith.constant 0 : i32
    return %c0_i32, %c0_i32_0 : i32, i32
  }
  func.func @transform_19(%arg0: i32) -> (i32, i32) {
    %c0_i32 = arith.constant 0 : i32
    %c0_i32_0 = arith.constant 0 : i32
    %c0_i32_1 = arith.constant 0 : i32
    return %c0_i32, %c0_i32_0 : i32, i32
  }
  func.func @transform_20(%arg0: i32) -> (i32, i32) {
    %c0_i32 = arith.constant 0 : i32
    %c0_i32_0 = arith.constant 0 : i32
    return %arg0, %c0_i32 : i32, i32
  }
  func.func @transform_21(%arg0: i32) -> (i32, i32, i32) {
    %c0_i32 = arith.constant 0 : i32
    %c0_i32_0 = arith.constant 0 : i32
    %c0_i32_1 = arith.constant 0 : i32
    return %arg0, %c0_i32, %c0_i32_0 : i32, i32, i32
  }
}

</mosaic_0001>

<llo_original>
// kernel: tpu_custom_call.1
$region0: #{tpu_custom_call.1}
  #allocation0 [shape = 'u32[]', space=smem, size = 0x4, offset = 0x4, fixed_abs, tag = 'smem constant byte address 0x4 - core index']
  #allocation1 [shape = 'u32[144,128]{1,0:T(1,128)}', space=vmem, size = 0x12000, scoped, tag = 'internal scratch']
  %s0 = inlined_call_operand.vmem [shape: f32[32,32], index: 0, kind: input, shape index: {}]
  %s1 = inlined_call_operand.hbm [shape: bf16[32,32], index: 1, kind: input, shape index: {}]
  %s2 = inlined_call_operand.hbm [shape: f32[4,1,32], index: 2, kind: input, shape index: {}]
  %s3 = inlined_call_operand.vmem [shape: f32[4,8,1], index: 3, kind: input, shape index: {}]
  %s4 = inlined_call_operand.hbm [shape: f32[1,32], index: 4, kind: input, shape index: {}]
  %s5 = inlined_call_operand.hbm [shape: f32[1,32], index: 5, kind: input, shape index: {}]
  %s6 = inlined_call_operand.vmem [shape: bf16[32,32], index: 6, kind: input, shape index: {}]
  %s7 = inlined_call_operand.hbm [shape: f32[1,32], index: 7, kind: input, shape index: {}]
  %s8 = inlined_call_operand.vmem [shape: bf16[32,32], index: 8, kind: input, shape index: {}]
  %s9 = inlined_call_operand.hbm [shape: f32[1,32], index: 9, kind: input, shape index: {}]
  %s10 = inlined_call_operand.hbm [shape: bf16[32,32], index: 10, kind: input, shape index: {}]
  %s11 = inlined_call_operand.hbm [shape: f32[1,32], index: 11, kind: input, shape index: {}]
  %s12 = inlined_call_operand.vmem [shape: bf16[32,32], index: 12, kind: input, shape index: {}]
  %s13 = inlined_call_operand.hbm [shape: f32[1,32], index: 13, kind: input, shape index: {}]
  %s14 = inlined_call_operand.hbm [shape: bf16[32,32], index: 14, kind: input, shape index: {}]
  %s15 = inlined_call_operand.hbm [shape: f32[1,32], index: 15, kind: input, shape index: {}]
  %s16 = inlined_call_operand.vmem [shape: bf16[32,32], index: 16, kind: input, shape index: {}]
  %s17 = inlined_call_operand.vmem [shape: f32[1,32], index: 17, kind: input, shape index: {}]
  %s18 = inlined_call_operand.hbm [shape: bf16[32,32], index: 18, kind: input, shape index: {}]
  %s19 = inlined_call_operand.vmem [shape: f32[1,32], index: 19, kind: input, shape index: {}]
  %s20 = inlined_call_operand.hbm [shape: f32[32,32], index: 20, kind: output, shape index: {0}]
  %s21 = inlined_call_operand.hbm [shape: f32[4,1,32], index: 21, kind: output, shape index: {1}]
  %22 = xla_tuple %s20, %s21
  %s23 = sld [smem:[#allocation0]]
  $region169: #{tpu_custom_call.1} parent=0
    _
  %s25 = ssub.s32 1, %s23
  %s26 = scalar_select 0, %s25, %s23
  $region1: #{tpu_custom_call.1} parent=0
    #allocation2 [shape = 'u8[8192]{0}', space=vmem, size = 0x2000, scoped, tag = 'input window, operand 1']
    #allocation3 [shape = 's32[2]{0}', space=sflag, size = 0x8, scoped, tag = 'scoped memory for tpu_custom_call.1']
    #allocation4 [shape = 's32[2]{0}', space=sflag, size = 0x8, scoped, tag = 'scoped memory for tpu_custom_call.1']
    #allocation5 [shape = 'u8[2048]{0}', space=vmem, size = 0x800, scoped, tag = 'input window, operand 2']
    #allocation6 [shape = 's32[2]{0}', space=sflag, size = 0x8, scoped, tag = 'scoped memory for tpu_custom_call.1']
    #allocation7 [shape = 'u8[512]{0}', space=vmem, size = 0x400, scoped, tag = 'input window, operand 4, single buffered']
    #allocation8 [shape = 'u8[512]{0}', space=vmem, size = 0x400, scoped, tag = 'input window, operand 5, single buffered']
    #allocation9 [shape = 's32[1]{0}', space=sflag, size = 0x4, scoped, tag = 'scoped memory for tpu_custom_call.1']
    #allocation10 [shape = 'u8[512]{0}', space=vmem, size = 0x400, scoped, tag = 'input window, operand 7, single buffered']
    #allocation11 [shape = 'u8[512]{0}', space=vmem, size = 0x400, scoped, tag = 'input window, operand 9, single buffered']
    #allocation12 [shape = 's32[1]{0}', space=sflag, size = 0x4, scoped, tag = 'scoped memory for tpu_custom_call.1']
    #allocation13 [shape = 'u8[8192]{0}', space=vmem, size = 0x2000, scoped, tag = 'input window, operand 10, single buffered']
    #allocation14 [shape = 'u8[512]{0}', space=vmem, size = 0x400, scoped, tag = 'input window, operand 11, single buffered']
    #allocation15 [shape = 's32[1]{0}', space=sflag, size = 0x4, scoped, tag = 'scoped memory for tpu_custom_call.1']
    #allocation16 [shape = 'u8[512]{0}', space=vmem, size = 0x400, scoped, tag = 'input window, operand 13, single buffered']
    #allocation17 [shape = 'u8[8192]{0}', space=vmem, size = 0x2000, scoped, tag = 'input window, operand 14, single buffered']
    #allocation18 [shape = 's32[1]{0}', space=sflag, size = 0x4, scoped, tag = 'scoped memory for tpu_custom_call.1']
    #allocation19 [shape = 'u8[512]{0}', space=vmem, size = 0x400, scoped, tag = 'input window, operand 15, single buffered']
    #allocation20 [shape = 'u8[8192]{0}', space=vmem, size = 0x2000, scoped, tag = 'input window, operand 18, single buffered']
    #allocation21 [shape = 's32[1]{0}', space=sflag, size = 0x4, scoped, tag = 'scoped memory for tpu_custom_call.1']
    #allocation22 [shape = 'u8[16384]{0}', space=vmem, size = 0x4000, scoped, tag = 'output window, operand 0']
    #allocation23 [shape = 'u8[2048]{0}', space=vmem, size = 0x800, scoped, tag = 'output window, operand 1']
    #allocation24 [shape = 's32[2]{0}', space=sflag, size = 0x8, scoped, tag = 'scoped memory for tpu_custom_call.1']
    %27 = vsyncpa [#allocation3], 0
    %s28 = scalar_lea.sflag [#allocation3], 1
    %29 = vsyncpa %s28, 0
    %30 = vsyncpa [#allocation6], 0
    %s31 = scalar_lea.sflag [#allocation6], 1
    %32 = vsyncpa %s31, 0
    %33 = vsyncpa [#allocation9], 0
    %34 = vsyncpa [#allocation12], 0
    %35 = vsyncpa [#allocation15], 0
    %36 = vsyncpa [#allocation18], 0
    %37 = vsyncpa [#allocation21], 0
    %38 = vsyncpa [#allocation4], 0
    %s39 = scalar_lea.sflag [#allocation4], 1
    %40 = vsyncpa %s39, 0
    %41 = vsyncpa [#allocation24], 0
    %s42 = scalar_lea.sflag [#allocation24], 1
    %43 = vsyncpa %s42, 0
    loop: start=0, step=1, limit=4
    $region2: #{tpu_custom_call.1} parent=1 // loop_pre_header
      _
    $region3: #{tpu_custom_call.1} parent=1 // loop_header
      %s45 = sphi 0, %s49
      %p46 = scmp.ge.s32.totalorder %s45, 4
      %s55 = sphi 0, %s57
      %s58 = sphi 0, %s55
      %s59 = sphi 0, %s58
      %s75 = sphi 0, %s59
      %s81 = sphi 0, %s83
      %s84 = sphi 0, %s81
      %s85 = sphi 0, %s84
      %s101 = sphi 0, %s85
      %s107 = sphi 0, %s109
      %s110 = sphi 0, %s107
      %s111 = sphi 0, %s110
      %s127 = sphi 0, %s111
      %s133 = sphi 0, %s135
      %s136 = sphi 0, %s133
      %s137 = sphi 0, %s136
      %s153 = sphi 0, %s137
      %s157 = sphi 0, %s157
      %s159 = sphi 0, %s157
      %s160 = sphi 0, %s159
      %s174 = sphi 0, %s160
      %s178 = sphi 0, %s178
      %s180 = sphi 0, %s178
      %s181 = sphi 0, %s180
      %s195 = sphi 0, %s181
      %s199 = sphi 0, %s199
      %s201 = sphi 0, %s199
      %s202 = sphi 0, %s201
      %s216 = sphi 0, %s202
      %s220 = sphi 0, %s220
      %s222 = sphi 0, %s220
      %s223 = sphi 0, %s222
      %s237 = sphi 0, %s223
      %s241 = sphi 0, %s241
      %s243 = sphi 0, %s241
      %s244 = sphi 0, %s243
      %s258 = sphi 0, %s244
      %s262 = sphi 0, %s262
      %s264 = sphi 0, %s262
      %s265 = sphi 0, %s264
      %s279 = sphi 0, %s265
      %s283 = sphi 0, %s283
      %s285 = sphi 0, %s283
      %s286 = sphi 0, %s285
      %s300 = sphi 0, %s286
      %s304 = sphi 0, %s304
      %s306 = sphi 0, %s304
      %s307 = sphi 0, %s306
      %s321 = sphi 0, %s307
      %s325 = sphi 0, %s325
      %s327 = sphi 0, %s325
      %s328 = sphi 0, %s327
      %s342 = sphi 0, %s328
      %s346 = sphi 0, %s346
      %s348 = sphi 0, %s346
      %s349 = sphi 0, %s348
      %s363 = sphi 0, %s349
      %s367 = sphi 0, %s367
      %s369 = sphi 0, %s367
      %s370 = sphi 0, %s369
      %s384 = sphi 0, %s370
      %s388 = sphi 0, %s388
      %s390 = sphi 0, %s388
      %s391 = sphi 0, %s390
      %s405 = sphi 0, %s391
      %s409 = sphi 0, %s409
      %s411 = sphi 0, %s409
      %s412 = sphi 0, %s411
      %s426 = sphi 0, %s412
      %s430 = sphi 0, %s430
      %s432 = sphi 0, %s430
      %s433 = sphi 0, %s432
      %s447 = sphi 0, %s433
      %s451 = sphi 0, %s451
      %s453 = sphi 0, %s451
      %s454 = sphi 0, %s453
      %s468 = sphi 0, %s454
      %s472 = sphi 0, %s472
      %s474 = sphi 0, %s472
      %s475 = sphi 0, %s474
      %s489 = sphi 0, %s475
      %s495 = sphi 0, %s497
      %s498 = sphi 0, %s495
      %s499 = sphi 0, %s498
      %s515 = sphi 0, %s499
      %s521 = sphi 0, %s523
      %s524 = sphi 0, %s521
      %s525 = sphi 0, %s524
      %s541 = sphi 0, %s525
    $region4: #{tpu_custom_call.1} parent=1 // loop_header_branch
      %48 = sbr.rel (%p46) target = $region8
    $region5: #{tpu_custom_call.1} parent=1 // loop_body
      %s50 = ssub.s32 %s45, 1
      %s51 = ssub.s32 %s45, 2
      %s52 = sadd.s32 %s45, 1
      %s53 = ssub.s32 %s45, %s52
      %p54 = scmp.eq.s32.totalorder %s53, 0
      %s56 = sadd.s32 %s55, 1
      %s57 = scalar_select %p54, %s55, %s56
      %p60 = pneg %p54
      %p61 = scmp.eq.s32.totalorder %s45, 1
      %p62 = por %p60, %p61
      %p63 = scmp.ne.s32.totalorder %s55, %s58
      %p64 = scmp.eq.s32.totalorder %s45, 0
      %p65 = por %p63, %p64
      %p66 = scmp.ne.s32.totalorder %s55, %s58
      %p67 = scmp.eq.s32.totalorder %s50, 1
      %p68 = por %p66, %p67
      %p69 = scmp.ne.s32.totalorder %s58, %s59
      %p70 = scmp.eq.s32.totalorder %s50, 0
      %p71 = por %p69, %p70
      %p72 = scmp.ne.s32.totalorder %s58, %s59
      %p73 = scmp.eq.s32.totalorder %s51, 1
      %p74 = por %p72, %p73
      %p76 = scmp.ne.s32.totalorder %s59, %s75
      %p77 = scmp.eq.s32.totalorder %s51, 0
      %p78 = por %p76, %p77
      %s79 = ssub.s32 %s45, %s52
      %p80 = scmp.eq.s32.totalorder %s79, 0
      %s82 = sadd.s32 %s81, 1
      %s83 = scalar_select %p80, %s81, %s82
      %p86 = pneg %p80
      %p87 = scmp.eq.s32.totalorder %s45, 1
      %p88 = por %p86, %p87
      %p89 = scmp.ne.s32.totalorder %s81, %s84
      %p90 = scmp.eq.s32.totalorder %s45, 0
      %p91 = por %p89, %p90
      %p92 = scmp.ne.s32.totalorder %s81, %s84
      %p93 = scmp.eq.s32.totalorder %s50, 1
      %p94 = por %p92, %p93
      %p95 = scmp.ne.s32.totalorder %s84, %s85
      %p96 = scmp.eq.s32.totalorder %s50, 0
      %p97 = por %p95, %p96
      %p98 = scmp.ne.s32.totalorder %s84, %s85
      %p99 = scmp.eq.s32.totalorder %s51, 1
      %p100 = por %p98, %p99
      %p102 = scmp.ne.s32.totalorder %s85, %s101
      %p103 = scmp.eq.s32.totalorder %s51, 0
      %p104 = por %p102, %p103
      %s105 = ssub.s32 %s45, %s52
      %p106 = scmp.eq.s32.totalorder %s105, 0
      %s108 = sadd.s32 %s107, 1
      %s109 = scalar_select %p106, %s107, %s108
      %p112 = pneg %p106
      %p113 = scmp.eq.s32.totalorder %s45, 1
      %p114 = por %p112, %p113
      %p115 = scmp.ne.s32.totalorder %s107, %s110
      %p116 = scmp.eq.s32.totalorder %s45, 0
      %p117 = por %p115, %p116
      %p118 = scmp.ne.s32.totalorder %s107, %s110
      %p119 = scmp.eq.s32.totalorder %s50, 1
      %p120 = por %p118, %p119
      %p121 = scmp.ne.s32.totalorder %s110, %s111
      %p122 = scmp.eq.s32.totalorder %s50, 0
      %p123 = por %p121, %p122
      %p124 = scmp.ne.s32.totalorder %s110, %s111
      %p125 = scmp.eq.s32.totalorder %s51, 1
      %p126 = por %p124, %p125
      %p128 = scmp.ne.s32.totalorder %s111, %s127
      %p129 = scmp.eq.s32.totalorder %s51, 0
      %p130 = por %p128, %p129
      %s131 = ssub.s32 %s45, %s52
      %p132 = scmp.eq.s32.totalorder %s131, 0
      %s134 = sadd.s32 %s133, 1
      %s135 = scalar_select %p132, %s133, %s134
      %p138 = pneg %p132
      %p139 = scmp.eq.s32.totalorder %s45, 1
      %p140 = por %p138, %p139
      %p141 = scmp.ne.s32.totalorder %s133, %s136
      %p142 = scmp.eq.s32.totalorder %s45, 0
      %p143 = por %p141, %p142
      %p144 = scmp.ne.s32.totalorder %s133, %s136
      %p145 = scmp.eq.s32.totalorder %s50, 1
      %p146 = por %p144, %p145
      %p147 = scmp.ne.s32.totalorder %s136, %s137
      %p148 = scmp.eq.s32.totalorder %s50, 0
      %p149 = por %p147, %p148
      %p150 = scmp.ne.s32.totalorder %s136, %s137
      %p151 = scmp.eq.s32.totalorder %s51, 1
      %p152 = por %p150, %p151
      %p154 = scmp.ne.s32.totalorder %s137, %s153
      %p155 = scmp.eq.s32.totalorder %s51, 0
      %p156 = por %p154, %p155
      %s158 = sadd.s32 %s157, 1
      %p161 = scmp.eq.s32.totalorder %s45, 1
      %p162 = scmp.ne.s32.totalorder %s157, %s159
      %p163 = scmp.eq.s32.totalorder %s45, 0
      %p164 = por %p162, %p163
      %p165 = scmp.ne.s32.totalorder %s157, %s159
      %p166 = scmp.eq.s32.totalorder %s50, 1
      %p167 = por %p165, %p166
      %p168 = scmp.ne.s32.totalorder %s159, %s160
      %p169 = scmp.eq.s32.totalorder %s50, 0
      %p170 = por %p168, %p169
      %p171 = scmp.ne.s32.totalorder %s159, %s160
      %p172 = scmp.eq.s32.totalorder %s51, 1
      %p173 = por %p171, %p172
      %p175 = scmp.ne.s32.totalorder %s160, %s174
      %p176 = scmp.eq.s32.totalorder %s51, 0
      %p177 = por %p175, %p176
      %s179 = sadd.s32 %s178, 1
      %p182 = scmp.eq.s32.totalorder %s45, 1
      %p183 = scmp.ne.s32.totalorder %s178, %s180
      %p184 = scmp.eq.s32.totalorder %s45, 0
      %p185 = por %p183, %p184
      %p186 = scmp.ne.s32.totalorder %s178, %s180
      %p187 = scmp.eq.s32.totalorder %s50, 1
      %p188 = por %p186, %p187
      %p189 = scmp.ne.s32.totalorder %s180, %s181
      %p190 = scmp.eq.s32.totalorder %s50, 0
      %p191 = por %p189, %p190
      %p192 = scmp.ne.s32.totalorder %s180, %s181
      %p193 = scmp.eq.s32.totalorder %s51, 1
      %p194 = por %p192, %p193
      %p196 = scmp.ne.s32.totalorder %s181, %s195
      %p197 = scmp.eq.s32.totalorder %s51, 0
      %p198 = por %p196, %p197
      %s200 = sadd.s32 %s199, 1
      %p203 = scmp.eq.s32.totalorder %s45, 1
      %p204 = scmp.ne.s32.totalorder %s199, %s201
      %p205 = scmp.eq.s32.totalorder %s45, 0
      %p206 = por %p204, %p205
      %p207 = scmp.ne.s32.totalorder %s199, %s201
      %p208 = scmp.eq.s32.totalorder %s50, 1
      %p209 = por %p207, %p208
      %p210 = scmp.ne.s32.totalorder %s201, %s202
      %p211 = scmp.eq.s32.totalorder %s50, 0
      %p212 = por %p210, %p211
      %p213 = scmp.ne.s32.totalorder %s201, %s202
      %p214 = scmp.eq.s32.totalorder %s51, 1
      %p215 = por %p213, %p214
      %p217 = scmp.ne.s32.totalorder %s202, %s216
      %p218 = scmp.eq.s32.totalorder %s51, 0
      %p219 = por %p217, %p218
      %s221 = sadd.s32 %s220, 1
      %p224 = scmp.eq.s32.totalorder %s45, 1
      %p225 = scmp.ne.s32.totalorder %s220, %s222
      %p226 = scmp.eq.s32.totalorder %s45, 0
      %p227 = por %p225, %p226
      %p228 = scmp.ne.s32.totalorder %s220, %s222
      %p229 = scmp.eq.s32.totalorder %s50, 1
      %p230 = por %p228, %p229
      %p231 = scmp.ne.s32.totalorder %s222, %s223
      %p232 = scmp.eq.s32.totalorder %s50, 0
      %p233 = por %p231, %p232
      %p234 = scmp.ne.s32.totalorder %s222, %s223
      %p235 = scmp.eq.s32.totalorder %s51, 1
      %p236 = por %p234, %p235
      %p238 = scmp.ne.s32.totalorder %s223, %s237
      %p239 = scmp.eq.s32.totalorder %s51, 0
      %p240 = por %p238, %p239
      %s242 = sadd.s32 %s241, 1
      %p245 = scmp.eq.s32.totalorder %s45, 1
      %p246 = scmp.ne.s32.totalorder %s241, %s243
      %p247 = scmp.eq.s32.totalorder %s45, 0
      %p248 = por %p246, %p247
      %p249 = scmp.ne.s32.totalorder %s241, %s243
      %p250 = scmp.eq.s32.totalorder %s50, 1
      %p251 = por %p249, %p250
      %p252 = scmp.ne.s32.totalorder %s243, %s244
      %p253 = scmp.eq.s32.totalorder %s50, 0
      %p254 = por %p252, %p253
      %p255 = scmp.ne.s32.totalorder %s243, %s244
      %p256 = scmp.eq.s32.totalorder %s51, 1
      %p257 = por %p255, %p256
      %p259 = scmp.ne.s32.totalorder %s244, %s258
      %p260 = scmp.eq.s32.totalorder %s51, 0
      %p261 = por %p259, %p260
      %s263 = sadd.s32 %s262, 1
      %p266 = scmp.eq.s32.totalorder %s45, 1
      %p267 = scmp.ne.s32.totalorder %s262, %s264
      %p268 = scmp.eq.s32.totalorder %s45, 0
      %p269 = por %p267, %p268
      %p270 = scmp.ne.s32.totalorder %s262, %s264
      %p271 = scmp.eq.s32.totalorder %s50, 1
      %p272 = por %p270, %p271
      %p273 = scmp.ne.s32.totalorder %s264, %s265
      %p274 = scmp.eq.s32.totalorder %s50, 0
      %p275 = por %p273, %p274
      %p276 = scmp.ne.s32.totalorder %s264, %s265
      %p277 = scmp.eq.s32.totalorder %s51, 1
      %p278 = por %p276, %p277
      %p280 = scmp.ne.s32.totalorder %s265, %s279
      %p281 = scmp.eq.s32.totalorder %s51, 0
      %p282 = por %p280, %p281
      %s284 = sadd.s32 %s283, 1
      %p287 = scmp.eq.s32.totalorder %s45, 1
      %p288 = scmp.ne.s32.totalorder %s283, %s285
      %p289 = scmp.eq.s32.totalorder %s45, 0
      %p290 = por %p288, %p289
      %p291 = scmp.ne.s32.totalorder %s283, %s285
      %p292 = scmp.eq.s32.totalorder %s50, 1
      %p293 = por %p291, %p292
      %p294 = scmp.ne.s32.totalorder %s285, %s286
      %p295 = scmp.eq.s32.totalorder %s50, 0
      %p296 = por %p294, %p295
      %p297 = scmp.ne.s32.totalorder %s285, %s286
      %p298 = scmp.eq.s32.totalorder %s51, 1
      %p299 = por %p297, %p298
      %p301 = scmp.ne.s32.totalorder %s286, %s300
      %p302 = scmp.eq.s32.totalorder %s51, 0
      %p303 = por %p301, %p302
      %s305 = sadd.s32 %s304, 1
      %p308 = scmp.eq.s32.totalorder %s45, 1
      %p309 = scmp.ne.s32.totalorder %s304, %s306
      %p310 = scmp.eq.s32.totalorder %s45, 0
      %p311 = por %p309, %p310
      %p312 = scmp.ne.s32.totalorder %s304, %s306
      %p313 = scmp.eq.s32.totalorder %s50, 1
      %p314 = por %p312, %p313
      %p315 = scmp.ne.s32.totalorder %s306, %s307
      %p316 = scmp.eq.s32.totalorder %s50, 0
      %p317 = por %p315, %p316
      %p318 = scmp.ne.s32.totalorder %s306, %s307
      %p319 = scmp.eq.s32.totalorder %s51, 1
      %p320 = por %p318, %p319
      %p322 = scmp.ne.s32.totalorder %s307, %s321
      %p323 = scmp.eq.s32.totalorder %s51, 0
      %p324 = por %p322, %p323
      %s326 = sadd.s32 %s325, 1
      %p329 = scmp.eq.s32.totalorder %s45, 1
      %p330 = scmp.ne.s32.totalorder %s325, %s327
      %p331 = scmp.eq.s32.totalorder %s45, 0
      %p332 = por %p330, %p331
      %p333 = scmp.ne.s32.totalorder %s325, %s327
      %p334 = scmp.eq.s32.totalorder %s50, 1
      %p335 = por %p333, %p334
      %p336 = scmp.ne.s32.totalorder %s327, %s328
      %p337 = scmp.eq.s32.totalorder %s50, 0
      %p338 = por %p336, %p337
      %p339 = scmp.ne.s32.totalorder %s327, %s328
      %p340 = scmp.eq.s32.totalorder %s51, 1
      %p341 = por %p339, %p340
      %p343 = scmp.ne.s32.totalorder %s328, %s342
      %p344 = scmp.eq.s32.totalorder %s51, 0
      %p345 = por %p343, %p344
      %s347 = sadd.s32 %s346, 1
      %p350 = scmp.eq.s32.totalorder %s45, 1
      %p351 = scmp.ne.s32.totalorder %s346, %s348
      %p352 = scmp.eq.s32.totalorder %s45, 0
      %p353 = por %p351, %p352
      %p354 = scmp.ne.s32.totalorder %s346, %s348
      %p355 = scmp.eq.s32.totalorder %s50, 1
      %p356 = por %p354, %p355
      %p357 = scmp.ne.s32.totalorder %s348, %s349
      %p358 = scmp.eq.s32.totalorder %s50, 0
      %p359 = por %p357, %p358
      %p360 = scmp.ne.s32.totalorder %s348, %s349
      %p361 = scmp.eq.s32.totalorder %s51, 1
      %p362 = por %p360, %p361
      %p364 = scmp.ne.s32.totalorder %s349, %s363
      %p365 = scmp.eq.s32.totalorder %s51, 0
      %p366 = por %p364, %p365
      %s368 = sadd.s32 %s367, 1
      %p371 = scmp.eq.s32.totalorder %s45, 1
      %p372 = scmp.ne.s32.totalorder %s367, %s369
      %p373 = scmp.eq.s32.totalorder %s45, 0
      %p374 = por %p372, %p373
      %p375 = scmp.ne.s32.totalorder %s367, %s369
      %p376 = scmp.eq.s32.totalorder %s50, 1
      %p377 = por %p375, %p376
      %p378 = scmp.ne.s32.totalorder %s369, %s370
      %p379 = scmp.eq.s32.totalorder %s50, 0
      %p380 = por %p378, %p379
      %p381 = scmp.ne.s32.totalorder %s369, %s370
      %p382 = scmp.eq.s32.totalorder %s51, 1
      %p383 = por %p381, %p382
      %p385 = scmp.ne.s32.totalorder %s370, %s384
      %p386 = scmp.eq.s32.totalorder %s51, 0
      %p387 = por %p385, %p386
      %s389 = sadd.s32 %s388, 1
      %p392 = scmp.eq.s32.totalorder %s45, 1
      %p393 = scmp.ne.s32.totalorder %s388, %s390
      %p394 = scmp.eq.s32.totalorder %s45, 0
      %p395 = por %p393, %p394
      %p396 = scmp.ne.s32.totalorder %s388, %s390
      %p397 = scmp.eq.s32.totalorder %s50, 1
      %p398 = por %p396, %p397
      %p399 = scmp.ne.s32.totalorder %s390, %s391
      %p400 = scmp.eq.s32.totalorder %s50, 0
      %p401 = por %p399, %p400
      %p402 = scmp.ne.s32.totalorder %s390, %s391
      %p403 = scmp.eq.s32.totalorder %s51, 1
      %p404 = por %p402, %p403
      %p406 = scmp.ne.s32.totalorder %s391, %s405
      %p407 = scmp.eq.s32.totalorder %s51, 0
      %p408 = por %p406, %p407
      %s410 = sadd.s32 %s409, 1
      %p413 = scmp.eq.s32.totalorder %s45, 1
      %p414 = scmp.ne.s32.totalorder %s409, %s411
      %p415 = scmp.eq.s32.totalorder %s45, 0
      %p416 = por %p414, %p415
      %p417 = scmp.ne.s32.totalorder %s409, %s411
      %p418 = scmp.eq.s32.totalorder %s50, 1
      %p419 = por %p417, %p418
      %p420 = scmp.ne.s32.totalorder %s411, %s412
      %p421 = scmp.eq.s32.totalorder %s50, 0
      %p422 = por %p420, %p421
      %p423 = scmp.ne.s32.totalorder %s411, %s412
      %p424 = scmp.eq.s32.totalorder %s51, 1
      %p425 = por %p423, %p424
      %p427 = scmp.ne.s32.totalorder %s412, %s426
      %p428 = scmp.eq.s32.totalorder %s51, 0
      %p429 = por %p427, %p428
      %s431 = sadd.s32 %s430, 1
      %p434 = scmp.eq.s32.totalorder %s45, 1
      %p435 = scmp.ne.s32.totalorder %s430, %s432
      %p436 = scmp.eq.s32.totalorder %s45, 0
      %p437 = por %p435, %p436
      %p438 = scmp.ne.s32.totalorder %s430, %s432
      %p439 = scmp.eq.s32.totalorder %s50, 1
      %p440 = por %p438, %p439
      %p441 = scmp.ne.s32.totalorder %s432, %s433
      %p442 = scmp.eq.s32.totalorder %s50, 0
      %p443 = por %p441, %p442
      %p444 = scmp.ne.s32.totalorder %s432, %s433
      %p445 = scmp.eq.s32.totalorder %s51, 1
      %p446 = por %p444, %p445
      %p448 = scmp.ne.s32.totalorder %s433, %s447
      %p449 = scmp.eq.s32.totalorder %s51, 0
      %p450 = por %p448, %p449
      %s452 = sadd.s32 %s451, 1
      %p455 = scmp.eq.s32.totalorder %s45, 1
      %p456 = scmp.ne.s32.totalorder %s451, %s453
      %p457 = scmp.eq.s32.totalorder %s45, 0
      %p458 = por %p456, %p457
      %p459 = scmp.ne.s32.totalorder %s451, %s453
      %p460 = scmp.eq.s32.totalorder %s50, 1
      %p461 = por %p459, %p460
      %p462 = scmp.ne.s32.totalorder %s453, %s454
      %p463 = scmp.eq.s32.totalorder %s50, 0
      %p464 = por %p462, %p463
      %p465 = scmp.ne.s32.totalorder %s453, %s454
      %p466 = scmp.eq.s32.totalorder %s51, 1
      %p467 = por %p465, %p466
      %p469 = scmp.ne.s32.totalorder %s454, %s468
      %p470 = scmp.eq.s32.totalorder %s51, 0
      %p471 = por %p469, %p470
      %s473 = sadd.s32 %s472, 1
      %p476 = scmp.eq.s32.totalorder %s45, 1
      %p477 = scmp.ne.s32.totalorder %s472, %s474
      %p478 = scmp.eq.s32.totalorder %s45, 0
      %p479 = por %p477, %p478
      %p480 = scmp.ne.s32.totalorder %s472, %s474
      %p481 = scmp.eq.s32.totalorder %s50, 1
      %p482 = por %p480, %p481
      %p483 = scmp.ne.s32.totalorder %s474, %s475
      %p484 = scmp.eq.s32.totalorder %s50, 0
      %p485 = por %p483, %p484
      %p486 = scmp.ne.s32.totalorder %s474, %s475
      %p487 = scmp.eq.s32.totalorder %s51, 1
      %p488 = por %p486, %p487
      %p490 = scmp.ne.s32.totalorder %s475, %s489
      %p491 = scmp.eq.s32.totalorder %s51, 0
      %p492 = por %p490, %p491
      %s493 = ssub.s32 %s45, %s52
      %p494 = scmp.eq.s32.totalorder %s493, 0
      %s496 = sadd.s32 %s495, 1
      %s497 = scalar_select %p494, %s495, %s496
      %p500 = pneg %p494
      %p501 = scmp.eq.s32.totalorder %s45, 1
      %p502 = por %p500, %p501
      %p503 = scmp.ne.s32.totalorder %s495, %s498
      %p504 = scmp.eq.s32.totalorder %s45, 0
      %p505 = por %p503, %p504
      %p506 = scmp.ne.s32.totalorder %s495, %s498
      %p507 = scmp.eq.s32.totalorder %s50, 1
      %p508 = por %p506, %p507
      %p509 = scmp.ne.s32.totalorder %s498, %s499
      %p510 = scmp.eq.s32.totalorder %s50, 0
      %p511 = por %p509, %p510
      %p512 = scmp.ne.s32.totalorder %s498, %s499
      %p513 = scmp.eq.s32.totalorder %s51, 1
      %p514 = por %p512, %p513
      %p516 = scmp.ne.s32.totalorder %s499, %s515
      %p517 = scmp.eq.s32.totalorder %s51, 0
      %p518 = por %p516, %p517
      %s519 = ssub.s32 %s45, %s52
      %p520 = scmp.eq.s32.totalorder %s519, 0
      %s522 = sadd.s32 %s521, 1
      %s523 = scalar_select %p520, %s521, %s522
      %p526 = pneg %p520
      %p527 = scmp.eq.s32.totalorder %s45, 1
      %p528 = por %p526, %p527
      %p529 = scmp.ne.s32.totalorder %s521, %s524
      %p530 = scmp.eq.s32.totalorder %s45, 0
      %p531 = por %p529, %p530
      %p532 = scmp.ne.s32.totalorder %s521, %s524
      %p533 = scmp.eq.s32.totalorder %s50, 1
      %p534 = por %p532, %p533
      %p535 = scmp.ne.s32.totalorder %s524, %s525
      %p536 = scmp.eq.s32.totalorder %s50, 0
      %p537 = por %p535, %p536
      %p538 = scmp.ne.s32.totalorder %s524, %s525
      %p539 = scmp.eq.s32.totalorder %s51, 1
      %p540 = por %p538, %p539
      %p542 = scmp.ne.s32.totalorder %s525, %s541
      %p543 = scmp.eq.s32.totalorder %s51, 0
      %p544 = por %p542, %p543
      %p545 = scmp.le.s32.totalorder 1, %s45
      %p546 = scmp.lt.s32.totalorder %s45, 3
      %p547 = pnand %p545, %p546
      %p548 = pneg %p547
      // Predicated region
      $region9: #{tpu_custom_call.1} parent=5 // pred_check
        _
      $region10: #{tpu_custom_call.1} parent=5 // pred_check_branch
        %550 = sbr.rel (%p547) target = $region12
      $region11: #{tpu_custom_call.1} parent=5 // pred_region
        %s551 = ssub.s32 %s45, 1
        // Predicated region
        $region13: #{tpu_custom_call.1} parent=11 // pred_check
          %p552 = pneg %p170
        $region14: #{tpu_custom_call.1} parent=11 // pred_check_branch
          %554 = sbr.rel (%p552) target = $region16
        $region15: #{tpu_custom_call.1} parent=11 // pred_region
          %s556 = ssub.s32 16, 16
          %557 = vsyncadd [#allocation6], %s556
          %s559 = sshll.u32 [#allocation7], 4
          %s560 = int_to_ptr.vmem [resolvable:$true] %s559
          %562 = dma.hbm_to_vmem [thread:$0]  %s4, 16, %s560, [#allocation6]
        $region16: #{tpu_custom_call.1} parent=11 // pred_fallthru
          _
        // Predicated region
        $region17: #{tpu_custom_call.1} parent=11 // pred_check
          %p563 = pneg %p191
        $region18: #{tpu_custom_call.1} parent=11 // pred_check_branch
          %565 = sbr.rel (%p563) target = $region20
        $region19: #{tpu_custom_call.1} parent=11 // pred_region
          %s567 = ssub.s32 16, 16
          %568 = vsyncadd [#allocation9], %s567
          %s570 = sshll.u32 [#allocation8], 4
          %s571 = int_to_ptr.vmem [resolvable:$true] %s570
          %573 = dma.hbm_to_vmem [thread:$0]  %s5, 16, %s571, [#allocation9]
        $region20: #{tpu_custom_call.1} parent=11 // pred_fallthru
          _
        // Predicated region
        $region21: #{tpu_custom_call.1} parent=11 // pred_check
          %p574 = pneg %p212
        $region22: #{tpu_custom_call.1} parent=11 // pred_check_branch
          %576 = sbr.rel (%p574) target = $region24
        $region23: #{tpu_custom_call.1} parent=11 // pred_region
          _
        $region24: #{tpu_custom_call.1} parent=11 // pred_fallthru
          _
        // Predicated region
        $region25: #{tpu_custom_call.1} parent=11 // pred_check
          %p577 = pneg %p233
        $region26: #{tpu_custom_call.1} parent=11 // pred_check_branch
          %579 = sbr.rel (%p577) target = $region28
        $region27: #{tpu_custom_call.1} parent=11 // pred_region
          %s581 = ssub.s32 16, 16
          %582 = vsyncadd [#allocation9], %s581
          %s584 = sshll.u32 [#allocation10], 4
          %s585 = int_to_ptr.vmem [resolvable:$true] %s584
          %587 = dma.hbm_to_vmem [thread:$0]  %s7, 16, %s585, [#allocation9]
        $region28: #{tpu_custom_call.1} parent=11 // pred_fallthru
          _
        // Predicated region
        $region29: #{tpu_custom_call.1} parent=11 // pred_check
          %p588 = pneg %p254
        $region30: #{tpu_custom_call.1} parent=11 // pred_check_branch
          %590 = sbr.rel (%p588) target = $region32
        $region31: #{tpu_custom_call.1} parent=11 // pred_region
          _
        $region32: #{tpu_custom_call.1} parent=11 // pred_fallthru
          _
        // Predicated region
        $region33: #{tpu_custom_call.1} parent=11 // pred_check
          %p591 = pneg %p275
        $region34: #{tpu_custom_call.1} parent=11 // pred_check_branch
          %593 = sbr.rel (%p591) target = $region36
        $region35: #{tpu_custom_call.1} parent=11 // pred_region
          %s595 = ssub.s32 16, 16
          %596 = vsyncadd [#allocation12], %s595
          %s598 = sshll.u32 [#allocation11], 4
          %s599 = int_to_ptr.vmem [resolvable:$true] %s598
          %601 = dma.hbm_to_vmem [thread:$0]  %s9, 16, %s599, [#allocation12]
        $region36: #{tpu_custom_call.1} parent=11 // pred_fallthru
          _
        // Predicated region
        $region37: #{tpu_custom_call.1} parent=11 // pred_check
          %p602 = pneg %p296
        $region38: #{tpu_custom_call.1} parent=11 // pred_check_branch
          %604 = sbr.rel (%p602) target = $region40
        $region39: #{tpu_custom_call.1} parent=11 // pred_region
          %s606 = ssub.s32 256, 256
          %607 = vsyncadd [#allocation12], %s606
          %s608 = sshll.u32 [#allocation13], 4
          %s609 = int_to_ptr.vmem [resolvable:$true] %s608
          %614 = dma.hbm_to_vmem [thread:$0]  %s10, 256, %s609, [#allocation12], 64, 64, 4
        $region40: #{tpu_custom_call.1} parent=11 // pred_fallthru
          _
        // Predicated region
        $region41: #{tpu_custom_call.1} parent=11 // pred_check
          %p615 = pneg %p317
        $region42: #{tpu_custom_call.1} parent=11 // pred_check_branch
          %617 = sbr.rel (%p615) target = $region44
        $region43: #{tpu_custom_call.1} parent=11 // pred_region
          %s619 = ssub.s32 16, 16
          %620 = vsyncadd [#allocation15], %s619
          %s622 = sshll.u32 [#allocation14], 4
          %s623 = int_to_ptr.vmem [resolvable:$true] %s622
          %625 = dma.hbm_to_vmem [thread:$0]  %s11, 16, %s623, [#allocation15]
        $region44: #{tpu_custom_call.1} parent=11 // pred_fallthru
          _
        // Predicated region
        $region45: #{tpu_custom_call.1} parent=11 // pred_check
          %p626 = pneg %p338
        $region46: #{tpu_custom_call.1} parent=11 // pred_check_branch
          %628 = sbr.rel (%p626) target = $region48
        $region47: #{tpu_custom_call.1} parent=11 // pred_region
          _
        $region48: #{tpu_custom_call.1} parent=11 // pred_fallthru
          _
        // Predicated region
        $region49: #{tpu_custom_call.1} parent=11 // pred_check
          %p629 = pneg %p359
        $region50: #{tpu_custom_call.1} parent=11 // pred_check_branch
          %631 = sbr.rel (%p629) target = $region52
        $region51: #{tpu_custom_call.1} parent=11 // pred_region
          %s633 = ssub.s32 16, 16
          %634 = vsyncadd [#allocation15], %s633
          %s636 = sshll.u32 [#allocation16], 4
          %s637 = int_to_ptr.vmem [resolvable:$true] %s636
          %639 = dma.hbm_to_vmem [thread:$0]  %s13, 16, %s637, [#allocation15]
        $region52: #{tpu_custom_call.1} parent=11 // pred_fallthru
          _
        // Predicated region
        $region53: #{tpu_custom_call.1} parent=11 // pred_check
          %p640 = pneg %p380
        $region54: #{tpu_custom_call.1} parent=11 // pred_check_branch
          %642 = sbr.rel (%p640) target = $region56
        $region55: #{tpu_custom_call.1} parent=11 // pred_region
          %s644 = ssub.s32 256, 256
          %645 = vsyncadd [#allocation18], %s644
          %s646 = sshll.u32 [#allocation17], 4
          %s647 = int_to_ptr.vmem [resolvable:$true] %s646
          %652 = dma.hbm_to_vmem [thread:$0]  %s14, 256, %s647, [#allocation18], 64, 64, 4
        $region56: #{tpu_custom_call.1} parent=11 // pred_fallthru
          _
        // Predicated region
        $region57: #{tpu_custom_call.1} parent=11 // pred_check
          %p653 = pneg %p401
        $region58: #{tpu_custom_call.1} parent=11 // pred_check_branch
          %655 = sbr.rel (%p653) target = $region60
        $region59: #{tpu_custom_call.1} parent=11 // pred_region
          %s657 = ssub.s32 16, 16
          %658 = vsyncadd [#allocation18], %s657
          %s660 = sshll.u32 [#allocation19], 4
          %s661 = int_to_ptr.vmem [resolvable:$true] %s660
          %663 = dma.hbm_to_vmem [thread:$0]  %s15, 16, %s661, [#allocation18]
        $region60: #{tpu_custom_call.1} parent=11 // pred_fallthru
          _
        // Predicated region
        $region61: #{tpu_custom_call.1} parent=11 // pred_check
          %p664 = pneg %p422
        $region62: #{tpu_custom_call.1} parent=11 // pred_check_branch
          %666 = sbr.rel (%p664) target = $region64
        $region63: #{tpu_custom_call.1} parent=11 // pred_region
          _
        $region64: #{tpu_custom_call.1} parent=11 // pred_fallthru
          _
        // Predicated region
        $region65: #{tpu_custom_call.1} parent=11 // pred_check
          %p667 = pneg %p443
        $region66: #{tpu_custom_call.1} parent=11 // pred_check_branch
          %669 = sbr.rel (%p667) target = $region68
        $region67: #{tpu_custom_call.1} parent=11 // pred_region
          _
        $region68: #{tpu_custom_call.1} parent=11 // pred_fallthru
          _
        // Predicated region
        $region69: #{tpu_custom_call.1} parent=11 // pred_check
          %p670 = pneg %p464
        $region70: #{tpu_custom_call.1} parent=11 // pred_check_branch
          %672 = sbr.rel (%p670) target = $region72
        $region71: #{tpu_custom_call.1} parent=11 // pred_region
          %s674 = ssub.s32 256, 256
          %675 = vsyncadd [#allocation21], %s674
          %s676 = sshll.u32 [#allocation20], 4
          %s677 = int_to_ptr.vmem [resolvable:$true] %s676
          %682 = dma.hbm_to_vmem [thread:$0]  %s18, 256, %s677, [#allocation21], 64, 64, 4
        $region72: #{tpu_custom_call.1} parent=11 // pred_fallthru
          _
        // Predicated region
        $region73: #{tpu_custom_call.1} parent=11 // pred_check
          %p683 = pneg %p485
        $region74: #{tpu_custom_call.1} parent=11 // pred_check_branch
          %685 = sbr.rel (%p683) target = $region76
        $region75: #{tpu_custom_call.1} parent=11 // pred_region
          _
        $region76: #{tpu_custom_call.1} parent=11 // pred_fallthru
          _
      $region12: #{tpu_custom_call.1} parent=5 // pred_fallthru
        _
      %p686 = scmp.lt.s32.totalorder %s45, 2
      // Predicated region
      $region77: #{tpu_custom_call.1} parent=5 // pred_check
        %p687 = pneg %p686
      $region78: #{tpu_custom_call.1} parent=5 // pred_check_branch
        %689 = sbr.rel (%p687) target = $region80
      $region79: #{tpu_custom_call.1} parent=5 // pred_region
        // Predicated region
        $region81: #{tpu_custom_call.1} parent=79 // pred_check
          %p690 = pneg %p65
        $region82: #{tpu_custom_call.1} parent=79 // pred_check_branch
          %692 = sbr.rel (%p690) target = $region84
        $region83: #{tpu_custom_call.1} parent=79 // pred_region
          %s693 = smul.u32 2, %s45
          %p694 = scmp.lt.s32.totalorder %s693, 3
          %s695 = scalar_select %p694, %s693, 3
          %s696 = smul.addr %s695, 8
          %s697 = scalar_lea.vmem %s0, %s696
          %s698 = smul.u32 2, %s45
        $region84: #{tpu_custom_call.1} parent=79 // pred_fallthru
          _
        // Predicated region
        $region85: #{tpu_custom_call.1} parent=79 // pred_check
          %p699 = pneg %p91
        $region86: #{tpu_custom_call.1} parent=79 // pred_check_branch
          %701 = sbr.rel (%p699) target = $region88
        $region87: #{tpu_custom_call.1} parent=79 // pred_region
          %s702 = sand.u32 %s81, 1
          %s703 = scalar_lea.sflag [#allocation3], %s702
          %s704 = sand.u32 %s81, 1
          %s705 = smul.addr %s704, 8
          %s706 = scalar_lea.vmem [#allocation2], %s705
          %s707 = smul.u32 2, %s45
          %s709 = ssub.s32 128, 128
          %710 = vsyncadd %s703, %s709
          %s711 = smul.addr %s707, 64
          %s712 = scalar_lea.hbm %s1, %s711
          %s713 = sshll.u32 %s706, 4
          %s714 = int_to_ptr.vmem [resolvable:$true] %s713
          %719 = dma.hbm_to_vmem [thread:$0]  %s712, 128, %s714, %s703, 64, 64, 4
        $region88: #{tpu_custom_call.1} parent=79 // pred_fallthru
          _
        // Predicated region
        $region89: #{tpu_custom_call.1} parent=79 // pred_check
          %p720 = pneg %p117
        $region90: #{tpu_custom_call.1} parent=79 // pred_check_branch
          %722 = sbr.rel (%p720) target = $region92
        $region91: #{tpu_custom_call.1} parent=79 // pred_region
          %s723 = sand.u32 %s45, 1
          %s724 = scalar_lea.sflag [#allocation6], %s723
          %s725 = sand.u32 %s107, 1
          %s726 = smul.addr %s725, 2
          %s727 = scalar_lea.vmem [#allocation5], %s726
          %s728 = smul.u32 2, %s45
          %s730 = ssub.s32 32, 32
          %731 = vsyncadd %s724, %s730
          %s732 = smul.addr %s728, 16
          %s733 = scalar_lea.hbm %s2, %s732
          %s734 = sshll.u32 %s727, 4
          %s735 = int_to_ptr.vmem [resolvable:$true] %s734
          %740 = dma.hbm_to_vmem [thread:$0]  %s733, 32, %s735, %s724, 16, 16, 1
        $region92: #{tpu_custom_call.1} parent=79 // pred_fallthru
          _
        // Predicated region
        $region93: #{tpu_custom_call.1} parent=79 // pred_check
          %p741 = pneg %p143
        $region94: #{tpu_custom_call.1} parent=79 // pred_check_branch
          %743 = sbr.rel (%p741) target = $region96
        $region95: #{tpu_custom_call.1} parent=79 // pred_region
          %s744 = smul.u32 2, %s45
          %p745 = scmp.lt.s32.totalorder %s744, 3
          %s746 = scalar_select %p745, %s744, 3
          %s747 = smul.addr %s746, 8
          %s748 = scalar_lea.vmem %s3, %s747
          %s749 = smul.u32 2, %s45
        $region96: #{tpu_custom_call.1} parent=79 // pred_fallthru
          _
      $region80: #{tpu_custom_call.1} parent=5 // pred_fallthru
        _
      %p750 = scmp.le.s32.totalorder 1, %s45
      %p751 = scmp.lt.s32.totalorder %s45, 3
      %p752 = pnand %p750, %p751
      %p753 = pneg %p752
      // Predicated region
      $region97: #{tpu_custom_call.1} parent=5 // pred_check
        _
      $region98: #{tpu_custom_call.1} parent=5 // pred_check_branch
        %755 = sbr.rel (%p752) target = $region100
      $region99: #{tpu_custom_call.1} parent=5 // pred_region
        %s756 = ssub.s32 %s45, 1
        %s757 = sand.u32 %s84, 1
        %s758 = scalar_lea.sflag [#allocation3], %s757
        %s759 = sand.u32 %s84, 1
        %s760 = smul.addr %s759, 8
        %s761 = scalar_lea.vmem [#allocation2], %s760
        // Predicated region
        $region101: #{tpu_custom_call.1} parent=99 // pred_check
          %p762 = pneg %p97
        $region102: #{tpu_custom_call.1} parent=99 // pred_check_branch
          %764 = sbr.rel (%p762) target = $region104
        $region103: #{tpu_custom_call.1} parent=99 // pred_region
          %765 = dma.done %s758, 128
        $region104: #{tpu_custom_call.1} parent=99 // pred_fallthru
          _
        %s766 = sand.u32 %s50, 1
        %s767 = scalar_lea.sflag [#allocation6], %s766
        %s768 = sand.u32 %s110, 1
        %s769 = smul.addr %s768, 2
        %s770 = scalar_lea.vmem [#allocation5], %s769
        // Predicated region
        $region105: #{tpu_custom_call.1} parent=99 // pred_check
          %p771 = pneg %p123
        $region106: #{tpu_custom_call.1} parent=99 // pred_check_branch
          %773 = sbr.rel (%p771) target = $region108
        $region107: #{tpu_custom_call.1} parent=99 // pred_region
          %774 = dma.done %s767, 32
        $region108: #{tpu_custom_call.1} parent=99 // pred_fallthru
          _
        // Predicated region
        $region109: #{tpu_custom_call.1} parent=99 // pred_check
          %p775 = pneg %p170
        $region110: #{tpu_custom_call.1} parent=99 // pred_check_branch
          %777 = sbr.rel (%p775) target = $region112
        $region111: #{tpu_custom_call.1} parent=99 // pred_region
          %778 = dma.done [#allocation6], 16
        $region112: #{tpu_custom_call.1} parent=99 // pred_fallthru
          _
        // Predicated region
        $region113: #{tpu_custom_call.1} parent=99 // pred_check
          %p779 = pneg %p191
        $region114: #{tpu_custom_call.1} parent=99 // pred_check_branch
          %781 = sbr.rel (%p779) target = $region116
        $region115: #{tpu_custom_call.1} parent=99 // pred_region
          %782 = dma.done [#allocation9], 16
        $region116: #{tpu_custom_call.1} parent=99 // pred_fallthru
          _
        // Predicated region
        $region117: #{tpu_custom_call.1} parent=99 // pred_check
          %p783 = pneg %p233
        $region118: #{tpu_custom_call.1} parent=99 // pred_check_branch
          %785 = sbr.rel (%p783) target = $region120
        $region119: #{tpu_custom_call.1} parent=99 // pred_region
          %786 = dma.done [#allocation9], 16
        $region120: #{tpu_custom_call.1} parent=99 // pred_fallthru
          _
        // Predicated region
        $region121: #{tpu_custom_call.1} parent=99 // pred_check
          %p787 = pneg %p275
        $region122: #{tpu_custom_call.1} parent=99 // pred_check_branch
          %789 = sbr.rel (%p787) target = $region124
        $region123: #{tpu_custom_call.1} parent=99 // pred_region
          %790 = dma.done [#allocation12], 16
        $region124: #{tpu_custom_call.1} parent=99 // pred_fallthru
          _
        // Predicated region
        $region125: #{tpu_custom_call.1} parent=99 // pred_check
          %p791 = pneg %p296
        $region126: #{tpu_custom_call.1} parent=99 // pred_check_branch
          %793 = sbr.rel (%p791) target = $region128
        $region127: #{tpu_custom_call.1} parent=99 // pred_region
          %794 = dma.done [#allocation12], 256
        $region128: #{tpu_custom_call.1} parent=99 // pred_fallthru
          _
        // Predicated region
        $region129: #{tpu_custom_call.1} parent=99 // pred_check
          %p795 = pneg %p317
        $region130: #{tpu_custom_call.1} parent=99 // pred_check_branch
          %797 = sbr.rel (%p795) target = $region132
        $region131: #{tpu_custom_call.1} parent=99 // pred_region
          %798 = dma.done [#allocation15], 16
        $region132: #{tpu_custom_call.1} parent=99 // pred_fallthru
          _
        // Predicated region
        $region133: #{tpu_custom_call.1} parent=99 // pred_check
          %p799 = pneg %p359
        $region134: #{tpu_custom_call.1} parent=99 // pred_check_branch
          %801 = sbr.rel (%p799) target = $region136
        $region135: #{tpu_custom_call.1} parent=99 // pred_region
          %802 = dma.done [#allocation15], 16
        $region136: #{tpu_custom_call.1} parent=99 // pred_fallthru
          _
        // Predicated region
        $region137: #{tpu_custom_call.1} parent=99 // pred_check
          %p803 = pneg %p380
        $region138: #{tpu_custom_call.1} parent=99 // pred_check_branch
          %805 = sbr.rel (%p803) target = $region140
        $region139: #{tpu_custom_call.1} parent=99 // pred_region
          %806 = dma.done [#allocation18], 256
        $region140: #{tpu_custom_call.1} parent=99 // pred_fallthru
          _
        // Predicated region
        $region141: #{tpu_custom_call.1} parent=99 // pred_check
          %p807 = pneg %p401
        $region142: #{tpu_custom_call.1} parent=99 // pred_check_branch
          %809 = sbr.rel (%p807) target = $region144
        $region143: #{tpu_custom_call.1} parent=99 // pred_region
          %810 = dma.done [#allocation18], 16
        $region144: #{tpu_custom_call.1} parent=99 // pred_fallthru
          _
        // Predicated region
        $region145: #{tpu_custom_call.1} parent=99 // pred_check
          %p811 = pneg %p464
        $region146: #{tpu_custom_call.1} parent=99 // pred_check_branch
          %813 = sbr.rel (%p811) target = $region148
        $region147: #{tpu_custom_call.1} parent=99 // pred_region
          %814 = dma.done [#allocation21], 256
        $region148: #{tpu_custom_call.1} parent=99 // pred_fallthru
          _
        %s815 = smul.u32 2, %s50
        %p816 = scmp.lt.s32.totalorder %s815, 3
        %s817 = scalar_select %p816, %s815, 3
        %s818 = smul.addr %s817, 8
        %s819 = scalar_lea.vmem %s0, %s818
        %p820 = pneg %p71
        %p821 = pneg %p68
        %s822 = sand.u32 %s84, 1
        %s823 = scalar_lea.sflag [#allocation3], %s822
        %s824 = sand.u32 %s84, 1
        %s825 = smul.addr %s824, 8
        %s826 = scalar_lea.vmem [#allocation2], %s825
        %p827 = pneg %p97
        %p828 = pneg %p94
        %s829 = sand.u32 %s50, 1
        %s830 = scalar_lea.sflag [#allocation6], %s829
        %s831 = sand.u32 %s110, 1
        %s832 = smul.addr %s831, 2
        %s833 = scalar_lea.vmem [#allocation5], %s832
        %p834 = pneg %p123
        %p835 = pneg %p120
        %s836 = smul.u32 2, %s50
        %p837 = scmp.lt.s32.totalorder %s836, 3
        %s838 = scalar_select %p837, %s836, 3
        %s839 = smul.addr %s838, 8
        %s840 = scalar_lea.vmem %s3, %s839
        %p841 = pneg %p149
        %p842 = pneg %p146
        %p843 = pneg %p170
        %p844 = pneg %p167
        %p845 = pneg %p191
        %p846 = pneg %p188
        %p847 = pneg %p212
        %p848 = pneg %p209
        %p849 = pneg %p233
        %p850 = pneg %p230
        %p851 = pneg %p254
        %p852 = pneg %p251
        %p853 = pneg %p275
        %p854 = pneg %p272
        %p855 = pneg %p296
        %p856 = pneg %p293
        %p857 = pneg %p317
        %p858 = pneg %p314
        %p859 = pneg %p338
        %p860 = pneg %p335
        %p861 = pneg %p359
        %p862 = pneg %p356
        %p863 = pneg %p380
        %p864 = pneg %p377
        %p865 = pneg %p401
        %p866 = pneg %p398
        %p867 = pneg %p422
        %p868 = pneg %p419
        %p869 = pneg %p443
        %p870 = pneg %p440
        %p871 = pneg %p464
        %p872 = pneg %p461
        %p873 = pneg %p485
        %p874 = pneg %p482
        %p875 = pneg %p511
        %p876 = pneg %p508
        %s877 = sand.u32 %s498, 1
        %s878 = scalar_lea.sflag [#allocation4], %s877
        %s879 = sand.u32 %s498, 1
        %s880 = smul.addr %s879, 16
        %s881 = scalar_lea.vmem [#allocation22], %s880
        %p882 = pneg %p537
        %p883 = pneg %p534
        %s884 = sand.u32 %s524, 1
        %s885 = scalar_lea.sflag [#allocation24], %s884
        %s886 = sand.u32 %s524, 1
        %s887 = smul.addr %s886, 2
        %s888 = scalar_lea.vmem [#allocation23], %s887
        %s889 = smul.u32 2, %s50
        %p890 = scmp.lt.s32.totalorder %s889, 3
        %s891 = scalar_select %p890, %s889, 3
        %s892 = smul.addr %s891, 8
        %s893 = scalar_lea.vmem %s0, %s892
        %s894 = smul.u32 2, %s50
        %s895 = smul.u32 2, %s50
        %s896 = smul.u32 2, %s50
        %s897 = smul.u32 2, %s50
        %p898 = scmp.lt.s32.totalorder %s897, 3
        %s899 = scalar_select %p898, %s897, 3
        %s900 = smul.addr %s899, 8
        %s901 = scalar_lea.vmem %s3, %s900
        %s902 = smul.u32 2, %s50
        %s903 = smul.u32 2, %s50
        %s904 = smul.u32 2, %s50
        %v906 = vld [vmem:[%s893] sm:$0xff]
        %v907 = vld [vmem:[%s893 + $0x8] sm:$0xff]
        %v908 = vld [vmem:[%s761] sm:$0xf]
        %v909 = vld [vmem:[%s761 + $0x4] sm:$0xf]
        %v910 = vld [vmem:[%s770] sm:$0x1]
        %v911 = vld [vmem:[%s770 + $0x1] sm:$0x1]
        %v912 = vld [vmem:[%s901] sm:$0xff]
        %v913 = vld [vmem:[%s901 + $0x8] sm:$0xff]
        %v914 = vlaneseq
        %v915 = vshrl.u32 %v914, 7
        %vm916 = vcmask 261120
        %v917 = vsel %vm916, %v906, 0.0
        %918 = vadd.xlane.f32.xlu0 %v917
        %v919 = vpop.xlane.xlu0 %918
        %v920 = vsel %vm916, %v907, 0.0
        %921 = vadd.xlane.f32.xlu0 %v920
        %v922 = vpop.xlane.xlu0 %921
        %v923 = vrcp.pop 32.0
        %v924 = vmul.f32 %v919, %v923
        %v925 = vmul.f32 %v922, %v923
        %v926 = vsub.f32 %v906, %v924
        %v927 = vsub.f32 %v907, %v925
        %v928 = vmul.f32 %v926, %v926
        %v929 = vmul.f32 %v927, %v927
        %v930 = vsel %vm916, %v928, 0.0
        %931 = vadd.xlane.f32.xlu0 %v930
        %v932 = vpop.xlane.xlu0 %931
        %v933 = vsel %vm916, %v929, 0.0
        %934 = vadd.xlane.f32.xlu0 %v933
        %v935 = vpop.xlane.xlu0 %934
        %v936 = vmul.f32 %v932, %v923
        %v937 = vmul.f32 %v935, %v923
        %v938 = vadd.f32 %v936, 1e-05
        %v939 = vadd.f32 %v937, 1e-05
        %v940 = vrsqrt.pop %v938
        %v941 = vrsqrt.pop %v939
        %v942 = vmul.f32 %v926, %v940
        %v943 = vmul.f32 %v927, %v941
        %v944 = vld [vmem:[#allocation7] sm:$0x1]
        %v946 = vlaneseq
        %v947 = vshrl.u32 %v946, 7
        %v948 = vsub.s32 0, %v947
        %v949 = vrot.slane %v944, %v948
        %v951 = vmul.f32 %v942, %v949
        %v952 = vmul.f32 %v943, %v949
        %v953 = vld [vmem:[#allocation8] sm:$0x1]
        %v955 = vlaneseq
        %v956 = vshrl.u32 %v955, 7
        %v957 = vsub.s32 0, %v956
        %v958 = vrot.slane %v953, %v957
        %v960 = vadd.f32 %v951, %v958
        %v961 = vadd.f32 %v952, %v958
        %v962 = vld [vmem:[%s6] sm:$0xf]
        %v963 = vld [vmem:[%s6 + $0x4] sm:$0xf]
        %v964 = vld [vmem:[%s6 + $0x8] sm:$0xf]
        %v965 = vld [vmem:[%s6 + $0xc] sm:$0xf]
        %v966 = vld [vmem:[%s8] sm:$0xf]
        %v967 = vld [vmem:[%s8 + $0x4] sm:$0xf]
        %v968 = vld [vmem:[%s8 + $0x8] sm:$0xf]
        %v969 = vld [vmem:[%s8 + $0xc] sm:$0xf]
        %v970 = vld [vmem:[#allocation13] sm:$0xf]
        %v971 = vld [vmem:[#allocation13 + $0x4] sm:$0xf]
        %v972 = vld [vmem:[#allocation13 + $0x8] sm:$0xf]
        %v973 = vld [vmem:[#allocation13 + $0xc] sm:$0xf]
        %v974 = vld [vmem:[%s12] sm:$0xf]
        %v975 = vld [vmem:[%s12 + $0x4] sm:$0xf]
        %v976 = vld [vmem:[%s12 + $0x8] sm:$0xf]
        %v977 = vld [vmem:[%s12 + $0xc] sm:$0xf]
        %v978 = vld [vmem:[#allocation10] sm:$0x1]
        %v979 = vld [vmem:[#allocation11] sm:$0x1]
        %v980 = vld [vmem:[#allocation14] sm:$0x1]
        %v981 = vld [vmem:[#allocation16] sm:$0x1]
        %v982 = vpack.c.bf16 %v961, %v960
        %v983 = vpack.c.bf16 %v910, %v910
        %v984 = vpack.c.bf16 %v911, %v911
        %v986 = vlaneseq
        %v987 = vshrl.u32 %v986, 7
        %v988 = vsub.s32 0, %v987
        %v989 = vrot.slane %v978, %v988
        %v995 = vunpack.c.l.b16 %v962
        %v996 = vunpack.c.l.b16 %v963
        %v997 = vunpack.c.l.b16 %v964
        %v998 = vunpack.c.l.b16 %v965
        %v999 = vpack.c.b16 %v996, %v995
        %v1000 = vpack.c.b16 %v998, %v997
        %v1004 = vsel %vm916, %v982, 0
        %1006 = vmatprep.subr.bf16.mxu0 0
        %1007 = vmatpush1.bf16.msra.mxu0 %v999
        %1008 = vmatprep.subr.bf16.mxu0 0
        %1009 = vmatpush1.bf16.msra.mxu0 %v1000
        %1010 = vmatprep.subr.bf16.mxu0 0
        %1011 = vmatpush1.bf16.msra.mxu0 0
        %1012 = vmatprep.subr.bf16.mxu0 0
        %1013 = vmatpush1.bf16.msra.mxu0 0
        %1014 = vmatprep.subr.bf16.mxu0 0
        %1015 = vmatpush1.bf16.msra.mxu0 0
        %1016 = vmatprep.subr.bf16.mxu0 0
        %1017 = vmatpush1.bf16.msra.mxu0 0
        %1018 = vmatprep.subr.bf16.mxu0 0
        %1019 = vmatpush1.bf16.msra.mxu0 0
        %1020 = vmatprep.subr.bf16.mxu0 0
        %1021 = vmatpush1.bf16.msra.mxu0 0
        %1022 = vmatprep.subr.bf16.mxu0 0
        %1023 = vmatpush1.bf16.msra.mxu0 0
        %1024 = vmatprep.subr.bf16.mxu0 0
        %1025 = vmatpush1.bf16.msra.mxu0 0
        %1026 = vmatprep.subr.bf16.mxu0 0
        %1027 = vmatpush1.bf16.msra.mxu0 0
        %1028 = vmatprep.subr.bf16.mxu0 0
        %1029 = vmatpush1.bf16.msra.mxu0 0
        %1030 = vmatprep.subr.bf16.mxu0 0
        %1031 = vmatpush1.bf16.msra.mxu0 0
        %1032 = vmatprep.subr.bf16.mxu0 0
        %1033 = vmatpush1.bf16.msra.mxu0 0
        %1034 = vmatprep.subr.bf16.mxu0 0
        %1035 = vmatpush1.bf16.msra.mxu0 0
        %1036 = vmatprep.subr.bf16.mxu0 0
        %1037 = vmatpush1.bf16.msra.mxu0 0
        %1038 = vmatprep.mubr.bf16.mxu0 0
        %1039 = vmatmul.mubr.bf16.gmra.mrb[0].mxu0 %v1004
        %v1040 = vpop.f32.mrb[0].mxu0
        %v1041 = vadd.f32 %v989, %v1040
        %v1042 = vpop.f32.mrb[0].mxu0
        %v1043 = vpop.f32.mrb[0].mxu0
        %v1044 = vadd.f32 %v989, %v1043
        %v1045 = vpop.f32.mrb[0].mxu0
        %1046 = vdwg.mxu0
        %v1048 = vlaneseq
        %v1049 = vshrl.u32 %v1048, 7
        %v1050 = vsub.s32 0, %v1049
        %v1051 = vrot.slane %v979, %v1050
        %v1057 = vunpack.c.l.b16 %v966
        %v1058 = vunpack.c.l.b16 %v967
        %v1059 = vunpack.c.l.b16 %v968
        %v1060 = vunpack.c.l.b16 %v969
        %v1061 = vpack.c.b16 %v1058, %v1057
        %v1062 = vpack.c.b16 %v1060, %v1059
        %1065 = vmatprep.subr.bf16.mxu0 0
        %1066 = vmatpush1.bf16.msra.mxu0 %v1061
        %1067 = vmatprep.subr.bf16.mxu0 0
        %1068 = vmatpush1.bf16.msra.mxu0 %v1062
        %1069 = vmatprep.subr.bf16.mxu0 0
        %1070 = vmatpush1.bf16.msra.mxu0 0
        %1071 = vmatprep.subr.bf16.mxu0 0
        %1072 = vmatpush1.bf16.msra.mxu0 0
        %1073 = vmatprep.subr.bf16.mxu0 0
        %1074 = vmatpush1.bf16.msra.mxu0 0
        %1075 = vmatprep.subr.bf16.mxu0 0
        %1076 = vmatpush1.bf16.msra.mxu0 0
        %1077 = vmatprep.subr.bf16.mxu0 0
        %1078 = vmatpush1.bf16.msra.mxu0 0
        %1079 = vmatprep.subr.bf16.mxu0 0
        %1080 = vmatpush1.bf16.msra.mxu0 0
        %1081 = vmatprep.subr.bf16.mxu0 0
        %1082 = vmatpush1.bf16.msra.mxu0 0
        %1083 = vmatprep.subr.bf16.mxu0 0
        %1084 = vmatpush1.bf16.msra.mxu0 0
        %1085 = vmatprep.subr.bf16.mxu0 0
        %1086 = vmatpush1.bf16.msra.mxu0 0
        %1087 = vmatprep.subr.bf16.mxu0 0
        %1088 = vmatpush1.bf16.msra.mxu0 0
        %1089 = vmatprep.subr.bf16.mxu0 0
        %1090 = vmatpush1.bf16.msra.mxu0 0
        %1091 = vmatprep.subr.bf16.mxu0 0
        %1092 = vmatpush1.bf16.msra.mxu0 0
        %1093 = vmatprep.subr.bf16.mxu0 0
        %1094 = vmatpush1.bf16.msra.mxu0 0
        %1095 = vmatprep.subr.bf16.mxu0 0
        %1096 = vmatpush1.bf16.msra.mxu0 0
        %1097 = vmatprep.mubr.bf16.mxu0 0
        %1098 = vmatmul.mubr.bf16.gmra.mrb[0].mxu0 %v1004
        %v1099 = vpop.f32.mrb[0].mxu0
        %v1100 = vadd.f32 %v1051, %v1099
        %v1101 = vpop.f32.mrb[0].mxu0
        %v1102 = vpop.f32.mrb[0].mxu0
        %v1103 = vadd.f32 %v1051, %v1102
        %v1104 = vpop.f32.mrb[0].mxu0
        %1105 = vdwg.mxu0
        %v1107 = vlaneseq
        %v1108 = vshrl.u32 %v1107, 7
        %v1109 = vsub.s32 0, %v1108
        %v1110 = vrot.slane %v980, %v1109
        %v1116 = vunpack.c.l.b16 %v970
        %v1117 = vunpack.c.l.b16 %v971
        %v1118 = vunpack.c.l.b16 %v972
        %v1119 = vunpack.c.l.b16 %v973
        %v1120 = vpack.c.b16 %v1117, %v1116
        %v1121 = vpack.c.b16 %v1119, %v1118
        %1124 = vmatprep.subr.bf16.mxu0 0
        %1125 = vmatpush1.bf16.msra.mxu0 %v1120
        %1126 = vmatprep.subr.bf16.mxu0 0
        %1127 = vmatpush1.bf16.msra.mxu0 %v1121
        %1128 = vmatprep.subr.bf16.mxu0 0
        %1129 = vmatpush1.bf16.msra.mxu0 0
        %1130 = vmatprep.subr.bf16.mxu0 0
        %1131 = vmatpush1.bf16.msra.mxu0 0
        %1132 = vmatprep.subr.bf16.mxu0 0
        %1133 = vmatpush1.bf16.msra.mxu0 0
        %1134 = vmatprep.subr.bf16.mxu0 0
        %1135 = vmatpush1.bf16.msra.mxu0 0
        %1136 = vmatprep.subr.bf16.mxu0 0
        %1137 = vmatpush1.bf16.msra.mxu0 0
        %1138 = vmatprep.subr.bf16.mxu0 0
        %1139 = vmatpush1.bf16.msra.mxu0 0
        %1140 = vmatprep.subr.bf16.mxu0 0
        %1141 = vmatpush1.bf16.msra.mxu0 0
        %1142 = vmatprep.subr.bf16.mxu0 0
        %1143 = vmatpush1.bf16.msra.mxu0 0
        %1144 = vmatprep.subr.bf16.mxu0 0
        %1145 = vmatpush1.bf16.msra.mxu0 0
        %1146 = vmatprep.subr.bf16.mxu0 0
        %1147 = vmatpush1.bf16.msra.mxu0 0
        %1148 = vmatprep.subr.bf16.mxu0 0
        %1149 = vmatpush1.bf16.msra.mxu0 0
        %1150 = vmatprep.subr.bf16.mxu0 0
        %1151 = vmatpush1.bf16.msra.mxu0 0
        %1152 = vmatprep.subr.bf16.mxu0 0
        %1153 = vmatpush1.bf16.msra.mxu0 0
        %1154 = vmatprep.subr.bf16.mxu0 0
        %1155 = vmatpush1.bf16.msra.mxu0 0
        %1156 = vmatprep.mubr.bf16.mxu0 0
        %1157 = vmatmul.mubr.bf16.gmra.mrb[0].mxu0 %v1004
        %v1158 = vpop.f32.mrb[0].mxu0
        %v1159 = vadd.f32 %v1110, %v1158
        %v1160 = vpop.f32.mrb[0].mxu0
        %v1161 = vpop.f32.mrb[0].mxu0
        %v1162 = vadd.f32 %v1110, %v1161
        %v1163 = vpop.f32.mrb[0].mxu0
        %1164 = vdwg.mxu0
        %v1167 = vunpack.c.l.b16 %v908
        %v1168 = vunpack.c.l.b16 %v909
        %v1169 = vpack.c.b16 %v1168, %v1167
        %v1171 = vsel %vm916, %v1169, 0
        %1173 = vmatprep.subr.bf16.mxu0 0
        %1174 = vmatpush1.bf16.msra.mxu0 %v1061
        %1175 = vmatprep.subr.bf16.mxu0 0
        %1176 = vmatpush1.bf16.msra.mxu0 %v1062
        %1177 = vmatprep.subr.bf16.mxu0 0
        %1178 = vmatpush1.bf16.msra.mxu0 0
        %1179 = vmatprep.subr.bf16.mxu0 0
        %1180 = vmatpush1.bf16.msra.mxu0 0
        %1181 = vmatprep.subr.bf16.mxu0 0
        %1182 = vmatpush1.bf16.msra.mxu0 0
        %1183 = vmatprep.subr.bf16.mxu0 0
        %1184 = vmatpush1.bf16.msra.mxu0 0
        %1185 = vmatprep.subr.bf16.mxu0 0
        %1186 = vmatpush1.bf16.msra.mxu0 0
        %1187 = vmatprep.subr.bf16.mxu0 0
        %1188 = vmatpush1.bf16.msra.mxu0 0
        %1189 = vmatprep.subr.bf16.mxu0 0
        %1190 = vmatpush1.bf16.msra.mxu0 0
        %1191 = vmatprep.subr.bf16.mxu0 0
        %1192 = vmatpush1.bf16.msra.mxu0 0
        %1193 = vmatprep.subr.bf16.mxu0 0
        %1194 = vmatpush1.bf16.msra.mxu0 0
        %1195 = vmatprep.subr.bf16.mxu0 0
        %1196 = vmatpush1.bf16.msra.mxu0 0
        %1197 = vmatprep.subr.bf16.mxu0 0
        %1198 = vmatpush1.bf16.msra.mxu0 0
        %1199 = vmatprep.subr.bf16.mxu0 0
        %1200 = vmatpush1.bf16.msra.mxu0 0
        %1201 = vmatprep.subr.bf16.mxu0 0
        %1202 = vmatpush1.bf16.msra.mxu0 0
        %1203 = vmatprep.subr.bf16.mxu0 0
        %1204 = vmatpush1.bf16.msra.mxu0 0
        %1205 = vmatprep.mubr.bf16.mxu0 0
        %1206 = vmatmul.mubr.bf16.gmra.mrb[0].mxu0 %v1171
        %v1207 = vpop.f32.mrb[0].mxu0
        %v1208 = vadd.f32 %v1051, %v1207
        %v1209 = vpop.f32.mrb[0].mxu0
        %v1210 = vpop.f32.mrb[0].mxu0
        %v1211 = vadd.f32 %v1051, %v1210
        %v1212 = vpop.f32.mrb[0].mxu0
        %1213 = vdwg.mxu0
        %1214 = vmatprep.subr.bf16.mxu0 0
        %1215 = vmatpush1.bf16.msra.mxu0 %v1120
        %1216 = vmatprep.subr.bf16.mxu0 0
        %1217 = vmatpush1.bf16.msra.mxu0 %v1121
        %1218 = vmatprep.subr.bf16.mxu0 0
        %1219 = vmatpush1.bf16.msra.mxu0 0
        %1220 = vmatprep.subr.bf16.mxu0 0
        %1221 = vmatpush1.bf16.msra.mxu0 0
        %1222 = vmatprep.subr.bf16.mxu0 0
        %1223 = vmatpush1.bf16.msra.mxu0 0
        %1224 = vmatprep.subr.bf16.mxu0 0
        %1225 = vmatpush1.bf16.msra.mxu0 0
        %1226 = vmatprep.subr.bf16.mxu0 0
        %1227 = vmatpush1.bf16.msra.mxu0 0
        %1228 = vmatprep.subr.bf16.mxu0 0
        %1229 = vmatpush1.bf16.msra.mxu0 0
        %1230 = vmatprep.subr.bf16.mxu0 0
        %1231 = vmatpush1.bf16.msra.mxu0 0
        %1232 = vmatprep.subr.bf16.mxu0 0
        %1233 = vmatpush1.bf16.msra.mxu0 0
        %1234 = vmatprep.subr.bf16.mxu0 0
        %1235 = vmatpush1.bf16.msra.mxu0 0
        %1236 = vmatprep.subr.bf16.mxu0 0
        %1237 = vmatpush1.bf16.msra.mxu0 0
        %1238 = vmatprep.subr.bf16.mxu0 0
        %1239 = vmatpush1.bf16.msra.mxu0 0
        %1240 = vmatprep.subr.bf16.mxu0 0
        %1241 = vmatpush1.bf16.msra.mxu0 0
        %1242 = vmatprep.subr.bf16.mxu0 0
        %1243 = vmatpush1.bf16.msra.mxu0 0
        %1244 = vmatprep.subr.bf16.mxu0 0
        %1245 = vmatpush1.bf16.msra.mxu0 0
        %1246 = vmatprep.mubr.bf16.mxu0 0
        %1247 = vmatmul.mubr.bf16.gmra.mrb[0].mxu0 %v1171
        %v1248 = vpop.f32.mrb[0].mxu0
        %v1249 = vadd.f32 %v1110, %v1248
        %v1250 = vpop.f32.mrb[0].mxu0
        %v1251 = vpop.f32.mrb[0].mxu0
        %v1252 = vadd.f32 %v1110, %v1251
        %v1253 = vpop.f32.mrb[0].mxu0
        %1254 = vdwg.mxu0
        %v1257 = vunpack.c.l.b16 %v983
        %v1258 = vunpack.c.l.b16 %v984
        %v1259 = vrot.slane %v1258, 7
        %vm1260 = vcmask 1041409
        %v1261 = vsel %vm1260, %v1259, %v1257
        %v1262 = vpack.c.b16 %v1261, %v1261
        %v1264 = vsel %vm916, %v1262, 0
        %1266 = vmatprep.subr.bf16.mxu0 0
        %1267 = vmatpush1.bf16.msra.mxu0 %v1061
        %1268 = vmatprep.subr.bf16.mxu0 0
        %1269 = vmatpush1.bf16.msra.mxu0 %v1062
        %1270 = vmatprep.subr.bf16.mxu0 0
        %1271 = vmatpush1.bf16.msra.mxu0 0
        %1272 = vmatprep.subr.bf16.mxu0 0
        %1273 = vmatpush1.bf16.msra.mxu0 0
        %1274 = vmatprep.subr.bf16.mxu0 0
        %1275 = vmatpush1.bf16.msra.mxu0 0
        %1276 = vmatprep.subr.bf16.mxu0 0
        %1277 = vmatpush1.bf16.msra.mxu0 0
        %1278 = vmatprep.subr.bf16.mxu0 0
        %1279 = vmatpush1.bf16.msra.mxu0 0
        %1280 = vmatprep.subr.bf16.mxu0 0
        %1281 = vmatpush1.bf16.msra.mxu0 0
        %1282 = vmatprep.subr.bf16.mxu0 0
        %1283 = vmatpush1.bf16.msra.mxu0 0
        %1284 = vmatprep.subr.bf16.mxu0 0
        %1285 = vmatpush1.bf16.msra.mxu0 0
        %1286 = vmatprep.subr.bf16.mxu0 0
        %1287 = vmatpush1.bf16.msra.mxu0 0
        %1288 = vmatprep.subr.bf16.mxu0 0
        %1289 = vmatpush1.bf16.msra.mxu0 0
        %1290 = vmatprep.subr.bf16.mxu0 0
        %1291 = vmatpush1.bf16.msra.mxu0 0
        %1292 = vmatprep.subr.bf16.mxu0 0
        %1293 = vmatpush1.bf16.msra.mxu0 0
        %1294 = vmatprep.subr.bf16.mxu0 0
        %1295 = vmatpush1.bf16.msra.mxu0 0
        %1296 = vmatprep.subr.bf16.mxu0 0
        %1297 = vmatpush1.bf16.msra.mxu0 0
        %1298 = vmatprep.mubr.bf16.mxu0 0
        %1299 = vmatmul.mubr.bf16.gmra.mrb[0].mxu0 %v1264
        %v1300 = vpop.f32.mrb[0].mxu0
        %v1301 = vadd.f32 %v1051, %v1300
        %v1302 = vpop.f32.mrb[0].mxu0
        %v1303 = vpop.f32.mrb[0].mxu0
        %v1304 = vpop.f32.mrb[0].mxu0
        %1305 = vdwg.mxu0
        %1306 = vmatprep.subr.bf16.mxu0 0
        %1307 = vmatpush1.bf16.msra.mxu0 %v1120
        %1308 = vmatprep.subr.bf16.mxu0 0
        %1309 = vmatpush1.bf16.msra.mxu0 %v1121
        %1310 = vmatprep.subr.bf16.mxu0 0
        %1311 = vmatpush1.bf16.msra.mxu0 0
        %1312 = vmatprep.subr.bf16.mxu0 0
        %1313 = vmatpush1.bf16.msra.mxu0 0
        %1314 = vmatprep.subr.bf16.mxu0 0
        %1315 = vmatpush1.bf16.msra.mxu0 0
        %1316 = vmatprep.subr.bf16.mxu0 0
        %1317 = vmatpush1.bf16.msra.mxu0 0
        %1318 = vmatprep.subr.bf16.mxu0 0
        %1319 = vmatpush1.bf16.msra.mxu0 0
        %1320 = vmatprep.subr.bf16.mxu0 0
        %1321 = vmatpush1.bf16.msra.mxu0 0
        %1322 = vmatprep.subr.bf16.mxu0 0
        %1323 = vmatpush1.bf16.msra.mxu0 0
        %1324 = vmatprep.subr.bf16.mxu0 0
        %1325 = vmatpush1.bf16.msra.mxu0 0
        %1326 = vmatprep.subr.bf16.mxu0 0
        %1327 = vmatpush1.bf16.msra.mxu0 0
        %1328 = vmatprep.subr.bf16.mxu0 0
        %1329 = vmatpush1.bf16.msra.mxu0 0
        %1330 = vmatprep.subr.bf16.mxu0 0
        %1331 = vmatpush1.bf16.msra.mxu0 0
        %1332 = vmatprep.subr.bf16.mxu0 0
        %1333 = vmatpush1.bf16.msra.mxu0 0
        %1334 = vmatprep.subr.bf16.mxu0 0
        %1335 = vmatpush1.bf16.msra.mxu0 0
        %1336 = vmatprep.subr.bf16.mxu0 0
        %1337 = vmatpush1.bf16.msra.mxu0 0
        %1338 = vmatprep.mubr.bf16.mxu0 0
        %1339 = vmatmul.mubr.bf16.gmra.mrb[0].mxu0 %v1264
        %v1340 = vpop.f32.mrb[0].mxu0
        %v1341 = vadd.f32 %v1110, %v1340
        %v1342 = vpop.f32.mrb[0].mxu0
        %v1343 = vpop.f32.mrb[0].mxu0
        %v1344 = vpop.f32.mrb[0].mxu0
        %1345 = vdwg.mxu0
        %v1346 = vrot.slane %v1100, 6
        %v1347 = vrot.slane %v1103, 6
        %vm1348 = vcmp.lt.s32.totalorder %v915, 2
        %v1349 = vsel %vm1348, %v1346, %v1347
        %v1350 = vsel %vm1348, %v1347, %v1346
        %vm1351 = vcmp.ge.s32.totalorder %v915, 2
        %v1352 = vsel %vm1351, 1, 0
        %vm1353 = vcmp.eq.s32.totalorder %v1352, 1
        %v1354 = vsel %vm1353, %v1350, 0.0
        %v1355 = vsel %vm1353, %v1349, 0.0
        %v1356 = vmul.f32 %v1041, %v1354
        %v1357 = vmul.f32 %v1044, %v1355
        %vm1358 = vcmask 64512
        %v1359 = vsel %vm1358, %v1356, 0.0
        %1360 = vadd.xlane.f32.xlu0 %v1359
        %v1361 = vpop.xlane.xlu0 %1360
        %v1362 = vsel %vm1358, %v1357, 0.0
        %1363 = vadd.xlane.f32.xlu0 %v1362
        %v1364 = vpop.xlane.xlu0 %1363
        %1367 = vrot.lane.b32.xlu0 %v1356, 120
        %v1368 = vpop.permute.xlu0 %1367
        %1369 = vrot.lane.b32.xlu0 %v1357, 120
        %v1370 = vpop.permute.xlu0 %1369
        %v1373 = vsel %vm1358, %v1368, 0.0
        %1374 = vadd.xlane.f32.xlu0 %v1373
        %v1375 = vpop.xlane.xlu0 %1374
        %v1376 = vsel %vm1358, %v1370, 0.0
        %1377 = vadd.xlane.f32.xlu0 %v1376
        %v1378 = vpop.xlane.xlu0 %1377
        %1379 = vrot.lane.b32.xlu0 %v1356, 112
        %v1380 = vpop.permute.xlu0 %1379
        %1381 = vrot.lane.b32.xlu0 %v1357, 112
        %v1382 = vpop.permute.xlu0 %1381
        %v1385 = vsel %vm1358, %v1380, 0.0
        %1386 = vadd.xlane.f32.xlu0 %v1385
        %v1387 = vpop.xlane.xlu0 %1386
        %v1388 = vsel %vm1358, %v1382, 0.0
        %1389 = vadd.xlane.f32.xlu0 %v1388
        %v1390 = vpop.xlane.xlu0 %1389
        %1391 = vrot.lane.b32.xlu0 %v1356, 104
        %v1392 = vpop.permute.xlu0 %1391
        %1393 = vrot.lane.b32.xlu0 %v1357, 104
        %v1394 = vpop.permute.xlu0 %1393
        %v1397 = vsel %vm1358, %v1392, 0.0
        %1398 = vadd.xlane.f32.xlu0 %v1397
        %v1399 = vpop.xlane.xlu0 %1398
        %v1400 = vsel %vm1358, %v1394, 0.0
        %1401 = vadd.xlane.f32.xlu0 %v1400
        %v1402 = vpop.xlane.xlu0 %1401
        %vm1403 = vcmask 7168
        %v1404 = vsel %vm1403, %v1361, %v1375
        %v1405 = vsel %vm1403, %v1364, %v1378
        %vm1406 = vcmask 15360
        %v1407 = vsel %vm1406, %v1404, %v1387
        %v1408 = vsel %vm1406, %v1405, %v1390
        %vm1409 = vcmask 23552
        %v1410 = vsel %vm1409, %v1407, %v1399
        %v1411 = vsel %vm1409, %v1408, %v1402
        %v1412 = vmul.f32 %v1410, 0.35355338
        %v1413 = vmul.f32 %v1411, 0.35355338
        %v1414 = vrot.slane %v1100, 7
        %v1415 = vrot.slane %v1103, 7
        %vm1416 = vcmp.lt.s32.totalorder %v915, 1
        %v1417 = vsel %vm1416, %v1414, %v1415
        %v1418 = vsel %vm1416, %v1415, %v1414
        %vm1419 = vcmp.ge.s32.totalorder %v915, 1
        %v1420 = vsel %vm1419, 1, 0
        %vm1421 = vcmp.eq.s32.totalorder %v1420, 1
        %v1422 = vsel %vm1421, %v1418, 0.0
        %v1423 = vsel %vm1421, %v1417, 0.0
        %v1424 = vmul.f32 %v1041, %v1422
        %v1425 = vmul.f32 %v1044, %v1423
        %v1426 = vsel %vm1358, %v1424, 0.0
        %1427 = vadd.xlane.f32.xlu0 %v1426
        %v1428 = vpop.xlane.xlu0 %1427
        %v1429 = vsel %vm1358, %v1425, 0.0
        %1430 = vadd.xlane.f32.xlu0 %v1429
        %v1431 = vpop.xlane.xlu0 %1430
        %1434 = vrot.lane.b32.xlu0 %v1424, 120
        %v1435 = vpop.permute.xlu0 %1434
        %1436 = vrot.lane.b32.xlu0 %v1425, 120
        %v1437 = vpop.permute.xlu0 %1436
        %v1440 = vsel %vm1358, %v1435, 0.0
        %1441 = vadd.xlane.f32.xlu0 %v1440
        %v1442 = vpop.xlane.xlu0 %1441
        %v1443 = vsel %vm1358, %v1437, 0.0
        %1444 = vadd.xlane.f32.xlu0 %v1443
        %v1445 = vpop.xlane.xlu0 %1444
        %1446 = vrot.lane.b32.xlu0 %v1424, 112
        %v1447 = vpop.permute.xlu0 %1446
        %1448 = vrot.lane.b32.xlu0 %v1425, 112
        %v1449 = vpop.permute.xlu0 %1448
        %v1452 = vsel %vm1358, %v1447, 0.0
        %1453 = vadd.xlane.f32.xlu0 %v1452
        %v1454 = vpop.xlane.xlu0 %1453
        %v1455 = vsel %vm1358, %v1449, 0.0
        %1456 = vadd.xlane.f32.xlu0 %v1455
        %v1457 = vpop.xlane.xlu0 %1456
        %1458 = vrot.lane.b32.xlu0 %v1424, 104
        %v1459 = vpop.permute.xlu0 %1458
        %1460 = vrot.lane.b32.xlu0 %v1425, 104
        %v1461 = vpop.permute.xlu0 %1460
        %v1464 = vsel %vm1358, %v1459, 0.0
        %1465 = vadd.xlane.f32.xlu0 %v1464
        %v1466 = vpop.xlane.xlu0 %1465
        %v1467 = vsel %vm1358, %v1461, 0.0
        %1468 = vadd.xlane.f32.xlu0 %v1467
        %v1469 = vpop.xlane.xlu0 %1468
        %v1470 = vsel %vm1403, %v1428, %v1442
        %v1471 = vsel %vm1403, %v1431, %v1445
        %v1472 = vsel %vm1406, %v1470, %v1454
        %v1473 = vsel %vm1406, %v1471, %v1457
        %v1474 = vsel %vm1409, %v1472, %v1466
        %v1475 = vsel %vm1409, %v1473, %v1469
        %v1476 = vmul.f32 %v1474, 0.35355338
        %v1477 = vmul.f32 %v1475, 0.35355338
        %v1478 = vmul.f32 %v1041, %v1100
        %v1479 = vmul.f32 %v1044, %v1103
        %v1480 = vsel %vm1358, %v1478, 0.0
        %1481 = vadd.xlane.f32.xlu0 %v1480
        %v1482 = vpop.xlane.xlu0 %1481
        %v1483 = vsel %vm1358, %v1479, 0.0
        %1484 = vadd.xlane.f32.xlu0 %v1483
        %v1485 = vpop.xlane.xlu0 %1484
        %1488 = vrot.lane.b32.xlu0 %v1478, 120
        %v1489 = vpop.permute.xlu0 %1488
        %1490 = vrot.lane.b32.xlu0 %v1479, 120
        %v1491 = vpop.permute.xlu0 %1490
        %v1494 = vsel %vm1358, %v1489, 0.0
        %1495 = vadd.xlane.f32.xlu0 %v1494
        %v1496 = vpop.xlane.xlu0 %1495
        %v1497 = vsel %vm1358, %v1491, 0.0
        %1498 = vadd.xlane.f32.xlu0 %v1497
        %v1499 = vpop.xlane.xlu0 %1498
        %1500 = vrot.lane.b32.xlu0 %v1478, 112
        %v1501 = vpop.permute.xlu0 %1500
        %1502 = vrot.lane.b32.xlu0 %v1479, 112
        %v1503 = vpop.permute.xlu0 %1502
        %v1506 = vsel %vm1358, %v1501, 0.0
        %1507 = vadd.xlane.f32.xlu0 %v1506
        %v1508 = vpop.xlane.xlu0 %1507
        %v1509 = vsel %vm1358, %v1503, 0.0
        %1510 = vadd.xlane.f32.xlu0 %v1509
        %v1511 = vpop.xlane.xlu0 %1510
        %1512 = vrot.lane.b32.xlu0 %v1478, 104
        %v1513 = vpop.permute.xlu0 %1512
        %1514 = vrot.lane.b32.xlu0 %v1479, 104
        %v1515 = vpop.permute.xlu0 %1514
        %v1518 = vsel %vm1358, %v1513, 0.0
        %1519 = vadd.xlane.f32.xlu0 %v1518
        %v1520 = vpop.xlane.xlu0 %1519
        %v1521 = vsel %vm1358, %v1515, 0.0
        %1522 = vadd.xlane.f32.xlu0 %v1521
        %v1523 = vpop.xlane.xlu0 %1522
        %v1524 = vsel %vm1403, %v1482, %v1496
        %v1525 = vsel %vm1403, %v1485, %v1499
        %v1526 = vsel %vm1406, %v1524, %v1508
        %v1527 = vsel %vm1406, %v1525, %v1511
        %v1528 = vsel %vm1409, %v1526, %v1520
        %v1529 = vsel %vm1409, %v1527, %v1523
        %v1530 = vmul.f32 %v1528, 0.35355338
        %v1531 = vmul.f32 %v1529, 0.35355338
        %v1532 = vrot.slane %v1100, 1
        %v1533 = vrot.slane %v1103, 1
        %vm1534 = vcmp.lt.s32.totalorder %v915, 7
        %v1535 = vsel %vm1534, %v1532, %v1533
        %v1536 = vsel %vm1534, %v1533, %v1532
        %v1537 = vsel %vm1534, 1, 0
        %vm1538 = vcmp.eq.s32.totalorder %v1537, 1
        %v1539 = vsel %vm1538, %v1535, 0.0
        %v1540 = vsel %vm1538, %v1536, 0.0
        %v1541 = vmul.f32 %v1041, %v1539
        %v1542 = vmul.f32 %v1044, %v1540
        %v1543 = vsel %vm1358, %v1541, 0.0
        %1544 = vadd.xlane.f32.xlu0 %v1543
        %v1545 = vpop.xlane.xlu0 %1544
        %v1546 = vsel %vm1358, %v1542, 0.0
        %1547 = vadd.xlane.f32.xlu0 %v1546
        %v1548 = vpop.xlane.xlu0 %1547
        %1551 = vrot.lane.b32.xlu0 %v1541, 120
        %v1552 = vpop.permute.xlu0 %1551
        %1553 = vrot.lane.b32.xlu0 %v1542, 120
        %v1554 = vpop.permute.xlu0 %1553
        %v1557 = vsel %vm1358, %v1552, 0.0
        %1558 = vadd.xlane.f32.xlu0 %v1557
        %v1559 = vpop.xlane.xlu0 %1558
        %v1560 = vsel %vm1358, %v1554, 0.0
        %1561 = vadd.xlane.f32.xlu0 %v1560
        %v1562 = vpop.xlane.xlu0 %1561
        %1563 = vrot.lane.b32.xlu0 %v1541, 112
        %v1564 = vpop.permute.xlu0 %1563
        %1565 = vrot.lane.b32.xlu0 %v1542, 112
        %v1566 = vpop.permute.xlu0 %1565
        %v1569 = vsel %vm1358, %v1564, 0.0
        %1570 = vadd.xlane.f32.xlu0 %v1569
        %v1571 = vpop.xlane.xlu0 %1570
        %v1572 = vsel %vm1358, %v1566, 0.0
        %1573 = vadd.xlane.f32.xlu0 %v1572
        %v1574 = vpop.xlane.xlu0 %1573
        %1575 = vrot.lane.b32.xlu0 %v1541, 104
        %v1576 = vpop.permute.xlu0 %1575
        %1577 = vrot.lane.b32.xlu0 %v1542, 104
        %v1578 = vpop.permute.xlu0 %1577
        %v1581 = vsel %vm1358, %v1576, 0.0
        %1582 = vadd.xlane.f32.xlu0 %v1581
        %v1583 = vpop.xlane.xlu0 %1582
        %v1584 = vsel %vm1358, %v1578, 0.0
        %1585 = vadd.xlane.f32.xlu0 %v1584
        %v1586 = vpop.xlane.xlu0 %1585
        %v1587 = vsel %vm1403, %v1545, %v1559
        %v1588 = vsel %vm1403, %v1548, %v1562
        %v1589 = vsel %vm1406, %v1587, %v1571
        %v1590 = vsel %vm1406, %v1588, %v1574
        %v1591 = vsel %vm1409, %v1589, %v1583
        %v1592 = vsel %vm1409, %v1590, %v1586
        %v1593 = vmul.f32 %v1591, 0.35355338
        %v1594 = vmul.f32 %v1592, 0.35355338
        %v1595 = vrot.slane %v1100, 2
        %v1596 = vrot.slane %v1103, 2
        %vm1597 = vcmp.lt.s32.totalorder %v915, 6
        %v1598 = vsel %vm1597, %v1595, %v1596
        %v1599 = vsel %vm1597, %v1596, %v1595
        %v1600 = vsel %vm1597, 1, 0
        %vm1601 = vcmp.eq.s32.totalorder %v1600, 1
        %v1602 = vsel %vm1601, %v1598, 0.0
        %v1603 = vsel %vm1601, %v1599, 0.0
        %v1604 = vmul.f32 %v1041, %v1602
        %v1605 = vmul.f32 %v1044, %v1603
        %v1606 = vsel %vm1358, %v1604, 0.0
        %1607 = vadd.xlane.f32.xlu0 %v1606
        %v1608 = vpop.xlane.xlu0 %1607
        %v1609 = vsel %vm1358, %v1605, 0.0
        %1610 = vadd.xlane.f32.xlu0 %v1609
        %v1611 = vpop.xlane.xlu0 %1610
        %1614 = vrot.lane.b32.xlu0 %v1604, 120
        %v1615 = vpop.permute.xlu0 %1614
        %1616 = vrot.lane.b32.xlu0 %v1605, 120
        %v1617 = vpop.permute.xlu0 %1616
        %v1620 = vsel %vm1358, %v1615, 0.0
        %1621 = vadd.xlane.f32.xlu0 %v1620
        %v1622 = vpop.xlane.xlu0 %1621
        %v1623 = vsel %vm1358, %v1617, 0.0
        %1624 = vadd.xlane.f32.xlu0 %v1623
        %v1625 = vpop.xlane.xlu0 %1624
        %1626 = vrot.lane.b32.xlu0 %v1604, 112
        %v1627 = vpop.permute.xlu0 %1626
        %1628 = vrot.lane.b32.xlu0 %v1605, 112
        %v1629 = vpop.permute.xlu0 %1628
        %v1632 = vsel %vm1358, %v1627, 0.0
        %1633 = vadd.xlane.f32.xlu0 %v1632
        %v1634 = vpop.xlane.xlu0 %1633
        %v1635 = vsel %vm1358, %v1629, 0.0
        %1636 = vadd.xlane.f32.xlu0 %v1635
        %v1637 = vpop.xlane.xlu0 %1636
        %1638 = vrot.lane.b32.xlu0 %v1604, 104
        %v1639 = vpop.permute.xlu0 %1638
        %1640 = vrot.lane.b32.xlu0 %v1605, 104
        %v1641 = vpop.permute.xlu0 %1640
        %v1644 = vsel %vm1358, %v1639, 0.0
        %1645 = vadd.xlane.f32.xlu0 %v1644
        %v1646 = vpop.xlane.xlu0 %1645
        %v1647 = vsel %vm1358, %v1641, 0.0
        %1648 = vadd.xlane.f32.xlu0 %v1647
        %v1649 = vpop.xlane.xlu0 %1648
        %v1650 = vsel %vm1403, %v1608, %v1622
        %v1651 = vsel %vm1403, %v1611, %v1625
        %v1652 = vsel %vm1406, %v1650, %v1634
        %v1653 = vsel %vm1406, %v1651, %v1637
        %v1654 = vsel %vm1409, %v1652, %v1646
        %v1655 = vsel %vm1409, %v1653, %v1649
        %v1656 = vmul.f32 %v1654, 0.35355338
        %v1657 = vmul.f32 %v1655, 0.35355338
        %v1658 = vmul.f32 %v1041, %v1208
        %v1659 = vmul.f32 %v1044, %v1211
        %v1660 = vsel %vm1358, %v1658, 0.0
        %1661 = vadd.xlane.f32.xlu0 %v1660
        %v1662 = vpop.xlane.xlu0 %1661
        %v1663 = vsel %vm1358, %v1659, 0.0
        %1664 = vadd.xlane.f32.xlu0 %v1663
        %v1665 = vpop.xlane.xlu0 %1664
        %1668 = vrot.lane.b32.xlu0 %v1658, 120
        %v1669 = vpop.permute.xlu0 %1668
        %1670 = vrot.lane.b32.xlu0 %v1659, 120
        %v1671 = vpop.permute.xlu0 %1670
        %v1674 = vsel %vm1358, %v1669, 0.0
        %1675 = vadd.xlane.f32.xlu0 %v1674
        %v1676 = vpop.xlane.xlu0 %1675
        %v1677 = vsel %vm1358, %v1671, 0.0
        %1678 = vadd.xlane.f32.xlu0 %v1677
        %v1679 = vpop.xlane.xlu0 %1678
        %1680 = vrot.lane.b32.xlu0 %v1658, 112
        %v1681 = vpop.permute.xlu0 %1680
        %1682 = vrot.lane.b32.xlu0 %v1659, 112
        %v1683 = vpop.permute.xlu0 %1682
        %v1686 = vsel %vm1358, %v1681, 0.0
        %1687 = vadd.xlane.f32.xlu0 %v1686
        %v1688 = vpop.xlane.xlu0 %1687
        %v1689 = vsel %vm1358, %v1683, 0.0
        %1690 = vadd.xlane.f32.xlu0 %v1689
        %v1691 = vpop.xlane.xlu0 %1690
        %1692 = vrot.lane.b32.xlu0 %v1658, 104
        %v1693 = vpop.permute.xlu0 %1692
        %1694 = vrot.lane.b32.xlu0 %v1659, 104
        %v1695 = vpop.permute.xlu0 %1694
        %v1698 = vsel %vm1358, %v1693, 0.0
        %1699 = vadd.xlane.f32.xlu0 %v1698
        %v1700 = vpop.xlane.xlu0 %1699
        %v1701 = vsel %vm1358, %v1695, 0.0
        %1702 = vadd.xlane.f32.xlu0 %v1701
        %v1703 = vpop.xlane.xlu0 %1702
        %v1704 = vsel %vm1403, %v1662, %v1676
        %v1705 = vsel %vm1403, %v1665, %v1679
        %v1706 = vsel %vm1406, %v1704, %v1688
        %v1707 = vsel %vm1406, %v1705, %v1691
        %v1708 = vsel %vm1409, %v1706, %v1700
        %v1709 = vsel %vm1409, %v1707, %v1703
        %v1710 = vmul.f32 %v1708, 0.35355338
        %v1711 = vmul.f32 %v1709, 0.35355338
        %v1714 = vunpack.c.l.s4 1966171168
        %v1715 = vunpack.c.0.s8 %v1714
        %v1716 = vlaneseq
        %v1717 = vshrl.u32 %v1716, 7
        %v1718 = vsub.s32 %v1715, %v1717
        %v1719 = vrot.slane %v1301, %v1718
        %v1720 = vcombine.high %v1719, %v1719
        %v1722 = vunpack.c.l.s4 1966171168
        %v1723 = vunpack.c.0.s8 %v1722
        %v1724 = vlaneseq
        %v1725 = vshrl.u32 %v1724, 7
        %v1726 = vsub.s32 %v1723, %v1725
        %v1727 = vrot.slane %v1719, %v1726
        %v1729 = vunpack.c.l.s4 1966171168
        %v1730 = vunpack.c.0.s8 %v1729
        %v1731 = vlaneseq
        %v1732 = vshrl.u32 %v1731, 7
        %v1733 = vsub.s32 %v1730, %v1732
        %v1734 = vrot.slane %v1720, %v1733
        %v1735 = vlaneseq
        %v1736 = vshrl.u32 %v1735, 7
        %v1737 = vsub.s32 0, %v1736
        %v1738 = vrot.slane %v1727, %v1737
        %v1739 = vlaneseq
        %v1740 = vshrl.u32 %v1739, 7
        %v1741 = vsub.s32 0, %v1740
        %v1742 = vrot.slane %v1734, %v1741
        %v1745 = vmul.f32 %v1041, %v1738
        %v1746 = vmul.f32 %v1044, %v1742
        %v1747 = vsel %vm1358, %v1745, 0.0
        %1748 = vadd.xlane.f32.xlu0 %v1747
        %v1749 = vpop.xlane.xlu0 %1748
        %v1750 = vsel %vm1358, %v1746, 0.0
        %1751 = vadd.xlane.f32.xlu0 %v1750
        %v1752 = vpop.xlane.xlu0 %1751
        %1755 = vrot.lane.b32.xlu0 %v1745, 120
        %v1756 = vpop.permute.xlu0 %1755
        %1757 = vrot.lane.b32.xlu0 %v1746, 120
        %v1758 = vpop.permute.xlu0 %1757
        %v1761 = vsel %vm1358, %v1756, 0.0
        %1762 = vadd.xlane.f32.xlu0 %v1761
        %v1763 = vpop.xlane.xlu0 %1762
        %v1764 = vsel %vm1358, %v1758, 0.0
        %1765 = vadd.xlane.f32.xlu0 %v1764
        %v1766 = vpop.xlane.xlu0 %1765
        %1767 = vrot.lane.b32.xlu0 %v1745, 112
        %v1768 = vpop.permute.xlu0 %1767
        %1769 = vrot.lane.b32.xlu0 %v1746, 112
        %v1770 = vpop.permute.xlu0 %1769
        %v1773 = vsel %vm1358, %v1768, 0.0
        %1774 = vadd.xlane.f32.xlu0 %v1773
        %v1775 = vpop.xlane.xlu0 %1774
        %v1776 = vsel %vm1358, %v1770, 0.0
        %1777 = vadd.xlane.f32.xlu0 %v1776
        %v1778 = vpop.xlane.xlu0 %1777
        %1779 = vrot.lane.b32.xlu0 %v1745, 104
        %v1780 = vpop.permute.xlu0 %1779
        %1781 = vrot.lane.b32.xlu0 %v1746, 104
        %v1782 = vpop.permute.xlu0 %1781
        %v1785 = vsel %vm1358, %v1780, 0.0
        %1786 = vadd.xlane.f32.xlu0 %v1785
        %v1787 = vpop.xlane.xlu0 %1786
        %v1788 = vsel %vm1358, %v1782, 0.0
        %1789 = vadd.xlane.f32.xlu0 %v1788
        %v1790 = vpop.xlane.xlu0 %1789
        %v1791 = vsel %vm1403, %v1749, %v1763
        %v1792 = vsel %vm1403, %v1752, %v1766
        %v1793 = vsel %vm1406, %v1791, %v1775
        %v1794 = vsel %vm1406, %v1792, %v1778
        %v1795 = vsel %vm1409, %v1793, %v1787
        %v1796 = vsel %vm1409, %v1794, %v1790
        %v1797 = vmul.f32 %v1795, 0.35355338
        %v1798 = vmul.f32 %v1796, 0.35355338
        %v1799 = vmax.f32 %v1412, %v1476
        %v1800 = vmax.f32 %v1413, %v1477
        %v1801 = vmax.f32 %v1799, %v1530
        %v1802 = vmax.f32 %v1800, %v1531
        %v1803 = vmax.f32 %v1801, %v1593
        %v1804 = vmax.f32 %v1802, %v1594
        %v1805 = vmax.f32 %v1803, %v1656
        %v1806 = vmax.f32 %v1804, %v1657
        %v1807 = vmax.f32 %v1805, %v1710
        %v1808 = vmax.f32 %v1806, %v1711
        %v1809 = vmax.f32 %v1807, %v1797
        %v1810 = vmax.f32 %v1808, %v1798
        %1813 = vrot.lane.b32.xlu0 %v1476, 4
        %v1814 = vpop.permute.xlu0 %1813
        %1815 = vrot.lane.b32.xlu0 %v1477, 4
        %v1816 = vpop.permute.xlu0 %1815
        %1821 = vrot.lane.b32.xlu0 %v1530, 8
        %v1822 = vpop.permute.xlu0 %1821
        %1823 = vrot.lane.b32.xlu0 %v1531, 8
        %v1824 = vpop.permute.xlu0 %1823
        %1829 = vrot.lane.b32.xlu0 %v1593, 12
        %v1830 = vpop.permute.xlu0 %1829
        %1831 = vrot.lane.b32.xlu0 %v1594, 12
        %v1832 = vpop.permute.xlu0 %1831
        %1837 = vrot.lane.b32.xlu0 %v1656, 16
        %v1838 = vpop.permute.xlu0 %1837
        %1839 = vrot.lane.b32.xlu0 %v1657, 16
        %v1840 = vpop.permute.xlu0 %1839
        %1845 = vrot.lane.b32.xlu0 %v1710, 20
        %v1846 = vpop.permute.xlu0 %1845
        %1847 = vrot.lane.b32.xlu0 %v1711, 20
        %v1848 = vpop.permute.xlu0 %1847
        %1853 = vrot.lane.b32.xlu0 %v1797, 24
        %v1854 = vpop.permute.xlu0 %1853
        %1855 = vrot.lane.b32.xlu0 %v1798, 24
        %v1856 = vpop.permute.xlu0 %1855
        %vm1859 = vcmask 31744
        %v1860 = vsel %vm1859, %v1412, %v1814
        %v1861 = vsel %vm1859, %v1413, %v1816
        %v1862 = vsel %vm1358, %v1860, %v1822
        %v1863 = vsel %vm1358, %v1861, %v1824
        %vm1864 = vcmask 97280
        %v1865 = vsel %vm1864, %v1862, %v1830
        %v1866 = vsel %vm1864, %v1863, %v1832
        %vm1867 = vcmask 130048
        %v1868 = vsel %vm1867, %v1865, %v1838
        %v1869 = vsel %vm1867, %v1866, %v1840
        %vm1870 = vcmask 162816
        %v1871 = vsel %vm1870, %v1868, %v1846
        %v1872 = vsel %vm1870, %v1869, %v1848
        %vm1873 = vcmask 195584
        %v1874 = vsel %vm1873, %v1871, %v1854
        %v1875 = vsel %vm1873, %v1872, %v1856
        %1878 = vrot.lane.b32.xlu0 %v1809, 4
        %v1879 = vpop.permute.xlu0 %1878
        %1880 = vrot.lane.b32.xlu0 %v1810, 4
        %v1881 = vpop.permute.xlu0 %1880
        %1884 = vrot.lane.b32.xlu0 %v1809, 8
        %v1885 = vpop.permute.xlu0 %1884
        %1886 = vrot.lane.b32.xlu0 %v1810, 8
        %v1887 = vpop.permute.xlu0 %1886
        %1890 = vrot.lane.b32.xlu0 %v1809, 12
        %v1891 = vpop.permute.xlu0 %1890
        %1892 = vrot.lane.b32.xlu0 %v1810, 12
        %v1893 = vpop.permute.xlu0 %1892
        %1896 = vrot.lane.b32.xlu0 %v1809, 16
        %v1897 = vpop.permute.xlu0 %1896
        %1898 = vrot.lane.b32.xlu0 %v1810, 16
        %v1899 = vpop.permute.xlu0 %1898
        %1902 = vrot.lane.b32.xlu0 %v1809, 20
        %v1903 = vpop.permute.xlu0 %1902
        %1904 = vrot.lane.b32.xlu0 %v1810, 20
        %v1905 = vpop.permute.xlu0 %1904
        %1908 = vrot.lane.b32.xlu0 %v1809, 24
        %v1909 = vpop.permute.xlu0 %1908
        %1910 = vrot.lane.b32.xlu0 %v1810, 24
        %v1911 = vpop.permute.xlu0 %1910
        %v1914 = vsel %vm1859, %v1809, %v1879
        %v1915 = vsel %vm1859, %v1810, %v1881
        %v1916 = vsel %vm1358, %v1914, %v1885
        %v1917 = vsel %vm1358, %v1915, %v1887
        %v1918 = vsel %vm1864, %v1916, %v1891
        %v1919 = vsel %vm1864, %v1917, %v1893
        %v1920 = vsel %vm1867, %v1918, %v1897
        %v1921 = vsel %vm1867, %v1919, %v1899
        %v1922 = vsel %vm1870, %v1920, %v1903
        %v1923 = vsel %vm1870, %v1921, %v1905
        %v1924 = vsel %vm1873, %v1922, %v1909
        %v1925 = vsel %vm1873, %v1923, %v1911
        %v1926 = vsub.f32 %v1874, %v1924
        %v1927 = vsub.f32 %v1875, %v1925
        %v1928 = vmul.f32 %v1926, 1.442695
        %v1929 = vpow.pop %v1928
        %v1930 = vmul.f32 %v1927, 1.442695
        %v1931 = vpow.pop %v1930
        %1934 = vrot.lane.b32.xlu0 %v1929, 124
        %v1935 = vpop.permute.xlu0 %1934
        %1936 = vrot.lane.b32.xlu0 %v1931, 124
        %v1937 = vpop.permute.xlu0 %1936
        %v1940 = vadd.f32 %v1929, %v1935
        %v1941 = vadd.f32 %v1931, %v1937
        %1942 = vrot.lane.b32.xlu0 %v1929, 120
        %v1943 = vpop.permute.xlu0 %1942
        %1944 = vrot.lane.b32.xlu0 %v1931, 120
        %v1945 = vpop.permute.xlu0 %1944
        %v1948 = vadd.f32 %v1940, %v1943
        %v1949 = vadd.f32 %v1941, %v1945
        %1950 = vrot.lane.b32.xlu0 %v1929, 116
        %v1951 = vpop.permute.xlu0 %1950
        %1952 = vrot.lane.b32.xlu0 %v1931, 116
        %v1953 = vpop.permute.xlu0 %1952
        %v1956 = vadd.f32 %v1948, %v1951
        %v1957 = vadd.f32 %v1949, %v1953
        %1958 = vrot.lane.b32.xlu0 %v1929, 112
        %v1959 = vpop.permute.xlu0 %1958
        %1960 = vrot.lane.b32.xlu0 %v1931, 112
        %v1961 = vpop.permute.xlu0 %1960
        %v1964 = vadd.f32 %v1956, %v1959
        %v1965 = vadd.f32 %v1957, %v1961
        %1966 = vrot.lane.b32.xlu0 %v1929, 108
        %v1967 = vpop.permute.xlu0 %1966
        %1968 = vrot.lane.b32.xlu0 %v1931, 108
        %v1969 = vpop.permute.xlu0 %1968
        %v1972 = vadd.f32 %v1964, %v1967
        %v1973 = vadd.f32 %v1965, %v1969
        %1974 = vrot.lane.b32.xlu0 %v1929, 104
        %v1975 = vpop.permute.xlu0 %1974
        %1976 = vrot.lane.b32.xlu0 %v1931, 104
        %v1977 = vpop.permute.xlu0 %1976
        %v1980 = vadd.f32 %v1972, %v1975
        %v1981 = vadd.f32 %v1973, %v1977
        %v1982 = vrcp.pop %v1980
        %v1983 = vrcp.pop %v1981
        %v1984 = vmul.f32 %v1929, %v1982
        %v1985 = vmul.f32 %v1931, %v1983
        %1987 = vset.pattern.permute.xlu0 0
        %1988 = vperm.xlu0 %1987, %v1984
        %v1989 = vpop.permute.xlu0 %1988
        %1992 = vset.pattern.permute.xlu0 0
        %1993 = vperm.xlu0 %1992, %v1985
        %v1994 = vpop.permute.xlu0 %1993
        %1996 = vset.pattern.permute.xlu0 1
        %1997 = vperm.xlu0 %1996, %v1984
        %v1998 = vpop.permute.xlu0 %1997
        %2000 = vset.pattern.permute.xlu0 1
        %2001 = vperm.xlu0 %2000, %v1985
        %v2002 = vpop.permute.xlu0 %2001
        %2004 = vset.pattern.permute.xlu0 2
        %2005 = vperm.xlu0 %2004, %v1984
        %v2006 = vpop.permute.xlu0 %2005
        %2008 = vset.pattern.permute.xlu0 2
        %2009 = vperm.xlu0 %2008, %v1985
        %v2010 = vpop.permute.xlu0 %2009
        %2012 = vset.pattern.permute.xlu0 3
        %2013 = vperm.xlu0 %2012, %v1984
        %v2014 = vpop.permute.xlu0 %2013
        %2016 = vset.pattern.permute.xlu0 3
        %2017 = vperm.xlu0 %2016, %v1985
        %v2018 = vpop.permute.xlu0 %2017
        %v2020 = vsel %vm1358, %v1989, %v1998
        %v2021 = vsel %vm1358, %v1994, %v2002
        %v2022 = vsel %vm1867, %v2020, %v2006
        %v2023 = vsel %vm1867, %v2021, %v2010
        %v2024 = vsel %vm1873, %v2022, %v2014
        %v2025 = vsel %vm1873, %v2023, %v2018
        %v2026 = vrot.slane %v1159, 6
        %v2027 = vrot.slane %v1162, 6
        %v2028 = vsel %vm1348, %v2026, %v2027
        %v2029 = vsel %vm1348, %v2027, %v2026
        %v2030 = vsel %vm1353, %v2029, 0.0
        %v2031 = vsel %vm1353, %v2028, 0.0
        %v2032 = vmul.f32 %v2024, %v2030
        %v2033 = vmul.f32 %v2025, %v2031
        %v2034 = vadd.f32 %v2032, 0.0
        %v2035 = vadd.f32 %v2033, 0.0
        %2038 = vrot.lane.b32.xlu0 %v1982, 4
        %v2039 = vpop.permute.xlu0 %2038
        %2040 = vrot.lane.b32.xlu0 %v1983, 4
        %v2041 = vpop.permute.xlu0 %2040
        %v2044 = vmul.f32 %v1929, %v2039
        %v2045 = vmul.f32 %v1931, %v2041
        %2047 = vset.pattern.permute.xlu0 4
        %2048 = vperm.xlu0 %2047, %v2044
        %v2049 = vpop.permute.xlu0 %2048
        %2052 = vset.pattern.permute.xlu0 4
        %2053 = vperm.xlu0 %2052, %v2045
        %v2054 = vpop.permute.xlu0 %2053
        %2056 = vset.pattern.permute.xlu0 5
        %2057 = vperm.xlu0 %2056, %v2044
        %v2058 = vpop.permute.xlu0 %2057
        %2060 = vset.pattern.permute.xlu0 5
        %2061 = vperm.xlu0 %2060, %v2045
        %v2062 = vpop.permute.xlu0 %2061
        %2064 = vset.pattern.permute.xlu0 6
        %2065 = vperm.xlu0 %2064, %v2044
        %v2066 = vpop.permute.xlu0 %2065
        %2068 = vset.pattern.permute.xlu0 6
        %2069 = vperm.xlu0 %2068, %v2045
        %v2070 = vpop.permute.xlu0 %2069
        %2072 = vset.pattern.permute.xlu0 7
        %2073 = vperm.xlu0 %2072, %v2044
        %v2074 = vpop.permute.xlu0 %2073
        %2076 = vset.pattern.permute.xlu0 7
        %2077 = vperm.xlu0 %2076, %v2045
        %v2078 = vpop.permute.xlu0 %2077
        %v2080 = vsel %vm1358, %v2049, %v2058
        %v2081 = vsel %vm1358, %v2054, %v2062
        %v2082 = vsel %vm1867, %v2080, %v2066
        %v2083 = vsel %vm1867, %v2081, %v2070
        %v2084 = vsel %vm1873, %v2082, %v2074
        %v2085 = vsel %vm1873, %v2083, %v2078
        %v2086 = vrot.slane %v1159, 7
        %v2087 = vrot.slane %v1162, 7
        %v2088 = vsel %vm1416, %v2086, %v2087
        %v2089 = vsel %vm1416, %v2087, %v2086
        %v2090 = vsel %vm1421, %v2089, 0.0
        %v2091 = vsel %vm1421, %v2088, 0.0
        %v2092 = vmul.f32 %v2084, %v2090
        %v2093 = vmul.f32 %v2085, %v2091
        %v2094 = vadd.f32 %v2034, %v2092
        %v2095 = vadd.f32 %v2035, %v2093
        %2096 = vrot.lane.b32.xlu0 %v1982, 8
        %v2097 = vpop.permute.xlu0 %2096
        %2098 = vrot.lane.b32.xlu0 %v1983, 8
        %v2099 = vpop.permute.xlu0 %2098
        %v2102 = vmul.f32 %v1929, %v2097
        %v2103 = vmul.f32 %v1931, %v2099
        %2105 = vset.pattern.permute.xlu0 8
        %2106 = vperm.xlu0 %2105, %v2102
        %v2107 = vpop.permute.xlu0 %2106
        %2110 = vset.pattern.permute.xlu0 8
        %2111 = vperm.xlu0 %2110, %v2103
        %v2112 = vpop.permute.xlu0 %2111
        %2114 = vset.pattern.permute.xlu0 9
        %2115 = vperm.xlu0 %2114, %v2102
        %v2116 = vpop.permute.xlu0 %2115
        %2118 = vset.pattern.permute.xlu0 9
        %2119 = vperm.xlu0 %2118, %v2103
        %v2120 = vpop.permute.xlu0 %2119
        %2122 = vset.pattern.permute.xlu0 10
        %2123 = vperm.xlu0 %2122, %v2102
        %v2124 = vpop.permute.xlu0 %2123
        %2126 = vset.pattern.permute.xlu0 10
        %2127 = vperm.xlu0 %2126, %v2103
        %v2128 = vpop.permute.xlu0 %2127
        %2130 = vset.pattern.permute.xlu0 11
        %2131 = vperm.xlu0 %2130, %v2102
        %v2132 = vpop.permute.xlu0 %2131
        %2134 = vset.pattern.permute.xlu0 11
        %2135 = vperm.xlu0 %2134, %v2103
        %v2136 = vpop.permute.xlu0 %2135
        %v2138 = vsel %vm1358, %v2107, %v2116
        %v2139 = vsel %vm1358, %v2112, %v2120
        %v2140 = vsel %vm1867, %v2138, %v2124
        %v2141 = vsel %vm1867, %v2139, %v2128
        %v2142 = vsel %vm1873, %v2140, %v2132
        %v2143 = vsel %vm1873, %v2141, %v2136
        %v2144 = vmul.f32 %v2142, %v1159
        %v2145 = vmul.f32 %v2143, %v1162
        %v2146 = vadd.f32 %v2094, %v2144
        %v2147 = vadd.f32 %v2095, %v2145
        %2148 = vrot.lane.b32.xlu0 %v1982, 12
        %v2149 = vpop.permute.xlu0 %2148
        %2150 = vrot.lane.b32.xlu0 %v1983, 12
        %v2151 = vpop.permute.xlu0 %2150
        %v2154 = vmul.f32 %v1929, %v2149
        %v2155 = vmul.f32 %v1931, %v2151
        %2157 = vset.pattern.permute.xlu0 12
        %2158 = vperm.xlu0 %2157, %v2154
        %v2159 = vpop.permute.xlu0 %2158
        %2162 = vset.pattern.permute.xlu0 12
        %2163 = vperm.xlu0 %2162, %v2155
        %v2164 = vpop.permute.xlu0 %2163
        %2166 = vset.pattern.permute.xlu0 13
        %2167 = vperm.xlu0 %2166, %v2154
        %v2168 = vpop.permute.xlu0 %2167
        %2170 = vset.pattern.permute.xlu0 13
        %2171 = vperm.xlu0 %2170, %v2155
        %v2172 = vpop.permute.xlu0 %2171
        %2174 = vset.pattern.permute.xlu0 14
        %2175 = vperm.xlu0 %2174, %v2154
        %v2176 = vpop.permute.xlu0 %2175
        %2178 = vset.pattern.permute.xlu0 14
        %2179 = vperm.xlu0 %2178, %v2155
        %v2180 = vpop.permute.xlu0 %2179
        %2182 = vset.pattern.permute.xlu0 15
        %2183 = vperm.xlu0 %2182, %v2154
        %v2184 = vpop.permute.xlu0 %2183
        %2186 = vset.pattern.permute.xlu0 15
        %2187 = vperm.xlu0 %2186, %v2155
        %v2188 = vpop.permute.xlu0 %2187
        %v2190 = vsel %vm1358, %v2159, %v2168
        %v2191 = vsel %vm1358, %v2164, %v2172
        %v2192 = vsel %vm1867, %v2190, %v2176
        %v2193 = vsel %vm1867, %v2191, %v2180
        %v2194 = vsel %vm1873, %v2192, %v2184
        %v2195 = vsel %vm1873, %v2193, %v2188
        %v2196 = vrot.slane %v1159, 1
        %v2197 = vrot.slane %v1162, 1
        %v2198 = vsel %vm1534, %v2196, %v2197
        %v2199 = vsel %vm1534, %v2197, %v2196
        %v2200 = vsel %vm1538, %v2198, 0.0
        %v2201 = vsel %vm1538, %v2199, 0.0
        %v2202 = vmul.f32 %v2194, %v2200
        %v2203 = vmul.f32 %v2195, %v2201
        %v2204 = vadd.f32 %v2146, %v2202
        %v2205 = vadd.f32 %v2147, %v2203
        %2206 = vrot.lane.b32.xlu0 %v1982, 16
        %v2207 = vpop.permute.xlu0 %2206
        %2208 = vrot.lane.b32.xlu0 %v1983, 16
        %v2209 = vpop.permute.xlu0 %2208
        %v2212 = vmul.f32 %v1929, %v2207
        %v2213 = vmul.f32 %v1931, %v2209
        %2215 = vset.pattern.permute.xlu0 16
        %2216 = vperm.xlu0 %2215, %v2212
        %v2217 = vpop.permute.xlu0 %2216
        %2220 = vset.pattern.permute.xlu0 16
        %2221 = vperm.xlu0 %2220, %v2213
        %v2222 = vpop.permute.xlu0 %2221
        %2224 = vset.pattern.permute.xlu0 17
        %2225 = vperm.xlu0 %2224, %v2212
        %v2226 = vpop.permute.xlu0 %2225
        %2228 = vset.pattern.permute.xlu0 17
        %2229 = vperm.xlu0 %2228, %v2213
        %v2230 = vpop.permute.xlu0 %2229
        %2232 = vset.pattern.permute.xlu0 18
        %2233 = vperm.xlu0 %2232, %v2212
        %v2234 = vpop.permute.xlu0 %2233
        %2236 = vset.pattern.permute.xlu0 18
        %2237 = vperm.xlu0 %2236, %v2213
        %v2238 = vpop.permute.xlu0 %2237
        %2240 = vset.pattern.permute.xlu0 19
        %2241 = vperm.xlu0 %2240, %v2212
        %v2242 = vpop.permute.xlu0 %2241
        %2244 = vset.pattern.permute.xlu0 19
        %2245 = vperm.xlu0 %2244, %v2213
        %v2246 = vpop.permute.xlu0 %2245
        %v2248 = vsel %vm1358, %v2217, %v2226
        %v2249 = vsel %vm1358, %v2222, %v2230
        %v2250 = vsel %vm1867, %v2248, %v2234
        %v2251 = vsel %vm1867, %v2249, %v2238
        %v2252 = vsel %vm1873, %v2250, %v2242
        %v2253 = vsel %vm1873, %v2251, %v2246
        %v2254 = vrot.slane %v1159, 2
        %v2255 = vrot.slane %v1162, 2
        %v2256 = vsel %vm1597, %v2254, %v2255
        %v2257 = vsel %vm1597, %v2255, %v2254
        %v2258 = vsel %vm1601, %v2256, 0.0
        %v2259 = vsel %vm1601, %v2257, 0.0
        %v2260 = vmul.f32 %v2252, %v2258
        %v2261 = vmul.f32 %v2253, %v2259
        %v2262 = vadd.f32 %v2204, %v2260
        %v2263 = vadd.f32 %v2205, %v2261
        %2264 = vrot.lane.b32.xlu0 %v1982, 20
        %v2265 = vpop.permute.xlu0 %2264
        %2266 = vrot.lane.b32.xlu0 %v1983, 20
        %v2267 = vpop.permute.xlu0 %2266
        %v2270 = vmul.f32 %v1929, %v2265
        %v2271 = vmul.f32 %v1931, %v2267
        %2273 = vset.pattern.permute.xlu0 20
        %2274 = vperm.xlu0 %2273, %v2270
        %v2275 = vpop.permute.xlu0 %2274
        %2278 = vset.pattern.permute.xlu0 20
        %2279 = vperm.xlu0 %2278, %v2271
        %v2280 = vpop.permute.xlu0 %2279
        %2282 = vset.pattern.permute.xlu0 21
        %2283 = vperm.xlu0 %2282, %v2270
        %v2284 = vpop.permute.xlu0 %2283
        %2286 = vset.pattern.permute.xlu0 21
        %2287 = vperm.xlu0 %2286, %v2271
        %v2288 = vpop.permute.xlu0 %2287
        %2290 = vset.pattern.permute.xlu0 22
        %2291 = vperm.xlu0 %2290, %v2270
        %v2292 = vpop.permute.xlu0 %2291
        %2294 = vset.pattern.permute.xlu0 22
        %2295 = vperm.xlu0 %2294, %v2271
        %v2296 = vpop.permute.xlu0 %2295
        %2298 = vset.pattern.permute.xlu0 23
        %2299 = vperm.xlu0 %2298, %v2270
        %v2300 = vpop.permute.xlu0 %2299
        %2302 = vset.pattern.permute.xlu0 23
        %2303 = vperm.xlu0 %2302, %v2271
        %v2304 = vpop.permute.xlu0 %2303
        %v2306 = vsel %vm1358, %v2275, %v2284
        %v2307 = vsel %vm1358, %v2280, %v2288
        %v2308 = vsel %vm1867, %v2306, %v2292
        %v2309 = vsel %vm1867, %v2307, %v2296
        %v2310 = vsel %vm1873, %v2308, %v2300
        %v2311 = vsel %vm1873, %v2309, %v2304
        %v2312 = vmul.f32 %v2310, %v1249
        %v2313 = vmul.f32 %v2311, %v1252
        %v2314 = vadd.f32 %v2262, %v2312
        %v2315 = vadd.f32 %v2263, %v2313
        %2316 = vrot.lane.b32.xlu0 %v1982, 24
        %v2317 = vpop.permute.xlu0 %2316
        %2318 = vrot.lane.b32.xlu0 %v1983, 24
        %v2319 = vpop.permute.xlu0 %2318
        %v2322 = vmul.f32 %v1929, %v2317
        %v2323 = vmul.f32 %v1931, %v2319
        %2325 = vset.pattern.permute.xlu0 24
        %2326 = vperm.xlu0 %2325, %v2322
        %v2327 = vpop.permute.xlu0 %2326
        %2330 = vset.pattern.permute.xlu0 24
        %2331 = vperm.xlu0 %2330, %v2323
        %v2332 = vpop.permute.xlu0 %2331
        %2334 = vset.pattern.permute.xlu0 25
        %2335 = vperm.xlu0 %2334, %v2322
        %v2336 = vpop.permute.xlu0 %2335
        %2338 = vset.pattern.permute.xlu0 25
        %2339 = vperm.xlu0 %2338, %v2323
        %v2340 = vpop.permute.xlu0 %2339
        %2342 = vset.pattern.permute.xlu0 26
        %2343 = vperm.xlu0 %2342, %v2322
        %v2344 = vpop.permute.xlu0 %2343
        %2346 = vset.pattern.permute.xlu0 26
        %2347 = vperm.xlu0 %2346, %v2323
        %v2348 = vpop.permute.xlu0 %2347
        %2350 = vset.pattern.permute.xlu0 27
        %2351 = vperm.xlu0 %2350, %v2322
        %v2352 = vpop.permute.xlu0 %2351
        %2354 = vset.pattern.permute.xlu0 27
        %2355 = vperm.xlu0 %2354, %v2323
        %v2356 = vpop.permute.xlu0 %2355
        %v2358 = vsel %vm1358, %v2327, %v2336
        %v2359 = vsel %vm1358, %v2332, %v2340
        %v2360 = vsel %vm1867, %v2358, %v2344
        %v2361 = vsel %vm1867, %v2359, %v2348
        %v2362 = vsel %vm1873, %v2360, %v2352
        %v2363 = vsel %vm1873, %v2361, %v2356
        %v2366 = vunpack.c.l.s4 1966171168
        %v2367 = vunpack.c.0.s8 %v2366
        %v2368 = vlaneseq
        %v2369 = vshrl.u32 %v2368, 7
        %v2370 = vsub.s32 %v2367, %v2369
        %v2371 = vrot.slane %v1341, %v2370
        %v2372 = vcombine.high %v2371, %v2371
        %v2374 = vunpack.c.l.s4 1966171168
        %v2375 = vunpack.c.0.s8 %v2374
        %v2376 = vlaneseq
        %v2377 = vshrl.u32 %v2376, 7
        %v2378 = vsub.s32 %v2375, %v2377
        %v2379 = vrot.slane %v2371, %v2378
        %v2381 = vunpack.c.l.s4 1966171168
        %v2382 = vunpack.c.0.s8 %v2381
        %v2383 = vlaneseq
        %v2384 = vshrl.u32 %v2383, 7
        %v2385 = vsub.s32 %v2382, %v2384
        %v2386 = vrot.slane %v2372, %v2385
        %v2387 = vlaneseq
        %v2388 = vshrl.u32 %v2387, 7
        %v2389 = vsub.s32 0, %v2388
        %v2390 = vrot.slane %v2379, %v2389
        %v2391 = vlaneseq
        %v2392 = vshrl.u32 %v2391, 7
        %v2393 = vsub.s32 0, %v2392
        %v2394 = vrot.slane %v2386, %v2393
        %v2397 = vmul.f32 %v2362, %v2390
        %v2398 = vmul.f32 %v2363, %v2394
        %v2399 = vadd.f32 %v2314, %v2397
        %v2400 = vadd.f32 %v2315, %v2398
        %v2401 = vpack.c.bf16 %v2400, %v2399
        %v2403 = vlaneseq
        %v2404 = vshrl.u32 %v2403, 7
        %v2405 = vsub.s32 0, %v2404
        %v2406 = vrot.slane %v981, %v2405
        %v2412 = vunpack.c.l.b16 %v974
        %v2413 = vunpack.c.l.b16 %v975
        %v2414 = vunpack.c.l.b16 %v976
        %v2415 = vunpack.c.l.b16 %v977
        %v2416 = vpack.c.b16 %v2413, %v2412
        %v2417 = vpack.c.b16 %v2415, %v2414
        %v2421 = vsel %vm916, %v2401, 0
        %2423 = vmatprep.subr.bf16.mxu0 0
        %2424 = vmatpush1.bf16.msra.mxu0 %v2416
        %2425 = vmatprep.subr.bf16.mxu0 0
        %2426 = vmatpush1.bf16.msra.mxu0 %v2417
        %2427 = vmatprep.subr.bf16.mxu0 0
        %2428 = vmatpush1.bf16.msra.mxu0 0
        %2429 = vmatprep.subr.bf16.mxu0 0
        %2430 = vmatpush1.bf16.msra.mxu0 0
        %2431 = vmatprep.subr.bf16.mxu0 0
        %2432 = vmatpush1.bf16.msra.mxu0 0
        %2433 = vmatprep.subr.bf16.mxu0 0
        %2434 = vmatpush1.bf16.msra.mxu0 0
        %2435 = vmatprep.subr.bf16.mxu0 0
        %2436 = vmatpush1.bf16.msra.mxu0 0
        %2437 = vmatprep.subr.bf16.mxu0 0
        %2438 = vmatpush1.bf16.msra.mxu0 0
        %2439 = vmatprep.subr.bf16.mxu0 0
        %2440 = vmatpush1.bf16.msra.mxu0 0
        %2441 = vmatprep.subr.bf16.mxu0 0
        %2442 = vmatpush1.bf16.msra.mxu0 0
        %2443 = vmatprep.subr.bf16.mxu0 0
        %2444 = vmatpush1.bf16.msra.mxu0 0
        %2445 = vmatprep.subr.bf16.mxu0 0
        %2446 = vmatpush1.bf16.msra.mxu0 0
        %2447 = vmatprep.subr.bf16.mxu0 0
        %2448 = vmatpush1.bf16.msra.mxu0 0
        %2449 = vmatprep.subr.bf16.mxu0 0
        %2450 = vmatpush1.bf16.msra.mxu0 0
        %2451 = vmatprep.subr.bf16.mxu0 0
        %2452 = vmatpush1.bf16.msra.mxu0 0
        %2453 = vmatprep.subr.bf16.mxu0 0
        %2454 = vmatpush1.bf16.msra.mxu0 0
        %2455 = vmatprep.mubr.bf16.mxu0 0
        %2456 = vmatmul.mubr.bf16.gmra.mrb[0].mxu0 %v2421
        %v2457 = vpop.f32.mrb[0].mxu0
        %v2458 = vadd.f32 %v2406, %v2457
        %v2459 = vpop.f32.mrb[0].mxu0
        %v2460 = vpop.f32.mrb[0].mxu0
        %v2461 = vadd.f32 %v2406, %v2460
        %v2462 = vpop.f32.mrb[0].mxu0
        %2463 = vdwg.mxu0
        %vm2464 = vcmp.ge.f32.partialorder %v2458, 0.0
        %vm2465 = vcmp.ge.f32.partialorder %v2461, 0.0
        %v2466 = vmul.f32 %v2458, 0.01
        %v2467 = vmul.f32 %v2461, 0.01
        %v2468 = vsel %vm2464, %v2458, %v2466
        %v2469 = vsel %vm2465, %v2461, %v2467
        %v2470 = vadd.f32 %v906, %v2468
        %v2471 = vadd.f32 %v907, %v2469
        %vm2472 = vcmp.gt.f32.partialorder %v912, 0.0
        %vm2473 = vcmp.gt.f32.partialorder %v913, 0.0
        %v2474 = vsel %vm2472, 1, 0
        %v2475 = vsel %vm2473, 1, 0
        %2476 = vset.pattern.permute.xlu0 0
        %2477 = vperm.xlu0 %2476, %v2474
        %v2478 = vpop.permute.xlu0 %2477
        %2479 = vset.pattern.permute.xlu0 0
        %2480 = vperm.xlu0 %2479, %v2475
        %v2481 = vpop.permute.xlu0 %2480
        %vm2482 = vcmp.eq.s32.totalorder %v2478, 1
        %vm2483 = vcmp.eq.s32.totalorder %v2481, 1
        %v2484 = vsel %vm2482, 0.0, %v2470
        %v2485 = vsel %vm2483, 0.0, %v2471
        %2486 = vst.msk [vmem:[%s881] sm:$0xff] %vm916, %v2484
        %2487 = vst.msk [vmem:[%s881 + $0x8] sm:$0xff] %vm916, %v2485
        %v2488 = vld [vmem:[#allocation17] sm:$0xf]
        %v2489 = vld [vmem:[#allocation17 + $0x4] sm:$0xf]
        %v2490 = vld [vmem:[#allocation17 + $0x8] sm:$0xf]
        %v2491 = vld [vmem:[#allocation17 + $0xc] sm:$0xf]
        %v2492 = vld [vmem:[%s16] sm:$0xf]
        %v2493 = vld [vmem:[%s16 + $0x4] sm:$0xf]
        %v2494 = vld [vmem:[%s16 + $0x8] sm:$0xf]
        %v2495 = vld [vmem:[%s16 + $0xc] sm:$0xf]
        %v2496 = vld [vmem:[#allocation20] sm:$0xf]
        %v2497 = vld [vmem:[#allocation20 + $0x4] sm:$0xf]
        %v2498 = vld [vmem:[#allocation20 + $0x8] sm:$0xf]
        %v2499 = vld [vmem:[#allocation20 + $0xc] sm:$0xf]
        %v2500 = vld [vmem:[#allocation19] sm:$0x1]
        %v2501 = vld [vmem:[%s17] sm:$0x1]
        %v2502 = vld [vmem:[%s19] sm:$0x1]
        %v2504 = vlaneseq
        %v2505 = vshrl.u32 %v2504, 7
        %v2506 = vsub.s32 0, %v2505
        %v2507 = vrot.slane %v2500, %v2506
        %v2513 = vunpack.c.l.b16 %v2488
        %v2514 = vunpack.c.l.b16 %v2489
        %v2515 = vunpack.c.l.b16 %v2490
        %v2516 = vunpack.c.l.b16 %v2491
        %v2517 = vpack.c.b16 %v2514, %v2513
        %v2518 = vpack.c.b16 %v2516, %v2515
        %2521 = vmatprep.subr.bf16.mxu0 0
        %2522 = vmatpush1.bf16.msra.mxu0 %v2517
        %2523 = vmatprep.subr.bf16.mxu0 0
        %2524 = vmatpush1.bf16.msra.mxu0 %v2518
        %2525 = vmatprep.subr.bf16.mxu0 0
        %2526 = vmatpush1.bf16.msra.mxu0 0
        %2527 = vmatprep.subr.bf16.mxu0 0
        %2528 = vmatpush1.bf16.msra.mxu0 0
        %2529 = vmatprep.subr.bf16.mxu0 0
        %2530 = vmatpush1.bf16.msra.mxu0 0
        %2531 = vmatprep.subr.bf16.mxu0 0
        %2532 = vmatpush1.bf16.msra.mxu0 0
        %2533 = vmatprep.subr.bf16.mxu0 0
        %2534 = vmatpush1.bf16.msra.mxu0 0
        %2535 = vmatprep.subr.bf16.mxu0 0
        %2536 = vmatpush1.bf16.msra.mxu0 0
        %2537 = vmatprep.subr.bf16.mxu0 0
        %2538 = vmatpush1.bf16.msra.mxu0 0
        %2539 = vmatprep.subr.bf16.mxu0 0
        %2540 = vmatpush1.bf16.msra.mxu0 0
        %2541 = vmatprep.subr.bf16.mxu0 0
        %2542 = vmatpush1.bf16.msra.mxu0 0
        %2543 = vmatprep.subr.bf16.mxu0 0
        %2544 = vmatpush1.bf16.msra.mxu0 0
        %2545 = vmatprep.subr.bf16.mxu0 0
        %2546 = vmatpush1.bf16.msra.mxu0 0
        %2547 = vmatprep.subr.bf16.mxu0 0
        %2548 = vmatpush1.bf16.msra.mxu0 0
        %2549 = vmatprep.subr.bf16.mxu0 0
        %2550 = vmatpush1.bf16.msra.mxu0 0
        %2551 = vmatprep.subr.bf16.mxu0 0
        %2552 = vmatpush1.bf16.msra.mxu0 0
        %2553 = vmatprep.mubr.bf16.mxu0 0
        %2554 = vmatmul.mubr.bf16.gmra.mrb[0].mxu0 %v1264
        %v2555 = vpop.f32.mrb[0].mxu0
        %v2556 = vadd.f32 %v2507, %v2555
        %v2557 = vpop.f32.mrb[0].mxu0
        %v2558 = vpop.f32.mrb[0].mxu0
        %v2559 = vpop.f32.mrb[0].mxu0
        %2560 = vdwg.mxu0
        %v2562 = vlaneseq
        %v2563 = vshrl.u32 %v2562, 7
        %v2564 = vsub.s32 0, %v2563
        %v2565 = vrot.slane %v2501, %v2564
        %v2571 = vunpack.c.l.b16 %v2492
        %v2572 = vunpack.c.l.b16 %v2493
        %v2573 = vunpack.c.l.b16 %v2494
        %v2574 = vunpack.c.l.b16 %v2495
        %v2575 = vpack.c.b16 %v2572, %v2571
        %v2576 = vpack.c.b16 %v2574, %v2573
        %2579 = vmatprep.subr.bf16.mxu0 0
        %2580 = vmatpush1.bf16.msra.mxu0 %v2575
        %2581 = vmatprep.subr.bf16.mxu0 0
        %2582 = vmatpush1.bf16.msra.mxu0 %v2576
        %2583 = vmatprep.subr.bf16.mxu0 0
        %2584 = vmatpush1.bf16.msra.mxu0 0
        %2585 = vmatprep.subr.bf16.mxu0 0
        %2586 = vmatpush1.bf16.msra.mxu0 0
        %2587 = vmatprep.subr.bf16.mxu0 0
        %2588 = vmatpush1.bf16.msra.mxu0 0
        %2589 = vmatprep.subr.bf16.mxu0 0
        %2590 = vmatpush1.bf16.msra.mxu0 0
        %2591 = vmatprep.subr.bf16.mxu0 0
        %2592 = vmatpush1.bf16.msra.mxu0 0
        %2593 = vmatprep.subr.bf16.mxu0 0
        %2594 = vmatpush1.bf16.msra.mxu0 0
        %2595 = vmatprep.subr.bf16.mxu0 0
        %2596 = vmatpush1.bf16.msra.mxu0 0
        %2597 = vmatprep.subr.bf16.mxu0 0
        %2598 = vmatpush1.bf16.msra.mxu0 0
        %2599 = vmatprep.subr.bf16.mxu0 0
        %2600 = vmatpush1.bf16.msra.mxu0 0
        %2601 = vmatprep.subr.bf16.mxu0 0
        %2602 = vmatpush1.bf16.msra.mxu0 0
        %2603 = vmatprep.subr.bf16.mxu0 0
        %2604 = vmatpush1.bf16.msra.mxu0 0
        %2605 = vmatprep.subr.bf16.mxu0 0
        %2606 = vmatpush1.bf16.msra.mxu0 0
        %2607 = vmatprep.subr.bf16.mxu0 0
        %2608 = vmatpush1.bf16.msra.mxu0 0
        %2609 = vmatprep.subr.bf16.mxu0 0
        %2610 = vmatpush1.bf16.msra.mxu0 0
        %2611 = vmatprep.mubr.bf16.mxu0 0
        %2612 = vmatmul.mubr.bf16.gmra.mrb[0].mxu0 %v1264
        %v2613 = vpop.f32.mrb[0].mxu0
        %v2614 = vadd.f32 %v2565, %v2613
        %v2615 = vpop.f32.mrb[0].mxu0
        %v2616 = vpop.f32.mrb[0].mxu0
        %v2617 = vpop.f32.mrb[0].mxu0
        %2618 = vdwg.mxu0
        %v2619 = vpack.c.bf16 %v2471, %v2470
        %v2621 = vsel %vm916, %v2619, 0
        %2623 = vmatprep.subr.bf16.mxu0 0
        %2624 = vmatpush1.bf16.msra.mxu0 %v2575
        %2625 = vmatprep.subr.bf16.mxu0 0
        %2626 = vmatpush1.bf16.msra.mxu0 %v2576
        %2627 = vmatprep.subr.bf16.mxu0 0
        %2628 = vmatpush1.bf16.msra.mxu0 0
        %2629 = vmatprep.subr.bf16.mxu0 0
        %2630 = vmatpush1.bf16.msra.mxu0 0
        %2631 = vmatprep.subr.bf16.mxu0 0
        %2632 = vmatpush1.bf16.msra.mxu0 0
        %2633 = vmatprep.subr.bf16.mxu0 0
        %2634 = vmatpush1.bf16.msra.mxu0 0
        %2635 = vmatprep.subr.bf16.mxu0 0
        %2636 = vmatpush1.bf16.msra.mxu0 0
        %2637 = vmatprep.subr.bf16.mxu0 0
        %2638 = vmatpush1.bf16.msra.mxu0 0
        %2639 = vmatprep.subr.bf16.mxu0 0
        %2640 = vmatpush1.bf16.msra.mxu0 0
        %2641 = vmatprep.subr.bf16.mxu0 0
        %2642 = vmatpush1.bf16.msra.mxu0 0
        %2643 = vmatprep.subr.bf16.mxu0 0
        %2644 = vmatpush1.bf16.msra.mxu0 0
        %2645 = vmatprep.subr.bf16.mxu0 0
        %2646 = vmatpush1.bf16.msra.mxu0 0
        %2647 = vmatprep.subr.bf16.mxu0 0
        %2648 = vmatpush1.bf16.msra.mxu0 0
        %2649 = vmatprep.subr.bf16.mxu0 0
        %2650 = vmatpush1.bf16.msra.mxu0 0
        %2651 = vmatprep.subr.bf16.mxu0 0
        %2652 = vmatpush1.bf16.msra.mxu0 0
        %2653 = vmatprep.subr.bf16.mxu0 0
        %2654 = vmatpush1.bf16.msra.mxu0 0
        %2655 = vmatprep.mubr.bf16.mxu0 0
        %2656 = vmatmul.mubr.bf16.gmra.mrb[0].mxu0 %v2621
        %v2657 = vpop.f32.mrb[0].mxu0
        %v2658 = vadd.f32 %v2565, %v2657
        %v2659 = vpop.f32.mrb[0].mxu0
        %v2660 = vpop.f32.mrb[0].mxu0
        %v2661 = vadd.f32 %v2565, %v2660
        %v2662 = vpop.f32.mrb[0].mxu0
        %2663 = vdwg.mxu0
        %v2666 = vunpack.c.l.s4 1966171168
        %v2667 = vunpack.c.0.s8 %v2666
        %v2668 = vlaneseq
        %v2669 = vshrl.u32 %v2668, 7
        %v2670 = vsub.s32 %v2667, %v2669
        %v2671 = vrot.slane %v2556, %v2670
        %v2672 = vcombine.high %v2671, %v2671
        %v2674 = vunpack.c.l.s4 1966171168
        %v2675 = vunpack.c.0.s8 %v2674
        %v2676 = vlaneseq
        %v2677 = vshrl.u32 %v2676, 7
        %v2678 = vsub.s32 %v2675, %v2677
        %v2679 = vrot.slane %v2671, %v2678
        %v2681 = vunpack.c.l.s4 1966171168
        %v2682 = vunpack.c.0.s8 %v2681
        %v2683 = vlaneseq
        %v2684 = vshrl.u32 %v2683, 7
        %v2685 = vsub.s32 %v2682, %v2684
        %v2686 = vrot.slane %v2672, %v2685
        %v2687 = vlaneseq
        %v2688 = vshrl.u32 %v2687, 7
        %v2689 = vsub.s32 0, %v2688
        %v2690 = vrot.slane %v2679, %v2689
        %v2691 = vlaneseq
        %v2692 = vshrl.u32 %v2691, 7
        %v2693 = vsub.s32 0, %v2692
        %v2694 = vrot.slane %v2686, %v2693
        %v2697 = vmul.f32 %v2658, %v2690
        %v2698 = vmul.f32 %v2661, %v2694
        %v2699 = vsel %vm1358, %v2697, 0.0
        %2700 = vadd.xlane.f32.xlu0 %v2699
        %v2701 = vpop.xlane.xlu0 %2700
        %v2702 = vsel %vm1358, %v2698, 0.0
        %2703 = vadd.xlane.f32.xlu0 %v2702
        %v2704 = vpop.xlane.xlu0 %2703
        %2707 = vrot.lane.b32.xlu0 %v2697, 120
        %v2708 = vpop.permute.xlu0 %2707
        %2709 = vrot.lane.b32.xlu0 %v2698, 120
        %v2710 = vpop.permute.xlu0 %2709
        %v2713 = vsel %vm1358, %v2708, 0.0
        %2714 = vadd.xlane.f32.xlu0 %v2713
        %v2715 = vpop.xlane.xlu0 %2714
        %v2716 = vsel %vm1358, %v2710, 0.0
        %2717 = vadd.xlane.f32.xlu0 %v2716
        %v2718 = vpop.xlane.xlu0 %2717
        %2719 = vrot.lane.b32.xlu0 %v2697, 112
        %v2720 = vpop.permute.xlu0 %2719
        %2721 = vrot.lane.b32.xlu0 %v2698, 112
        %v2722 = vpop.permute.xlu0 %2721
        %v2725 = vsel %vm1358, %v2720, 0.0
        %2726 = vadd.xlane.f32.xlu0 %v2725
        %v2727 = vpop.xlane.xlu0 %2726
        %v2728 = vsel %vm1358, %v2722, 0.0
        %2729 = vadd.xlane.f32.xlu0 %v2728
        %v2730 = vpop.xlane.xlu0 %2729
        %2731 = vrot.lane.b32.xlu0 %v2697, 104
        %v2732 = vpop.permute.xlu0 %2731
        %2733 = vrot.lane.b32.xlu0 %v2698, 104
        %v2734 = vpop.permute.xlu0 %2733
        %v2737 = vsel %vm1358, %v2732, 0.0
        %2738 = vadd.xlane.f32.xlu0 %v2737
        %v2739 = vpop.xlane.xlu0 %2738
        %v2740 = vsel %vm1358, %v2734, 0.0
        %2741 = vadd.xlane.f32.xlu0 %v2740
        %v2742 = vpop.xlane.xlu0 %2741
        %v2743 = vsel %vm1403, %v2701, %v2715
        %v2744 = vsel %vm1403, %v2704, %v2718
        %v2745 = vsel %vm1406, %v2743, %v2727
        %v2746 = vsel %vm1406, %v2744, %v2730
        %v2747 = vsel %vm1409, %v2745, %v2739
        %v2748 = vsel %vm1409, %v2746, %v2742
        %v2749 = vmul.f32 %v2747, 0.35355338
        %v2750 = vmul.f32 %v2748, 0.35355338
        %v2751 = vmul.f32 %v2614, %v2556
        %vm2752 = vcmask 58368
        %v2753 = vsel %vm2752, %v2751, 0.0
        %2754 = vadd.xlane.f32.xlu0 %v2753
        %v2755 = vpop.xlane.xlu0 %2754
        %2757 = vrot.lane.b32.xlu0 %v2751, 120
        %v2758 = vpop.permute.xlu0 %2757
        %v2760 = vsel %vm2752, %v2758, 0.0
        %2761 = vadd.xlane.f32.xlu0 %v2760
        %v2762 = vpop.xlane.xlu0 %2761
        %2763 = vrot.lane.b32.xlu0 %v2751, 112
        %v2764 = vpop.permute.xlu0 %2763
        %v2766 = vsel %vm2752, %v2764, 0.0
        %2767 = vadd.xlane.f32.xlu0 %v2766
        %v2768 = vpop.xlane.xlu0 %2767
        %2769 = vrot.lane.b32.xlu0 %v2751, 104
        %v2770 = vpop.permute.xlu0 %2769
        %v2772 = vsel %vm2752, %v2770, 0.0
        %2773 = vadd.xlane.f32.xlu0 %v2772
        %v2774 = vpop.xlane.xlu0 %2773
        %v2775 = vsel %vm1403, %v2755, %v2762
        %v2776 = vsel %vm1406, %v2775, %v2768
        %v2777 = vsel %vm1409, %v2776, %v2774
        %v2778 = vmul.f32 %v2777, 0.35355338
        %v2779 = vsel %vm2482, -1e+10, %v2749
        %v2780 = vsel %vm2483, -1e+10, %v2750
        %v2781 = vsel %vm1859, %v2779, -inf
        %v2782 = vrot.slane %v2781, 4
        %v2783 = vmax.f32 %v2781, %v2782
        %v2784 = vrot.slane %v2783, 2
        %v2785 = vmax.f32 %v2783, %v2784
        %v2786 = vrot.slane %v2785, 1
        %v2787 = vmax.f32 %v2785, %v2786
        %v2788 = vsel %vm1859, %v2780, -inf
        %v2789 = vrot.slane %v2788, 4
        %v2790 = vmax.f32 %v2788, %v2789
        %v2791 = vrot.slane %v2790, 2
        %v2792 = vmax.f32 %v2790, %v2791
        %v2793 = vrot.slane %v2792, 1
        %v2794 = vmax.f32 %v2792, %v2793
        %v2797 = vsel %vm1260, %v2794, %v2787
        %v2799 = vmax.f32 %v2778, %v2797
        %v2800 = vsub.f32 %v2778, %v2799
        %v2801 = vmul.f32 %v2800, 1.442695
        %v2802 = vpow.pop %v2801
        %v2805 = vunpack.c.l.s4 1966171168
        %v2806 = vunpack.c.0.s8 %v2805
        %v2807 = vlaneseq
        %v2808 = vshrl.u32 %v2807, 7
        %v2809 = vsub.s32 %v2806, %v2808
        %v2810 = vrot.slane %v2799, %v2809
        %v2811 = vcombine.high %v2810, %v2810
        %v2813 = vunpack.c.l.s4 1966171168
        %v2814 = vunpack.c.0.s8 %v2813
        %v2815 = vlaneseq
        %v2816 = vshrl.u32 %v2815, 7
        %v2817 = vsub.s32 %v2814, %v2816
        %v2818 = vrot.slane %v2810, %v2817
        %v2820 = vunpack.c.l.s4 1966171168
        %v2821 = vunpack.c.0.s8 %v2820
        %v2822 = vlaneseq
        %v2823 = vshrl.u32 %v2822, 7
        %v2824 = vsub.s32 %v2821, %v2823
        %v2825 = vrot.slane %v2811, %v2824
        %v2826 = vlaneseq
        %v2827 = vshrl.u32 %v2826, 7
        %v2828 = vsub.s32 0, %v2827
        %v2829 = vrot.slane %v2818, %v2828
        %v2830 = vlaneseq
        %v2831 = vshrl.u32 %v2830, 7
        %v2832 = vsub.s32 0, %v2831
        %v2833 = vrot.slane %v2825, %v2832
        %v2836 = vsub.f32 %v2779, %v2829
        %v2837 = vsub.f32 %v2780, %v2833
        %v2838 = vmul.f32 %v2836, 1.442695
        %v2839 = vpow.pop %v2838
        %v2840 = vmul.f32 %v2837, 1.442695
        %v2841 = vpow.pop %v2840
        %v2842 = vsel %vm1859, %v2839, 0.0
        %v2843 = vrot.slane %v2842, 4
        %v2844 = vadd.f32 %v2842, %v2843
        %v2845 = vrot.slane %v2844, 2
        %v2846 = vadd.f32 %v2844, %v2845
        %v2847 = vrot.slane %v2846, 1
        %v2848 = vadd.f32 %v2846, %v2847
        %v2849 = vsel %vm1859, %v2841, 0.0
        %v2850 = vrot.slane %v2849, 4
        %v2851 = vadd.f32 %v2849, %v2850
        %v2852 = vrot.slane %v2851, 2
        %v2853 = vadd.f32 %v2851, %v2852
        %v2854 = vrot.slane %v2853, 1
        %v2855 = vadd.f32 %v2853, %v2854
        %v2858 = vsel %vm1260, %v2855, %v2848
        %v2860 = vadd.f32 %v2802, %v2858
        %v2861 = vrcp.pop %v2860
        %v2862 = vmul.f32 %v2802, %v2861
        %v2865 = vunpack.c.l.s4 1966171168
        %v2866 = vunpack.c.0.s8 %v2865
        %v2867 = vlaneseq
        %v2868 = vshrl.u32 %v2867, 7
        %v2869 = vsub.s32 %v2866, %v2868
        %v2870 = vrot.slane %v2861, %v2869
        %v2871 = vcombine.high %v2870, %v2870
        %v2873 = vunpack.c.l.s4 1966171168
        %v2874 = vunpack.c.0.s8 %v2873
        %v2875 = vlaneseq
        %v2876 = vshrl.u32 %v2875, 7
        %v2877 = vsub.s32 %v2874, %v2876
        %v2878 = vrot.slane %v2870, %v2877
        %v2880 = vunpack.c.l.s4 1966171168
        %v2881 = vunpack.c.0.s8 %v2880
        %v2882 = vlaneseq
        %v2883 = vshrl.u32 %v2882, 7
        %v2884 = vsub.s32 %v2881, %v2883
        %v2885 = vrot.slane %v2871, %v2884
        %v2886 = vlaneseq
        %v2887 = vshrl.u32 %v2886, 7
        %v2888 = vsub.s32 0, %v2887
        %v2889 = vrot.slane %v2878, %v2888
        %v2890 = vlaneseq
        %v2891 = vshrl.u32 %v2890, 7
        %v2892 = vsub.s32 0, %v2891
        %v2893 = vrot.slane %v2885, %v2892
        %v2896 = vmul.f32 %v2839, %v2889
        %v2897 = vmul.f32 %v2841, %v2893
        %2899 = vset.pattern.permute.xlu0 0
        %2900 = vperm.xlu0 %2899, %v2862
        %v2901 = vpop.permute.xlu0 %2900
        %2903 = vset.pattern.permute.xlu0 1
        %2904 = vperm.xlu0 %2903, %v2862
        %v2905 = vpop.permute.xlu0 %2904
        %2907 = vset.pattern.permute.xlu0 2
        %2908 = vperm.xlu0 %2907, %v2862
        %v2909 = vpop.permute.xlu0 %2908
        %2911 = vset.pattern.permute.xlu0 3
        %2912 = vperm.xlu0 %2911, %v2862
        %v2913 = vpop.permute.xlu0 %2912
        %v2915 = vsel %vm1358, %v2901, %v2905
        %v2916 = vsel %vm1867, %v2915, %v2909
        %v2917 = vsel %vm1873, %v2916, %v2913
        %v2918 = vmul.f32 %v2917, %v2614
        %2920 = vset.pattern.permute.xlu0 0
        %2921 = vperm.xlu0 %2920, %v2896
        %v2922 = vpop.permute.xlu0 %2921
        %2925 = vset.pattern.permute.xlu0 0
        %2926 = vperm.xlu0 %2925, %v2897
        %v2927 = vpop.permute.xlu0 %2926
        %2929 = vset.pattern.permute.xlu0 1
        %2930 = vperm.xlu0 %2929, %v2896
        %v2931 = vpop.permute.xlu0 %2930
        %2933 = vset.pattern.permute.xlu0 1
        %2934 = vperm.xlu0 %2933, %v2897
        %v2935 = vpop.permute.xlu0 %2934
        %2937 = vset.pattern.permute.xlu0 2
        %2938 = vperm.xlu0 %2937, %v2896
        %v2939 = vpop.permute.xlu0 %2938
        %2941 = vset.pattern.permute.xlu0 2
        %2942 = vperm.xlu0 %2941, %v2897
        %v2943 = vpop.permute.xlu0 %2942
        %2945 = vset.pattern.permute.xlu0 3
        %2946 = vperm.xlu0 %2945, %v2896
        %v2947 = vpop.permute.xlu0 %2946
        %2949 = vset.pattern.permute.xlu0 3
        %2950 = vperm.xlu0 %2949, %v2897
        %v2951 = vpop.permute.xlu0 %2950
        %v2953 = vsel %vm1358, %v2922, %v2931
        %v2954 = vsel %vm1358, %v2927, %v2935
        %v2955 = vsel %vm1867, %v2953, %v2939
        %v2956 = vsel %vm1867, %v2954, %v2943
        %v2957 = vsel %vm1873, %v2955, %v2947
        %v2958 = vsel %vm1873, %v2956, %v2951
        %v2959 = vmul.f32 %v2957, %v2658
        %v2960 = vmul.f32 %v2958, %v2661
        %v2961 = vsel %vm916, %v2959, 0.0
        %v2962 = vrot.slane %v2961, 4
        %v2963 = vadd.f32 %v2961, %v2962
        %v2964 = vrot.slane %v2963, 2
        %v2965 = vadd.f32 %v2963, %v2964
        %v2966 = vrot.slane %v2965, 1
        %v2967 = vadd.f32 %v2965, %v2966
        %v2968 = vsel %vm916, %v2960, 0.0
        %v2969 = vrot.slane %v2968, 4
        %v2970 = vadd.f32 %v2968, %v2969
        %v2971 = vrot.slane %v2970, 2
        %v2972 = vadd.f32 %v2970, %v2971
        %v2973 = vrot.slane %v2972, 1
        %v2974 = vadd.f32 %v2972, %v2973
        %v2977 = vsel %vm1260, %v2974, %v2967
        %v2979 = vadd.f32 %v2918, %v2977
        %v2980 = vpack.c.bf16 %v2979, %v2979
        %v2982 = vlaneseq
        %v2983 = vshrl.u32 %v2982, 7
        %v2984 = vsub.s32 0, %v2983
        %v2985 = vrot.slane %v2502, %v2984
        %v2991 = vunpack.c.l.b16 %v2496
        %v2992 = vunpack.c.l.b16 %v2497
        %v2993 = vunpack.c.l.b16 %v2498
        %v2994 = vunpack.c.l.b16 %v2499
        %v2995 = vpack.c.b16 %v2992, %v2991
        %v2996 = vpack.c.b16 %v2994, %v2993
        %v3000 = vsel %vm916, %v2980, 0
        %3002 = vmatprep.subr.bf16.mxu0 0
        %3003 = vmatpush1.bf16.msra.mxu0 %v2995
        %3004 = vmatprep.subr.bf16.mxu0 0
        %3005 = vmatpush1.bf16.msra.mxu0 %v2996
        %3006 = vmatprep.subr.bf16.mxu0 0
        %3007 = vmatpush1.bf16.msra.mxu0 0
        %3008 = vmatprep.subr.bf16.mxu0 0
        %3009 = vmatpush1.bf16.msra.mxu0 0
        %3010 = vmatprep.subr.bf16.mxu0 0
        %3011 = vmatpush1.bf16.msra.mxu0 0
        %3012 = vmatprep.subr.bf16.mxu0 0
        %3013 = vmatpush1.bf16.msra.mxu0 0
        %3014 = vmatprep.subr.bf16.mxu0 0
        %3015 = vmatpush1.bf16.msra.mxu0 0
        %3016 = vmatprep.subr.bf16.mxu0 0
        %3017 = vmatpush1.bf16.msra.mxu0 0
        %3018 = vmatprep.subr.bf16.mxu0 0
        %3019 = vmatpush1.bf16.msra.mxu0 0
        %3020 = vmatprep.subr.bf16.mxu0 0
        %3021 = vmatpush1.bf16.msra.mxu0 0
        %3022 = vmatprep.subr.bf16.mxu0 0
        %3023 = vmatpush1.bf16.msra.mxu0 0
        %3024 = vmatprep.subr.bf16.mxu0 0
        %3025 = vmatpush1.bf16.msra.mxu0 0
        %3026 = vmatprep.subr.bf16.mxu0 0
        %3027 = vmatpush1.bf16.msra.mxu0 0
        %3028 = vmatprep.subr.bf16.mxu0 0
        %3029 = vmatpush1.bf16.msra.mxu0 0
        %3030 = vmatprep.subr.bf16.mxu0 0
        %3031 = vmatpush1.bf16.msra.mxu0 0
        %3032 = vmatprep.subr.bf16.mxu0 0
        %3033 = vmatpush1.bf16.msra.mxu0 0
        %3034 = vmatprep.mubr.bf16.mxu0 0
        %3035 = vmatmul.mubr.bf16.gmra.mrb[0].mxu0 %v3000
        %v3036 = vpop.f32.mrb[0].mxu0
        %v3037 = vadd.f32 %v2985, %v3036
        %v3038 = vpop.f32.mrb[0].mxu0
        %v3039 = vpop.f32.mrb[0].mxu0
        %v3040 = vpop.f32.mrb[0].mxu0
        %3041 = vdwg.mxu0
        %vm3042 = vcmp.ge.f32.partialorder %v3037, 0.0
        %v3043 = vmul.f32 %v3037, 0.01
        %v3044 = vsel %vm3042, %v3037, %v3043
        %v3047 = vunpack.c.l.s4 1966171168
        %v3048 = vunpack.c.0.s8 %v3047
        %v3049 = vlaneseq
        %v3050 = vshrl.u32 %v3049, 7
        %v3051 = vsub.s32 %v3048, %v3050
        %v3052 = vrot.slane %v3044, %v3051
        %v3053 = vcombine.high %v3052, %v3052
        %v3055 = vunpack.c.l.s4 1966171168
        %v3056 = vunpack.c.0.s8 %v3055
        %v3057 = vlaneseq
        %v3058 = vshrl.u32 %v3057, 7
        %v3059 = vsub.s32 %v3056, %v3058
        %v3060 = vrot.slane %v3052, %v3059
        %v3062 = vunpack.c.l.s4 1966171168
        %v3063 = vunpack.c.0.s8 %v3062
        %v3064 = vlaneseq
        %v3065 = vshrl.u32 %v3064, 7
        %v3066 = vsub.s32 %v3063, %v3065
        %v3067 = vrot.slane %v3053, %v3066
        %vm3070 = vcmask 253952
        %3071 = vst.msk [vmem:[%s888] sm:$0x1] %vm3070, %v3060
        %3072 = vst.msk [vmem:[%s888 + $0x1] sm:$0x1] %vm3070, %v3067
        %s3073 = sand.u32 %s498, 1
        %s3074 = scalar_lea.sflag [#allocation4], %s3073
        %s3075 = sand.u32 %s498, 1
        %s3076 = smul.addr %s3075, 16
        %s3077 = scalar_lea.vmem [#allocation22], %s3076
        %s3078 = sand.u32 %s524, 1
        %s3079 = scalar_lea.sflag [#allocation24], %s3078
        %s3080 = sand.u32 %s524, 1
        %s3081 = smul.addr %s3080, 2
        %s3082 = scalar_lea.vmem [#allocation23], %s3081
        // Predicated region
        $region149: #{tpu_custom_call.1} parent=99 // pred_check
          %p3083 = pneg %p508
        $region150: #{tpu_custom_call.1} parent=99 // pred_check_branch
          %3085 = sbr.rel (%p3083) target = $region152
        $region151: #{tpu_custom_call.1} parent=99 // pred_region
          %s3086 = smul.u32 2, %s50
          %s3088 = ssub.s32 256, 256
          %3089 = vsyncadd %s3074, %s3088
          %s3090 = smul.addr %s3086, 128
          %s3091 = scalar_lea.hbm %s20, %s3090
          %s3092 = sshll.u32 %s3077, 4
          %s3093 = int_to_ptr.vmem [resolvable:$true] %s3092
          %3098 = dma.vmem_to_hbm [thread:$0]  %s3093, 256, %s3091, %s3074, 128, 128, 8
        $region152: #{tpu_custom_call.1} parent=99 // pred_fallthru
          _
        // Predicated region
        $region153: #{tpu_custom_call.1} parent=99 // pred_check
          %p3099 = pneg %p534
        $region154: #{tpu_custom_call.1} parent=99 // pred_check_branch
          %3101 = sbr.rel (%p3099) target = $region156
        $region155: #{tpu_custom_call.1} parent=99 // pred_region
          %s3102 = smul.u32 2, %s50
          %s3104 = ssub.s32 32, 32
          %3105 = vsyncadd %s3079, %s3104
          %s3106 = smul.addr %s3102, 16
          %s3107 = scalar_lea.hbm %s21, %s3106
          %s3108 = sshll.u32 %s3082, 4
          %s3109 = int_to_ptr.vmem [resolvable:$true] %s3108
          %3114 = dma.vmem_to_hbm [thread:$0]  %s3109, 32, %s3107, %s3079, 16, 16, 1
        $region156: #{tpu_custom_call.1} parent=99 // pred_fallthru
          _
      $region100: #{tpu_custom_call.1} parent=5 // pred_fallthru
        _
      %p3115 = scmp.le.s32.totalorder 2, %s45
      // Predicated region
      $region157: #{tpu_custom_call.1} parent=5 // pred_check
        %p3116 = pneg %p3115
      $region158: #{tpu_custom_call.1} parent=5 // pred_check_branch
        %3118 = sbr.rel (%p3116) target = $region160
      $region159: #{tpu_custom_call.1} parent=5 // pred_region
        %s3119 = ssub.s32 %s45, 2
        // Predicated region
        $region161: #{tpu_custom_call.1} parent=159 // pred_check
          %p3120 = pneg %p514
        $region162: #{tpu_custom_call.1} parent=159 // pred_check_branch
          %3122 = sbr.rel (%p3120) target = $region164
        $region163: #{tpu_custom_call.1} parent=159 // pred_region
          %s3123 = sand.u32 %s499, 1
          %s3124 = scalar_lea.sflag [#allocation4], %s3123
          %s3125 = sand.u32 %s499, 1
          %s3126 = smul.addr %s3125, 16
          %s3127 = scalar_lea.vmem [#allocation22], %s3126
          %3128 = dma.done %s3124, 256
        $region164: #{tpu_custom_call.1} parent=159 // pred_fallthru
          _
        // Predicated region
        $region165: #{tpu_custom_call.1} parent=159 // pred_check
          %p3129 = pneg %p540
        $region166: #{tpu_custom_call.1} parent=159 // pred_check_branch
          %3131 = sbr.rel (%p3129) target = $region168
        $region167: #{tpu_custom_call.1} parent=159 // pred_region
          %s3132 = sand.u32 %s525, 1
          %s3133 = scalar_lea.sflag [#allocation24], %s3132
          %s3134 = sand.u32 %s525, 1
          %s3135 = smul.addr %s3134, 2
          %s3136 = scalar_lea.vmem [#allocation23], %s3135
          %3137 = dma.done %s3133, 32
        $region168: #{tpu_custom_call.1} parent=159 // pred_fallthru
          _
      $region160: #{tpu_custom_call.1} parent=5 // pred_fallthru
        _
    $region6: #{tpu_custom_call.1} parent=1 // loop_footer
      %s49 = sadd.s32 1, %s45
    $region7: #{tpu_custom_call.1} parent=1 // loop_footer_branch
      %44 = sbr.rel target = $region3
    $region8: #{tpu_custom_call.1} parent=1 // loop_exit
      _
    %3138 = vsyncpa [#allocation3], 1
    %s3139 = scalar_lea.sflag [#allocation3], 1
    %3140 = vsyncpa %s3139, 1
    %3141 = vsyncpa [#allocation6], 1
    %s3142 = scalar_lea.sflag [#allocation6], 1
    %3143 = vsyncpa %s3142, 1
    %3144 = vsyncpa [#allocation9], 1
    %3145 = vsyncpa [#allocation12], 1
    %3146 = vsyncpa [#allocation15], 1
    %3147 = vsyncpa [#allocation18], 1
    %3148 = vsyncpa [#allocation21], 1
    %3149 = vsyncpa [#allocation4], 1
    %s3150 = scalar_lea.sflag [#allocation4], 1
    %3151 = vsyncpa %s3150, 1
    %3152 = vsyncpa [#allocation24], 1
    %s3153 = scalar_lea.sflag [#allocation24], 1
    %3154 = vsyncpa %s3153, 1

</llo_original>
